<compile_context>
chip_gen: v7x
topology: tpu7x:2x2x1
jax: 0.10.0
libtpu: 0.0.40
codegen_flags: <defaults>
</compile_context>

<pallas_src>
import functools

import jax
import jax.numpy as jnp
from jax.experimental import pallas as pl
from jax.experimental.pallas import tpu as pltpu


def _rnn_decoder_kernel(n_layers, seq_total, batch, x_ref, *refs):
    # refs = [wih_t_0, whh_t_0, b_0, ..., wih_t_{L-1}, whh_t_{L-1}, b_{L-1},
    #         h0_ref, out_ref, h_final_ref]
    weight_refs = refs[: 3 * n_layers]
    h0_ref = refs[3 * n_layers]
    out_ref = refs[3 * n_layers + 1]
    h_final_ref = refs[3 * n_layers + 2]

    # Load weights once; they stay resident for the whole fused sequence.
    ws = [weight_refs[3 * l][...].astype(jnp.float32) for l in range(n_layers)]      # (in_l, H)
    us = [weight_refs[3 * l + 1][...].astype(jnp.float32) for l in range(n_layers)]  # (H, H)
    bs = [weight_refs[3 * l + 2][...].astype(jnp.float32) for l in range(n_layers)]  # (1, H)

    # Carried hidden state lives in vregs (f32) for the entire decoder.
    h = [h0_ref[l].astype(jnp.float32) for l in range(n_layers)]

    # Layer-0 input projection for ALL timesteps as one batched matmul
    # (independent of the recurrence), bias folded in.
    x0_all = (
        jnp.dot(x_ref[...].astype(jnp.float32), ws[0],
                preferred_element_type=jnp.float32)
        + bs[0]
    )  # (T*B, H)

    # seq_total is small and static -> fully unrolled, all indices static.
    for t in range(seq_total):
        # Layer 0: input contribution was precomputed; only the recurrent
        # matmul sits on the sequential dependence chain.
        pre0 = (
            x0_all[t * batch:(t + 1) * batch, :]
            + jnp.dot(h[0], us[0], preferred_element_type=jnp.float32)
        )
        h[0] = jnp.tanh(pre0)
        inp = h[0]
        for l in range(1, n_layers):
            pre = (
                jnp.dot(inp, ws[l], preferred_element_type=jnp.float32)
                + jnp.dot(h[l], us[l], preferred_element_type=jnp.float32)
                + bs[l]
            )
            h[l] = jnp.tanh(pre)
            inp = h[l]
        out_ref[t] = inp.astype(out_ref.dtype)        # store into resident out slab

    for l in range(n_layers):
        h_final_ref[l] = h[l].astype(h_final_ref.dtype)


def rnn_decoder_forward(x_elements, params, h0):
    """RNN_decoder.forward (trained path) with a single fused Pallas kernel.

    x_elements: (E, S, B, input_size)   -- E "elements", each a (S, B, In) sequence
    params:     list of (w_ih, w_hh, b_ih, b_hh) per layer (PyTorch nn.RNN shapes)
    h0:         (n_layers, B, hidden)
    Returns (outs, h_final): outs is (S, E*B, hidden) (= torch.cat(results, dim=1)).
    """
    E, S, B, In = x_elements.shape
    L = len(params)
    H = params[0][0].shape[0]
    T = E * S

    # Fuse the element loop and the time loop: the hidden state is carried
    # sequentially across elements, so this is exactly the same recurrence.
    # 2D layout so the hoisted layer-0 projection is a single matmul.
    x_flat = x_elements.reshape(T * B, In).astype(jnp.float32)

    # Pre-transpose weights and pre-add biases in the wrapper (layout plumbing).
    flat_weights = []
    for (wih, whh, bih, bhh) in params:
        flat_weights += [
            jnp.asarray(wih, jnp.float32).T,                       # (in_l, H)
            jnp.asarray(whh, jnp.float32).T,                       # (H, H)
            (jnp.asarray(bih, jnp.float32)
             + jnp.asarray(bhh, jnp.float32)).reshape(1, H),       # (1, H)
        ]

    # Everything is fully resident (blocks == full arrays); grid is a single
    # dummy step, so there is exactly one DMA in/out per array.
    in_specs = [pl.BlockSpec((T * B, In), lambda i: (0, 0))]
    for w in flat_weights:
        in_specs.append(pl.BlockSpec(w.shape, lambda i, n=w.ndim: (0,) * n))
    in_specs.append(pl.BlockSpec((L, B, H), lambda i: (0, 0, 0)))  # h0

    out_specs = [
        pl.BlockSpec((T, B, H), lambda i: (0, 0, 0)),  # per-timestep outputs
        pl.BlockSpec((L, B, H), lambda i: (0, 0, 0)),  # final hidden state (f32)
    ]
    out_shape = (
        jax.ShapeDtypeStruct((T, B, H), jnp.float32),
        jax.ShapeDtypeStruct((L, B, H), jnp.float32),
    )

    grid_spec = pltpu.PrefetchScalarGridSpec(
        num_scalar_prefetch=0,
        grid=(1,),
        in_specs=in_specs,
        out_specs=out_specs,
    )

    out_flat, h_final = pl.pallas_call(
        functools.partial(_rnn_decoder_kernel, L, T, B),
        grid_spec=grid_spec,
        out_shape=out_shape,
        compiler_params=pltpu.CompilerParams(
            dimension_semantics=("arbitrary",),      # recurrence is sequential
            vmem_limit_bytes=32 * 1024 * 1024,       # explicit, v7x-safe headroom
        ),
    )(x_flat, *flat_weights, h0.astype(jnp.float32))

    # torch.cat(results, dim=1): (E, S, B, H) -> (S, E*B, H). Wrapper-side
    # reshape/transpose only (no kernel work).
    outs = out_flat.reshape(E, S, B, H).transpose(1, 0, 2, 3).reshape(S, E * B, H)
    return outs, h_final


def _reference_forward(x_elements, params, h0):
    """Pure-JAX reference (PyTorch nn.RNN semantics, tanh nonlinearity)."""
    results = []
    h = h0
    for element in x_elements:
        S = element.shape[0]
        outs = []
        for t in range(S):
            inp = element[t]
            new_h = []
            for l, (wih, whh, bih, bhh) in enumerate(params):
                hl = jnp.tanh(inp @ wih.T + bih + h[l] @ whh.T + bhh)
                new_h.append(hl)
                inp = hl
            h = jnp.stack(new_h, axis=0)
            outs.append(inp)
        results.append(jnp.stack(outs, axis=0))
    return jnp.concatenate(results, axis=1), h


if __name__ == "__main__":
    # Small shapes consistent with the module.
    input_size = 16
    hidden_dims = 32
    n_layers = 2
    seq_len = 8
    batch = 2
    num_elements = 2  # number of "elements" the decoder loops over in forward()

    key = jax.random.PRNGKey(0)
    keys = jax.random.split(key, 1 + 4 * n_layers)

    # x: iterable of sequences, each (seq, batch, input_size)
    x_elements = jax.random.normal(
        keys[0], (num_elements, seq_len, batch, input_size), dtype=jnp.float32
    )

    # Deterministic parameter init (same shapes as torch.nn.RNN with tanh).
    params = []
    k_idx = 1
    scale = 1.0 / jnp.sqrt(hidden_dims)
    for l in range(n_layers):
        in_l = input_size if l == 0 else hidden_dims
        wih = scale * jax.random.normal(keys[k_idx], (hidden_dims, in_l), dtype=jnp.float32)
        whh = scale * jax.random.normal(keys[k_idx + 1], (hidden_dims, hidden_dims), dtype=jnp.float32)
        bih = scale * jax.random.normal(keys[k_idx + 2], (hidden_dims,), dtype=jnp.float32)
        bhh = scale * jax.random.normal(keys[k_idx + 3], (hidden_dims,), dtype=jnp.float32)
        params.append((wih, whh, bih, bhh))
        k_idx += 4

    h0 = jnp.zeros((n_layers, batch, hidden_dims), dtype=jnp.float32)

    out, h_final = rnn_decoder_forward(x_elements, params, h0)
    out = jax.block_until_ready(out)
    h_final = jax.block_until_ready(h_final)

    ref_out, ref_h = _reference_forward(x_elements, params, h0)
    assert out.shape == (seq_len, num_elements * batch, hidden_dims), out.shape
    assert jnp.allclose(out, ref_out, atol=1e-5, rtol=1e-5)
    assert jnp.allclose(h_final, ref_h, atol=1e-5, rtol=1e-5)

    print("KERNEL_OK")
</pallas_src>

<mosaic_0001>
module attributes {stable_mosaic.version = 11 : i64} {
  func.func @_rnn_decoder_kernel(%arg0: i32, %arg1: memref<32x16xf32, #tpu.memory_space<vmem>>, %arg2: memref<16x32xf32, #tpu.memory_space<vmem>>, %arg3: memref<32x32xf32, #tpu.memory_space<vmem>>, %arg4: memref<1x32xf32, #tpu.memory_space<vmem>>, %arg5: memref<32x32xf32, #tpu.memory_space<vmem>>, %arg6: memref<32x32xf32, #tpu.memory_space<vmem>>, %arg7: memref<1x32xf32, #tpu.memory_space<vmem>>, %arg8: memref<2x2x32xf32, #tpu.memory_space<vmem>>, %arg9: memref<16x2x32xf32, #tpu.memory_space<vmem>>, %arg10: memref<2x2x32xf32, #tpu.memory_space<vmem>>) attributes {dimension_semantics = [#tpu.dimension_semantics<arbitrary>], iteration_bounds = array<i64: 1>, scalar_prefetch = 0 : i64, scratch_operands = 0 : i64, tpu.core_type = #tpu.core_type<tc>, window_params = [{pipeline_mode = #tpu.pipeline_mode<synchronous>, transform_indices = @transform_0, window_bounds = array<i64: 32, 16>}, {pipeline_mode = #tpu.pipeline_mode<synchronous>, transform_indices = @transform_1, window_bounds = array<i64: 16, 32>}, {pipeline_mode = #tpu.pipeline_mode<synchronous>, transform_indices = @transform_2, window_bounds = array<i64: 32, 32>}, {pipeline_mode = #tpu.pipeline_mode<synchronous>, transform_indices = @transform_3, window_bounds = array<i64: 1, 32>}, {pipeline_mode = #tpu.pipeline_mode<synchronous>, transform_indices = @transform_4, window_bounds = array<i64: 32, 32>}, {pipeline_mode = #tpu.pipeline_mode<synchronous>, transform_indices = @transform_5, window_bounds = array<i64: 32, 32>}, {pipeline_mode = #tpu.pipeline_mode<synchronous>, transform_indices = @transform_6, window_bounds = array<i64: 1, 32>}, {pipeline_mode = #tpu.pipeline_mode<synchronous>, transform_indices = @transform_7, window_bounds = array<i64: 2, 2, 32>}, {pipeline_mode = #tpu.pipeline_mode<synchronous>, transform_indices = @transform_8, window_bounds = array<i64: 16, 2, 32>}, {pipeline_mode = #tpu.pipeline_mode<synchronous>, transform_indices = @transform_9, window_bounds = array<i64: 2, 2, 32>}]} {
    %c0 = arith.constant 0 : index
    %c0_0 = arith.constant 0 : index
    %0 = vector.load %arg2[%c0, %c0_0] : memref<16x32xf32, #tpu.memory_space<vmem>>, vector<16x32xf32>
    %c0_1 = arith.constant 0 : index
    %c0_2 = arith.constant 0 : index
    %1 = vector.load %arg5[%c0_1, %c0_2] : memref<32x32xf32, #tpu.memory_space<vmem>>, vector<32x32xf32>
    %c0_3 = arith.constant 0 : index
    %c0_4 = arith.constant 0 : index
    %2 = vector.load %arg3[%c0_3, %c0_4] : memref<32x32xf32, #tpu.memory_space<vmem>>, vector<32x32xf32>
    %c0_5 = arith.constant 0 : index
    %c0_6 = arith.constant 0 : index
    %3 = vector.load %arg6[%c0_5, %c0_6] : memref<32x32xf32, #tpu.memory_space<vmem>>, vector<32x32xf32>
    %c0_7 = arith.constant 0 : index
    %c0_8 = arith.constant 0 : index
    %4 = vector.load %arg4[%c0_7, %c0_8] : memref<1x32xf32, #tpu.memory_space<vmem>>, vector<1x32xf32>
    %c0_9 = arith.constant 0 : index
    %c0_10 = arith.constant 0 : index
    %5 = vector.load %arg7[%c0_9, %c0_10] : memref<1x32xf32, #tpu.memory_space<vmem>>, vector<1x32xf32>
    %c0_11 = arith.constant 0 : index
    %c0_12 = arith.constant 0 : index
    %c0_13 = arith.constant 0 : index
    %6 = vector.load %arg8[%c0_11, %c0_12, %c0_13] : memref<2x2x32xf32, #tpu.memory_space<vmem>>, vector<1x2x32xf32>
    %7 = vector.shape_cast %6 : vector<1x2x32xf32> to vector<2x32xf32>
    %c1 = arith.constant 1 : index
    %c0_14 = arith.constant 0 : index
    %c0_15 = arith.constant 0 : index
    %8 = vector.load %arg8[%c1, %c0_14, %c0_15] : memref<2x2x32xf32, #tpu.memory_space<vmem>>, vector<1x2x32xf32>
    %9 = vector.shape_cast %8 : vector<1x2x32xf32> to vector<2x32xf32>
    %c0_16 = arith.constant 0 : index
    %c0_17 = arith.constant 0 : index
    %10 = vector.load %arg1[%c0_16, %c0_17] : memref<32x16xf32, #tpu.memory_space<vmem>>, vector<32x16xf32>
    %cst = arith.constant dense<0.000000e+00> : vector<32x32xf32>
    %11 = tpu.matmul %10, %0, %cst {dimension_numbers = #tpu.dot_dimension_numbers<[1], [0], [0], [1], [0, 0, 1, 1], [], []>} : vector<32x16xf32>, vector<16x32xf32>, vector<32x32xf32> -> vector<32x32xf32>
    %12 = vector.broadcast %4 : vector<1x32xf32> to vector<32x32xf32>
    %13 = arith.addf %11, %12 : vector<32x32xf32>
    %14 = vector.extract_strided_slice %13 {offsets = [0, 0], sizes = [2, 32], strides = [1, 1]} : vector<32x32xf32> to vector<2x32xf32>
    %cst_18 = arith.constant dense<0.000000e+00> : vector<2x32xf32>
    %15 = tpu.matmul %7, %2, %cst_18 {dimension_numbers = #tpu.dot_dimension_numbers<[1], [0], [0], [1], [0, 0, 1, 1], [], []>} : vector<2x32xf32>, vector<32x32xf32>, vector<2x32xf32> -> vector<2x32xf32>
    %16 = arith.addf %14, %15 : vector<2x32xf32>
    %17 = math.tanh %16 : vector<2x32xf32>
    %cst_19 = arith.constant dense<0.000000e+00> : vector<2x32xf32>
    %18 = tpu.matmul %17, %1, %cst_19 {dimension_numbers = #tpu.dot_dimension_numbers<[1], [0], [0], [1], [0, 0, 1, 1], [], []>} : vector<2x32xf32>, vector<32x32xf32>, vector<2x32xf32> -> vector<2x32xf32>
    %cst_20 = arith.constant dense<0.000000e+00> : vector<2x32xf32>
    %19 = tpu.matmul %9, %3, %cst_20 {dimension_numbers = #tpu.dot_dimension_numbers<[1], [0], [0], [1], [0, 0, 1, 1], [], []>} : vector<2x32xf32>, vector<32x32xf32>, vector<2x32xf32> -> vector<2x32xf32>
    %20 = arith.addf %18, %19 : vector<2x32xf32>
    %21 = vector.broadcast %5 : vector<1x32xf32> to vector<2x32xf32>
    %22 = arith.addf %20, %21 : vector<2x32xf32>
    %23 = math.tanh %22 : vector<2x32xf32>
    %c0_21 = arith.constant 0 : index
    %c0_22 = arith.constant 0 : index
    %c0_23 = arith.constant 0 : index
    %24 = vector.load %arg9[%c0_21, %c0_22, %c0_23] : memref<16x2x32xf32, #tpu.memory_space<vmem>>, vector<1x2x32xf32>
    %25 = vector.shape_cast %24 : vector<1x2x32xf32> to vector<2x32xf32>
    %26 = vector.shape_cast %23 : vector<2x32xf32> to vector<1x2x32xf32>
    tpu.vector_store %arg9[%c0_21, %c0_22, %c0_23], %26 {strides = array<i32>} : memref<16x2x32xf32, #tpu.memory_space<vmem>>, vector<1x2x32xf32>,
    %27 = vector.extract_strided_slice %13 {offsets = [2, 0], sizes = [2, 32], strides = [1, 1]} : vector<32x32xf32> to vector<2x32xf32>
    %cst_24 = arith.constant dense<0.000000e+00> : vector<2x32xf32>
    %28 = tpu.matmul %17, %2, %cst_24 {dimension_numbers = #tpu.dot_dimension_numbers<[1], [0], [0], [1], [0, 0, 1, 1], [], []>} : vector<2x32xf32>, vector<32x32xf32>, vector<2x32xf32> -> vector<2x32xf32>
    %29 = arith.addf %27, %28 : vector<2x32xf32>
    %30 = math.tanh %29 : vector<2x32xf32>
    %cst_25 = arith.constant dense<0.000000e+00> : vector<2x32xf32>
    %31 = tpu.matmul %30, %1, %cst_25 {dimension_numbers = #tpu.dot_dimension_numbers<[1], [0], [0], [1], [0, 0, 1, 1], [], []>} : vector<2x32xf32>, vector<32x32xf32>, vector<2x32xf32> -> vector<2x32xf32>
    %cst_26 = arith.constant dense<0.000000e+00> : vector<2x32xf32>
    %32 = tpu.matmul %23, %3, %cst_26 {dimension_numbers = #tpu.dot_dimension_numbers<[1], [0], [0], [1], [0, 0, 1, 1], [], []>} : vector<2x32xf32>, vector<32x32xf32>, vector<2x32xf32> -> vector<2x32xf32>
    %33 = arith.addf %31, %32 : vector<2x32xf32>
    %34 = vector.broadcast %5 : vector<1x32xf32> to vector<2x32xf32>
    %35 = arith.addf %33, %34 : vector<2x32xf32>
    %36 = math.tanh %35 : vector<2x32xf32>
    %c1_27 = arith.constant 1 : index
    %c0_28 = arith.constant 0 : index
    %c0_29 = arith.constant 0 : index
    %37 = vector.load %arg9[%c1_27, %c0_28, %c0_29] : memref<16x2x32xf32, #tpu.memory_space<vmem>>, vector<1x2x32xf32>
    %38 = vector.shape_cast %37 : vector<1x2x32xf32> to vector<2x32xf32>
    %39 = vector.shape_cast %36 : vector<2x32xf32> to vector<1x2x32xf32>
    tpu.vector_store %arg9[%c1_27, %c0_28, %c0_29], %39 {strides = array<i32>} : memref<16x2x32xf32, #tpu.memory_space<vmem>>, vector<1x2x32xf32>,
    %40 = vector.extract_strided_slice %13 {offsets = [4, 0], sizes = [2, 32], strides = [1, 1]} : vector<32x32xf32> to vector<2x32xf32>
    %cst_30 = arith.constant dense<0.000000e+00> : vector<2x32xf32>
    %41 = tpu.matmul %30, %2, %cst_30 {dimension_numbers = #tpu.dot_dimension_numbers<[1], [0], [0], [1], [0, 0, 1, 1], [], []>} : vector<2x32xf32>, vector<32x32xf32>, vector<2x32xf32> -> vector<2x32xf32>
    %42 = arith.addf %40, %41 : vector<2x32xf32>
    %43 = math.tanh %42 : vector<2x32xf32>
    %cst_31 = arith.constant dense<0.000000e+00> : vector<2x32xf32>
    %44 = tpu.matmul %43, %1, %cst_31 {dimension_numbers = #tpu.dot_dimension_numbers<[1], [0], [0], [1], [0, 0, 1, 1], [], []>} : vector<2x32xf32>, vector<32x32xf32>, vector<2x32xf32> -> vector<2x32xf32>
    %cst_32 = arith.constant dense<0.000000e+00> : vector<2x32xf32>
    %45 = tpu.matmul %36, %3, %cst_32 {dimension_numbers = #tpu.dot_dimension_numbers<[1], [0], [0], [1], [0, 0, 1, 1], [], []>} : vector<2x32xf32>, vector<32x32xf32>, vector<2x32xf32> -> vector<2x32xf32>
    %46 = arith.addf %44, %45 : vector<2x32xf32>
    %47 = vector.broadcast %5 : vector<1x32xf32> to vector<2x32xf32>
    %48 = arith.addf %46, %47 : vector<2x32xf32>
    %49 = math.tanh %48 : vector<2x32xf32>
    %c2 = arith.constant 2 : index
    %c0_33 = arith.constant 0 : index
    %c0_34 = arith.constant 0 : index
    %50 = vector.load %arg9[%c2, %c0_33, %c0_34] : memref<16x2x32xf32, #tpu.memory_space<vmem>>, vector<1x2x32xf32>
    %51 = vector.shape_cast %50 : vector<1x2x32xf32> to vector<2x32xf32>
    %52 = vector.shape_cast %49 : vector<2x32xf32> to vector<1x2x32xf32>
    tpu.vector_store %arg9[%c2, %c0_33, %c0_34], %52 {strides = array<i32>} : memref<16x2x32xf32, #tpu.memory_space<vmem>>, vector<1x2x32xf32>,
    %53 = vector.extract_strided_slice %13 {offsets = [6, 0], sizes = [2, 32], strides = [1, 1]} : vector<32x32xf32> to vector<2x32xf32>
    %cst_35 = arith.constant dense<0.000000e+00> : vector<2x32xf32>
    %54 = tpu.matmul %43, %2, %cst_35 {dimension_numbers = #tpu.dot_dimension_numbers<[1], [0], [0], [1], [0, 0, 1, 1], [], []>} : vector<2x32xf32>, vector<32x32xf32>, vector<2x32xf32> -> vector<2x32xf32>
    %55 = arith.addf %53, %54 : vector<2x32xf32>
    %56 = math.tanh %55 : vector<2x32xf32>
    %cst_36 = arith.constant dense<0.000000e+00> : vector<2x32xf32>
    %57 = tpu.matmul %56, %1, %cst_36 {dimension_numbers = #tpu.dot_dimension_numbers<[1], [0], [0], [1], [0, 0, 1, 1], [], []>} : vector<2x32xf32>, vector<32x32xf32>, vector<2x32xf32> -> vector<2x32xf32>
    %cst_37 = arith.constant dense<0.000000e+00> : vector<2x32xf32>
    %58 = tpu.matmul %49, %3, %cst_37 {dimension_numbers = #tpu.dot_dimension_numbers<[1], [0], [0], [1], [0, 0, 1, 1], [], []>} : vector<2x32xf32>, vector<32x32xf32>, vector<2x32xf32> -> vector<2x32xf32>
    %59 = arith.addf %57, %58 : vector<2x32xf32>
    %60 = vector.broadcast %5 : vector<1x32xf32> to vector<2x32xf32>
    %61 = arith.addf %59, %60 : vector<2x32xf32>
    %62 = math.tanh %61 : vector<2x32xf32>
    %c3 = arith.constant 3 : index
    %c0_38 = arith.constant 0 : index
    %c0_39 = arith.constant 0 : index
    %63 = vector.load %arg9[%c3, %c0_38, %c0_39] : memref<16x2x32xf32, #tpu.memory_space<vmem>>, vector<1x2x32xf32>
    %64 = vector.shape_cast %63 : vector<1x2x32xf32> to vector<2x32xf32>
    %65 = vector.shape_cast %62 : vector<2x32xf32> to vector<1x2x32xf32>
    tpu.vector_store %arg9[%c3, %c0_38, %c0_39], %65 {strides = array<i32>} : memref<16x2x32xf32, #tpu.memory_space<vmem>>, vector<1x2x32xf32>,
    %66 = vector.extract_strided_slice %13 {offsets = [8, 0], sizes = [2, 32], strides = [1, 1]} : vector<32x32xf32> to vector<2x32xf32>
    %cst_40 = arith.constant dense<0.000000e+00> : vector<2x32xf32>
    %67 = tpu.matmul %56, %2, %cst_40 {dimension_numbers = #tpu.dot_dimension_numbers<[1], [0], [0], [1], [0, 0, 1, 1], [], []>} : vector<2x32xf32>, vector<32x32xf32>, vector<2x32xf32> -> vector<2x32xf32>
    %68 = arith.addf %66, %67 : vector<2x32xf32>
    %69 = math.tanh %68 : vector<2x32xf32>
    %cst_41 = arith.constant dense<0.000000e+00> : vector<2x32xf32>
    %70 = tpu.matmul %69, %1, %cst_41 {dimension_numbers = #tpu.dot_dimension_numbers<[1], [0], [0], [1], [0, 0, 1, 1], [], []>} : vector<2x32xf32>, vector<32x32xf32>, vector<2x32xf32> -> vector<2x32xf32>
    %cst_42 = arith.constant dense<0.000000e+00> : vector<2x32xf32>
    %71 = tpu.matmul %62, %3, %cst_42 {dimension_numbers = #tpu.dot_dimension_numbers<[1], [0], [0], [1], [0, 0, 1, 1], [], []>} : vector<2x32xf32>, vector<32x32xf32>, vector<2x32xf32> -> vector<2x32xf32>
    %72 = arith.addf %70, %71 : vector<2x32xf32>
    %73 = vector.broadcast %5 : vector<1x32xf32> to vector<2x32xf32>
    %74 = arith.addf %72, %73 : vector<2x32xf32>
    %75 = math.tanh %74 : vector<2x32xf32>
    %c4 = arith.constant 4 : index
    %c0_43 = arith.constant 0 : index
    %c0_44 = arith.constant 0 : index
    %76 = vector.load %arg9[%c4, %c0_43, %c0_44] : memref<16x2x32xf32, #tpu.memory_space<vmem>>, vector<1x2x32xf32>
    %77 = vector.shape_cast %76 : vector<1x2x32xf32> to vector<2x32xf32>
    %78 = vector.shape_cast %75 : vector<2x32xf32> to vector<1x2x32xf32>
    tpu.vector_store %arg9[%c4, %c0_43, %c0_44], %78 {strides = array<i32>} : memref<16x2x32xf32, #tpu.memory_space<vmem>>, vector<1x2x32xf32>,
    %79 = vector.extract_strided_slice %13 {offsets = [10, 0], sizes = [2, 32], strides = [1, 1]} : vector<32x32xf32> to vector<2x32xf32>
    %cst_45 = arith.constant dense<0.000000e+00> : vector<2x32xf32>
    %80 = tpu.matmul %69, %2, %cst_45 {dimension_numbers = #tpu.dot_dimension_numbers<[1], [0], [0], [1], [0, 0, 1, 1], [], []>} : vector<2x32xf32>, vector<32x32xf32>, vector<2x32xf32> -> vector<2x32xf32>
    %81 = arith.addf %79, %80 : vector<2x32xf32>
    %82 = math.tanh %81 : vector<2x32xf32>
    %cst_46 = arith.constant dense<0.000000e+00> : vector<2x32xf32>
    %83 = tpu.matmul %82, %1, %cst_46 {dimension_numbers = #tpu.dot_dimension_numbers<[1], [0], [0], [1], [0, 0, 1, 1], [], []>} : vector<2x32xf32>, vector<32x32xf32>, vector<2x32xf32> -> vector<2x32xf32>
    %cst_47 = arith.constant dense<0.000000e+00> : vector<2x32xf32>
    %84 = tpu.matmul %75, %3, %cst_47 {dimension_numbers = #tpu.dot_dimension_numbers<[1], [0], [0], [1], [0, 0, 1, 1], [], []>} : vector<2x32xf32>, vector<32x32xf32>, vector<2x32xf32> -> vector<2x32xf32>
    %85 = arith.addf %83, %84 : vector<2x32xf32>
    %86 = vector.broadcast %5 : vector<1x32xf32> to vector<2x32xf32>
    %87 = arith.addf %85, %86 : vector<2x32xf32>
    %88 = math.tanh %87 : vector<2x32xf32>
    %c5 = arith.constant 5 : index
    %c0_48 = arith.constant 0 : index
    %c0_49 = arith.constant 0 : index
    %89 = vector.load %arg9[%c5, %c0_48, %c0_49] : memref<16x2x32xf32, #tpu.memory_space<vmem>>, vector<1x2x32xf32>
    %90 = vector.shape_cast %89 : vector<1x2x32xf32> to vector<2x32xf32>
    %91 = vector.shape_cast %88 : vector<2x32xf32> to vector<1x2x32xf32>
    tpu.vector_store %arg9[%c5, %c0_48, %c0_49], %91 {strides = array<i32>} : memref<16x2x32xf32, #tpu.memory_space<vmem>>, vector<1x2x32xf32>,
    %92 = vector.extract_strided_slice %13 {offsets = [12, 0], sizes = [2, 32], strides = [1, 1]} : vector<32x32xf32> to vector<2x32xf32>
    %cst_50 = arith.constant dense<0.000000e+00> : vector<2x32xf32>
    %93 = tpu.matmul %82, %2, %cst_50 {dimension_numbers = #tpu.dot_dimension_numbers<[1], [0], [0], [1], [0, 0, 1, 1], [], []>} : vector<2x32xf32>, vector<32x32xf32>, vector<2x32xf32> -> vector<2x32xf32>
    %94 = arith.addf %92, %93 : vector<2x32xf32>
    %95 = math.tanh %94 : vector<2x32xf32>
    %cst_51 = arith.constant dense<0.000000e+00> : vector<2x32xf32>
    %96 = tpu.matmul %95, %1, %cst_51 {dimension_numbers = #tpu.dot_dimension_numbers<[1], [0], [0], [1], [0, 0, 1, 1], [], []>} : vector<2x32xf32>, vector<32x32xf32>, vector<2x32xf32> -> vector<2x32xf32>
    %cst_52 = arith.constant dense<0.000000e+00> : vector<2x32xf32>
    %97 = tpu.matmul %88, %3, %cst_52 {dimension_numbers = #tpu.dot_dimension_numbers<[1], [0], [0], [1], [0, 0, 1, 1], [], []>} : vector<2x32xf32>, vector<32x32xf32>, vector<2x32xf32> -> vector<2x32xf32>
    %98 = arith.addf %96, %97 : vector<2x32xf32>
    %99 = vector.broadcast %5 : vector<1x32xf32> to vector<2x32xf32>
    %100 = arith.addf %98, %99 : vector<2x32xf32>
    %101 = math.tanh %100 : vector<2x32xf32>
    %c6 = arith.constant 6 : index
    %c0_53 = arith.constant 0 : index
    %c0_54 = arith.constant 0 : index
    %102 = vector.load %arg9[%c6, %c0_53, %c0_54] : memref<16x2x32xf32, #tpu.memory_space<vmem>>, vector<1x2x32xf32>
    %103 = vector.shape_cast %102 : vector<1x2x32xf32> to vector<2x32xf32>
    %104 = vector.shape_cast %101 : vector<2x32xf32> to vector<1x2x32xf32>
    tpu.vector_store %arg9[%c6, %c0_53, %c0_54], %104 {strides = array<i32>} : memref<16x2x32xf32, #tpu.memory_space<vmem>>, vector<1x2x32xf32>,
    %105 = vector.extract_strided_slice %13 {offsets = [14, 0], sizes = [2, 32], strides = [1, 1]} : vector<32x32xf32> to vector<2x32xf32>
    %cst_55 = arith.constant dense<0.000000e+00> : vector<2x32xf32>
    %106 = tpu.matmul %95, %2, %cst_55 {dimension_numbers = #tpu.dot_dimension_numbers<[1], [0], [0], [1], [0, 0, 1, 1], [], []>} : vector<2x32xf32>, vector<32x32xf32>, vector<2x32xf32> -> vector<2x32xf32>
    %107 = arith.addf %105, %106 : vector<2x32xf32>
    %108 = math.tanh %107 : vector<2x32xf32>
    %cst_56 = arith.constant dense<0.000000e+00> : vector<2x32xf32>
    %109 = tpu.matmul %108, %1, %cst_56 {dimension_numbers = #tpu.dot_dimension_numbers<[1], [0], [0], [1], [0, 0, 1, 1], [], []>} : vector<2x32xf32>, vector<32x32xf32>, vector<2x32xf32> -> vector<2x32xf32>
    %cst_57 = arith.constant dense<0.000000e+00> : vector<2x32xf32>
    %110 = tpu.matmul %101, %3, %cst_57 {dimension_numbers = #tpu.dot_dimension_numbers<[1], [0], [0], [1], [0, 0, 1, 1], [], []>} : vector<2x32xf32>, vector<32x32xf32>, vector<2x32xf32> -> vector<2x32xf32>
    %111 = arith.addf %109, %110 : vector<2x32xf32>
    %112 = vector.broadcast %5 : vector<1x32xf32> to vector<2x32xf32>
    %113 = arith.addf %111, %112 : vector<2x32xf32>
    %114 = math.tanh %113 : vector<2x32xf32>
    %c7 = arith.constant 7 : index
    %c0_58 = arith.constant 0 : index
    %c0_59 = arith.constant 0 : index
    %115 = vector.load %arg9[%c7, %c0_58, %c0_59] : memref<16x2x32xf32, #tpu.memory_space<vmem>>, vector<1x2x32xf32>
    %116 = vector.shape_cast %115 : vector<1x2x32xf32> to vector<2x32xf32>
    %117 = vector.shape_cast %114 : vector<2x32xf32> to vector<1x2x32xf32>
    tpu.vector_store %arg9[%c7, %c0_58, %c0_59], %117 {strides = array<i32>} : memref<16x2x32xf32, #tpu.memory_space<vmem>>, vector<1x2x32xf32>,
    %118 = vector.extract_strided_slice %13 {offsets = [16, 0], sizes = [2, 32], strides = [1, 1]} : vector<32x32xf32> to vector<2x32xf32>
    %cst_60 = arith.constant dense<0.000000e+00> : vector<2x32xf32>
    %119 = tpu.matmul %108, %2, %cst_60 {dimension_numbers = #tpu.dot_dimension_numbers<[1], [0], [0], [1], [0, 0, 1, 1], [], []>} : vector<2x32xf32>, vector<32x32xf32>, vector<2x32xf32> -> vector<2x32xf32>
    %120 = arith.addf %118, %119 : vector<2x32xf32>
    %121 = math.tanh %120 : vector<2x32xf32>
    %cst_61 = arith.constant dense<0.000000e+00> : vector<2x32xf32>
    %122 = tpu.matmul %121, %1, %cst_61 {dimension_numbers = #tpu.dot_dimension_numbers<[1], [0], [0], [1], [0, 0, 1, 1], [], []>} : vector<2x32xf32>, vector<32x32xf32>, vector<2x32xf32> -> vector<2x32xf32>
    %cst_62 = arith.constant dense<0.000000e+00> : vector<2x32xf32>
    %123 = tpu.matmul %114, %3, %cst_62 {dimension_numbers = #tpu.dot_dimension_numbers<[1], [0], [0], [1], [0, 0, 1, 1], [], []>} : vector<2x32xf32>, vector<32x32xf32>, vector<2x32xf32> -> vector<2x32xf32>
    %124 = arith.addf %122, %123 : vector<2x32xf32>
    %125 = vector.broadcast %5 : vector<1x32xf32> to vector<2x32xf32>
    %126 = arith.addf %124, %125 : vector<2x32xf32>
    %127 = math.tanh %126 : vector<2x32xf32>
    %c8 = arith.constant 8 : index
    %c0_63 = arith.constant 0 : index
    %c0_64 = arith.constant 0 : index
    %128 = vector.load %arg9[%c8, %c0_63, %c0_64] : memref<16x2x32xf32, #tpu.memory_space<vmem>>, vector<1x2x32xf32>
    %129 = vector.shape_cast %128 : vector<1x2x32xf32> to vector<2x32xf32>
    %130 = vector.shape_cast %127 : vector<2x32xf32> to vector<1x2x32xf32>
    tpu.vector_store %arg9[%c8, %c0_63, %c0_64], %130 {strides = array<i32>} : memref<16x2x32xf32, #tpu.memory_space<vmem>>, vector<1x2x32xf32>,
    %131 = vector.extract_strided_slice %13 {offsets = [18, 0], sizes = [2, 32], strides = [1, 1]} : vector<32x32xf32> to vector<2x32xf32>
    %cst_65 = arith.constant dense<0.000000e+00> : vector<2x32xf32>
    %132 = tpu.matmul %121, %2, %cst_65 {dimension_numbers = #tpu.dot_dimension_numbers<[1], [0], [0], [1], [0, 0, 1, 1], [], []>} : vector<2x32xf32>, vector<32x32xf32>, vector<2x32xf32> -> vector<2x32xf32>
    %133 = arith.addf %131, %132 : vector<2x32xf32>
    %134 = math.tanh %133 : vector<2x32xf32>
    %cst_66 = arith.constant dense<0.000000e+00> : vector<2x32xf32>
    %135 = tpu.matmul %134, %1, %cst_66 {dimension_numbers = #tpu.dot_dimension_numbers<[1], [0], [0], [1], [0, 0, 1, 1], [], []>} : vector<2x32xf32>, vector<32x32xf32>, vector<2x32xf32> -> vector<2x32xf32>
    %cst_67 = arith.constant dense<0.000000e+00> : vector<2x32xf32>
    %136 = tpu.matmul %127, %3, %cst_67 {dimension_numbers = #tpu.dot_dimension_numbers<[1], [0], [0], [1], [0, 0, 1, 1], [], []>} : vector<2x32xf32>, vector<32x32xf32>, vector<2x32xf32> -> vector<2x32xf32>
    %137 = arith.addf %135, %136 : vector<2x32xf32>
    %138 = vector.broadcast %5 : vector<1x32xf32> to vector<2x32xf32>
    %139 = arith.addf %137, %138 : vector<2x32xf32>
    %140 = math.tanh %139 : vector<2x32xf32>
    %c9 = arith.constant 9 : index
    %c0_68 = arith.constant 0 : index
    %c0_69 = arith.constant 0 : index
    %141 = vector.load %arg9[%c9, %c0_68, %c0_69] : memref<16x2x32xf32, #tpu.memory_space<vmem>>, vector<1x2x32xf32>
    %142 = vector.shape_cast %141 : vector<1x2x32xf32> to vector<2x32xf32>
    %143 = vector.shape_cast %140 : vector<2x32xf32> to vector<1x2x32xf32>
    tpu.vector_store %arg9[%c9, %c0_68, %c0_69], %143 {strides = array<i32>} : memref<16x2x32xf32, #tpu.memory_space<vmem>>, vector<1x2x32xf32>,
    %144 = vector.extract_strided_slice %13 {offsets = [20, 0], sizes = [2, 32], strides = [1, 1]} : vector<32x32xf32> to vector<2x32xf32>
    %cst_70 = arith.constant dense<0.000000e+00> : vector<2x32xf32>
    %145 = tpu.matmul %134, %2, %cst_70 {dimension_numbers = #tpu.dot_dimension_numbers<[1], [0], [0], [1], [0, 0, 1, 1], [], []>} : vector<2x32xf32>, vector<32x32xf32>, vector<2x32xf32> -> vector<2x32xf32>
    %146 = arith.addf %144, %145 : vector<2x32xf32>
    %147 = math.tanh %146 : vector<2x32xf32>
    %cst_71 = arith.constant dense<0.000000e+00> : vector<2x32xf32>
    %148 = tpu.matmul %147, %1, %cst_71 {dimension_numbers = #tpu.dot_dimension_numbers<[1], [0], [0], [1], [0, 0, 1, 1], [], []>} : vector<2x32xf32>, vector<32x32xf32>, vector<2x32xf32> -> vector<2x32xf32>
    %cst_72 = arith.constant dense<0.000000e+00> : vector<2x32xf32>
    %149 = tpu.matmul %140, %3, %cst_72 {dimension_numbers = #tpu.dot_dimension_numbers<[1], [0], [0], [1], [0, 0, 1, 1], [], []>} : vector<2x32xf32>, vector<32x32xf32>, vector<2x32xf32> -> vector<2x32xf32>
    %150 = arith.addf %148, %149 : vector<2x32xf32>
    %151 = vector.broadcast %5 : vector<1x32xf32> to vector<2x32xf32>
    %152 = arith.addf %150, %151 : vector<2x32xf32>
    %153 = math.tanh %152 : vector<2x32xf32>
    %c10 = arith.constant 10 : index
    %c0_73 = arith.constant 0 : index
    %c0_74 = arith.constant 0 : index
    %154 = vector.load %arg9[%c10, %c0_73, %c0_74] : memref<16x2x32xf32, #tpu.memory_space<vmem>>, vector<1x2x32xf32>
    %155 = vector.shape_cast %154 : vector<1x2x32xf32> to vector<2x32xf32>
    %156 = vector.shape_cast %153 : vector<2x32xf32> to vector<1x2x32xf32>
    tpu.vector_store %arg9[%c10, %c0_73, %c0_74], %156 {strides = array<i32>} : memref<16x2x32xf32, #tpu.memory_space<vmem>>, vector<1x2x32xf32>,
    %157 = vector.extract_strided_slice %13 {offsets = [22, 0], sizes = [2, 32], strides = [1, 1]} : vector<32x32xf32> to vector<2x32xf32>
    %cst_75 = arith.constant dense<0.000000e+00> : vector<2x32xf32>
    %158 = tpu.matmul %147, %2, %cst_75 {dimension_numbers = #tpu.dot_dimension_numbers<[1], [0], [0], [1], [0, 0, 1, 1], [], []>} : vector<2x32xf32>, vector<32x32xf32>, vector<2x32xf32> -> vector<2x32xf32>
    %159 = arith.addf %157, %158 : vector<2x32xf32>
    %160 = math.tanh %159 : vector<2x32xf32>
    %cst_76 = arith.constant dense<0.000000e+00> : vector<2x32xf32>
    %161 = tpu.matmul %160, %1, %cst_76 {dimension_numbers = #tpu.dot_dimension_numbers<[1], [0], [0], [1], [0, 0, 1, 1], [], []>} : vector<2x32xf32>, vector<32x32xf32>, vector<2x32xf32> -> vector<2x32xf32>
    %cst_77 = arith.constant dense<0.000000e+00> : vector<2x32xf32>
    %162 = tpu.matmul %153, %3, %cst_77 {dimension_numbers = #tpu.dot_dimension_numbers<[1], [0], [0], [1], [0, 0, 1, 1], [], []>} : vector<2x32xf32>, vector<32x32xf32>, vector<2x32xf32> -> vector<2x32xf32>
    %163 = arith.addf %161, %162 : vector<2x32xf32>
    %164 = vector.broadcast %5 : vector<1x32xf32> to vector<2x32xf32>
    %165 = arith.addf %163, %164 : vector<2x32xf32>
    %166 = math.tanh %165 : vector<2x32xf32>
    %c11 = arith.constant 11 : index
    %c0_78 = arith.constant 0 : index
    %c0_79 = arith.constant 0 : index
    %167 = vector.load %arg9[%c11, %c0_78, %c0_79] : memref<16x2x32xf32, #tpu.memory_space<vmem>>, vector<1x2x32xf32>
    %168 = vector.shape_cast %167 : vector<1x2x32xf32> to vector<2x32xf32>
    %169 = vector.shape_cast %166 : vector<2x32xf32> to vector<1x2x32xf32>
    tpu.vector_store %arg9[%c11, %c0_78, %c0_79], %169 {strides = array<i32>} : memref<16x2x32xf32, #tpu.memory_space<vmem>>, vector<1x2x32xf32>,
    %170 = vector.extract_strided_slice %13 {offsets = [24, 0], sizes = [2, 32], strides = [1, 1]} : vector<32x32xf32> to vector<2x32xf32>
    %cst_80 = arith.constant dense<0.000000e+00> : vector<2x32xf32>
    %171 = tpu.matmul %160, %2, %cst_80 {dimension_numbers = #tpu.dot_dimension_numbers<[1], [0], [0], [1], [0, 0, 1, 1], [], []>} : vector<2x32xf32>, vector<32x32xf32>, vector<2x32xf32> -> vector<2x32xf32>
    %172 = arith.addf %170, %171 : vector<2x32xf32>
    %173 = math.tanh %172 : vector<2x32xf32>
    %cst_81 = arith.constant dense<0.000000e+00> : vector<2x32xf32>
    %174 = tpu.matmul %173, %1, %cst_81 {dimension_numbers = #tpu.dot_dimension_numbers<[1], [0], [0], [1], [0, 0, 1, 1], [], []>} : vector<2x32xf32>, vector<32x32xf32>, vector<2x32xf32> -> vector<2x32xf32>
    %cst_82 = arith.constant dense<0.000000e+00> : vector<2x32xf32>
    %175 = tpu.matmul %166, %3, %cst_82 {dimension_numbers = #tpu.dot_dimension_numbers<[1], [0], [0], [1], [0, 0, 1, 1], [], []>} : vector<2x32xf32>, vector<32x32xf32>, vector<2x32xf32> -> vector<2x32xf32>
    %176 = arith.addf %174, %175 : vector<2x32xf32>
    %177 = vector.broadcast %5 : vector<1x32xf32> to vector<2x32xf32>
    %178 = arith.addf %176, %177 : vector<2x32xf32>
    %179 = math.tanh %178 : vector<2x32xf32>
    %c12 = arith.constant 12 : index
    %c0_83 = arith.constant 0 : index
    %c0_84 = arith.constant 0 : index
    %180 = vector.load %arg9[%c12, %c0_83, %c0_84] : memref<16x2x32xf32, #tpu.memory_space<vmem>>, vector<1x2x32xf32>
    %181 = vector.shape_cast %180 : vector<1x2x32xf32> to vector<2x32xf32>
    %182 = vector.shape_cast %179 : vector<2x32xf32> to vector<1x2x32xf32>
    tpu.vector_store %arg9[%c12, %c0_83, %c0_84], %182 {strides = array<i32>} : memref<16x2x32xf32, #tpu.memory_space<vmem>>, vector<1x2x32xf32>,
    %183 = vector.extract_strided_slice %13 {offsets = [26, 0], sizes = [2, 32], strides = [1, 1]} : vector<32x32xf32> to vector<2x32xf32>
    %cst_85 = arith.constant dense<0.000000e+00> : vector<2x32xf32>
    %184 = tpu.matmul %173, %2, %cst_85 {dimension_numbers = #tpu.dot_dimension_numbers<[1], [0], [0], [1], [0, 0, 1, 1], [], []>} : vector<2x32xf32>, vector<32x32xf32>, vector<2x32xf32> -> vector<2x32xf32>
    %185 = arith.addf %183, %184 : vector<2x32xf32>
    %186 = math.tanh %185 : vector<2x32xf32>
    %cst_86 = arith.constant dense<0.000000e+00> : vector<2x32xf32>
    %187 = tpu.matmul %186, %1, %cst_86 {dimension_numbers = #tpu.dot_dimension_numbers<[1], [0], [0], [1], [0, 0, 1, 1], [], []>} : vector<2x32xf32>, vector<32x32xf32>, vector<2x32xf32> -> vector<2x32xf32>
    %cst_87 = arith.constant dense<0.000000e+00> : vector<2x32xf32>
    %188 = tpu.matmul %179, %3, %cst_87 {dimension_numbers = #tpu.dot_dimension_numbers<[1], [0], [0], [1], [0, 0, 1, 1], [], []>} : vector<2x32xf32>, vector<32x32xf32>, vector<2x32xf32> -> vector<2x32xf32>
    %189 = arith.addf %187, %188 : vector<2x32xf32>
    %190 = vector.broadcast %5 : vector<1x32xf32> to vector<2x32xf32>
    %191 = arith.addf %189, %190 : vector<2x32xf32>
    %192 = math.tanh %191 : vector<2x32xf32>
    %c13 = arith.constant 13 : index
    %c0_88 = arith.constant 0 : index
    %c0_89 = arith.constant 0 : index
    %193 = vector.load %arg9[%c13, %c0_88, %c0_89] : memref<16x2x32xf32, #tpu.memory_space<vmem>>, vector<1x2x32xf32>
    %194 = vector.shape_cast %193 : vector<1x2x32xf32> to vector<2x32xf32>
    %195 = vector.shape_cast %192 : vector<2x32xf32> to vector<1x2x32xf32>
    tpu.vector_store %arg9[%c13, %c0_88, %c0_89], %195 {strides = array<i32>} : memref<16x2x32xf32, #tpu.memory_space<vmem>>, vector<1x2x32xf32>,
    %196 = vector.extract_strided_slice %13 {offsets = [28, 0], sizes = [2, 32], strides = [1, 1]} : vector<32x32xf32> to vector<2x32xf32>
    %cst_90 = arith.constant dense<0.000000e+00> : vector<2x32xf32>
    %197 = tpu.matmul %186, %2, %cst_90 {dimension_numbers = #tpu.dot_dimension_numbers<[1], [0], [0], [1], [0, 0, 1, 1], [], []>} : vector<2x32xf32>, vector<32x32xf32>, vector<2x32xf32> -> vector<2x32xf32>
    %198 = arith.addf %196, %197 : vector<2x32xf32>
    %199 = math.tanh %198 : vector<2x32xf32>
    %cst_91 = arith.constant dense<0.000000e+00> : vector<2x32xf32>
    %200 = tpu.matmul %199, %1, %cst_91 {dimension_numbers = #tpu.dot_dimension_numbers<[1], [0], [0], [1], [0, 0, 1, 1], [], []>} : vector<2x32xf32>, vector<32x32xf32>, vector<2x32xf32> -> vector<2x32xf32>
    %cst_92 = arith.constant dense<0.000000e+00> : vector<2x32xf32>
    %201 = tpu.matmul %192, %3, %cst_92 {dimension_numbers = #tpu.dot_dimension_numbers<[1], [0], [0], [1], [0, 0, 1, 1], [], []>} : vector<2x32xf32>, vector<32x32xf32>, vector<2x32xf32> -> vector<2x32xf32>
    %202 = arith.addf %200, %201 : vector<2x32xf32>
    %203 = vector.broadcast %5 : vector<1x32xf32> to vector<2x32xf32>
    %204 = arith.addf %202, %203 : vector<2x32xf32>
    %205 = math.tanh %204 : vector<2x32xf32>
    %c14 = arith.constant 14 : index
    %c0_93 = arith.constant 0 : index
    %c0_94 = arith.constant 0 : index
    %206 = vector.load %arg9[%c14, %c0_93, %c0_94] : memref<16x2x32xf32, #tpu.memory_space<vmem>>, vector<1x2x32xf32>
    %207 = vector.shape_cast %206 : vector<1x2x32xf32> to vector<2x32xf32>
    %208 = vector.shape_cast %205 : vector<2x32xf32> to vector<1x2x32xf32>
    tpu.vector_store %arg9[%c14, %c0_93, %c0_94], %208 {strides = array<i32>} : memref<16x2x32xf32, #tpu.memory_space<vmem>>, vector<1x2x32xf32>,
    %209 = vector.extract_strided_slice %13 {offsets = [30, 0], sizes = [2, 32], strides = [1, 1]} : vector<32x32xf32> to vector<2x32xf32>
    %cst_95 = arith.constant dense<0.000000e+00> : vector<2x32xf32>
    %210 = tpu.matmul %199, %2, %cst_95 {dimension_numbers = #tpu.dot_dimension_numbers<[1], [0], [0], [1], [0, 0, 1, 1], [], []>} : vector<2x32xf32>, vector<32x32xf32>, vector<2x32xf32> -> vector<2x32xf32>
    %211 = arith.addf %209, %210 : vector<2x32xf32>
    %212 = math.tanh %211 : vector<2x32xf32>
    %cst_96 = arith.constant dense<0.000000e+00> : vector<2x32xf32>
    %213 = tpu.matmul %212, %1, %cst_96 {dimension_numbers = #tpu.dot_dimension_numbers<[1], [0], [0], [1], [0, 0, 1, 1], [], []>} : vector<2x32xf32>, vector<32x32xf32>, vector<2x32xf32> -> vector<2x32xf32>
    %cst_97 = arith.constant dense<0.000000e+00> : vector<2x32xf32>
    %214 = tpu.matmul %205, %3, %cst_97 {dimension_numbers = #tpu.dot_dimension_numbers<[1], [0], [0], [1], [0, 0, 1, 1], [], []>} : vector<2x32xf32>, vector<32x32xf32>, vector<2x32xf32> -> vector<2x32xf32>
    %215 = arith.addf %213, %214 : vector<2x32xf32>
    %216 = vector.broadcast %5 : vector<1x32xf32> to vector<2x32xf32>
    %217 = arith.addf %215, %216 : vector<2x32xf32>
    %218 = math.tanh %217 : vector<2x32xf32>
    %c15 = arith.constant 15 : index
    %c0_98 = arith.constant 0 : index
    %c0_99 = arith.constant 0 : index
    %219 = vector.load %arg9[%c15, %c0_98, %c0_99] : memref<16x2x32xf32, #tpu.memory_space<vmem>>, vector<1x2x32xf32>
    %220 = vector.shape_cast %219 : vector<1x2x32xf32> to vector<2x32xf32>
    %221 = vector.shape_cast %218 : vector<2x32xf32> to vector<1x2x32xf32>
    tpu.vector_store %arg9[%c15, %c0_98, %c0_99], %221 {strides = array<i32>} : memref<16x2x32xf32, #tpu.memory_space<vmem>>, vector<1x2x32xf32>,
    %c0_100 = arith.constant 0 : index
    %c0_101 = arith.constant 0 : index
    %c0_102 = arith.constant 0 : index
    %222 = vector.load %arg10[%c0_100, %c0_101, %c0_102] : memref<2x2x32xf32, #tpu.memory_space<vmem>>, vector<1x2x32xf32>
    %223 = vector.shape_cast %222 : vector<1x2x32xf32> to vector<2x32xf32>
    %224 = vector.shape_cast %212 : vector<2x32xf32> to vector<1x2x32xf32>
    tpu.vector_store %arg10[%c0_100, %c0_101, %c0_102], %224 {strides = array<i32>} : memref<2x2x32xf32, #tpu.memory_space<vmem>>, vector<1x2x32xf32>,
    %c1_103 = arith.constant 1 : index
    %c0_104 = arith.constant 0 : index
    %c0_105 = arith.constant 0 : index
    %225 = vector.load %arg10[%c1_103, %c0_104, %c0_105] : memref<2x2x32xf32, #tpu.memory_space<vmem>>, vector<1x2x32xf32>
    %226 = vector.shape_cast %225 : vector<1x2x32xf32> to vector<2x32xf32>
    %227 = vector.shape_cast %218 : vector<2x32xf32> to vector<1x2x32xf32>
    tpu.vector_store %arg10[%c1_103, %c0_104, %c0_105], %227 {strides = array<i32>} : memref<2x2x32xf32, #tpu.memory_space<vmem>>, vector<1x2x32xf32>,
    return
  }
  func.func @transform_0(%arg0: i32) -> (i32, i32) {
    %c0_i32 = arith.constant 0 : i32
    %c0_i32_0 = arith.constant 0 : i32
    %c0_i32_1 = arith.constant 0 : i32
    return %c0_i32, %c0_i32_0 : i32, i32
  }
  func.func @transform_1(%arg0: i32) -> (i32, i32) {
    %c0_i32 = arith.constant 0 : i32
    %c0_i32_0 = arith.constant 0 : i32
    %c0_i32_1 = arith.constant 0 : i32
    return %c0_i32, %c0_i32_0 : i32, i32
  }
  func.func @transform_2(%arg0: i32) -> (i32, i32) {
    %c0_i32 = arith.constant 0 : i32
    %c0_i32_0 = arith.constant 0 : i32
    %c0_i32_1 = arith.constant 0 : i32
    return %c0_i32, %c0_i32_0 : i32, i32
  }
  func.func @transform_3(%arg0: i32) -> (i32, i32) {
    %c0_i32 = arith.constant 0 : i32
    %c0_i32_0 = arith.constant 0 : i32
    %c0_i32_1 = arith.constant 0 : i32
    return %c0_i32, %c0_i32_0 : i32, i32
  }
  func.func @transform_4(%arg0: i32) -> (i32, i32) {
    %c0_i32 = arith.constant 0 : i32
    %c0_i32_0 = arith.constant 0 : i32
    %c0_i32_1 = arith.constant 0 : i32
    return %c0_i32, %c0_i32_0 : i32, i32
  }
  func.func @transform_5(%arg0: i32) -> (i32, i32) {
    %c0_i32 = arith.constant 0 : i32
    %c0_i32_0 = arith.constant 0 : i32
    %c0_i32_1 = arith.constant 0 : i32
    return %c0_i32, %c0_i32_0 : i32, i32
  }
  func.func @transform_6(%arg0: i32) -> (i32, i32) {
    %c0_i32 = arith.constant 0 : i32
    %c0_i32_0 = arith.constant 0 : i32
    %c0_i32_1 = arith.constant 0 : i32
    return %c0_i32, %c0_i32_0 : i32, i32
  }
  func.func @transform_7(%arg0: i32) -> (i32, i32, i32) {
    %c0_i32 = arith.constant 0 : i32
    %c0_i32_0 = arith.constant 0 : i32
    %c0_i32_1 = arith.constant 0 : i32
    %c0_i32_2 = arith.constant 0 : i32
    return %c0_i32, %c0_i32_0, %c0_i32_1 : i32, i32, i32
  }
  func.func @transform_8(%arg0: i32) -> (i32, i32, i32) {
    %c0_i32 = arith.constant 0 : i32
    %c0_i32_0 = arith.constant 0 : i32
    %c0_i32_1 = arith.constant 0 : i32
    %c0_i32_2 = arith.constant 0 : i32
    return %c0_i32, %c0_i32_0, %c0_i32_1 : i32, i32, i32
  }
  func.func @transform_9(%arg0: i32) -> (i32, i32, i32) {
    %c0_i32 = arith.constant 0 : i32
    %c0_i32_0 = arith.constant 0 : i32
    %c0_i32_1 = arith.constant 0 : i32
    %c0_i32_2 = arith.constant 0 : i32
    return %c0_i32, %c0_i32_0, %c0_i32_1 : i32, i32, i32
  }
}

</mosaic_0001>

<llo_original>
// kernel: tpu_custom_call.1
$region0: #{tpu_custom_call.1}
  #allocation0 [shape = 'u32[]', space=smem, size = 0x4, offset = 0x4, fixed_abs, tag = 'smem constant byte address 0x4 - core index']
  #allocation1 [shape = 'u32[144,128]{1,0:T(1,128)}', space=vmem, size = 0x12000, scoped, tag = 'internal scratch']
  %s0 = inlined_call_operand.vmem [shape: f32[32,16], index: 0, kind: input, shape index: {}]
  %s1 = inlined_call_operand.hbm [shape: f32[16,32], index: 1, kind: input, shape index: {}]
  %s2 = inlined_call_operand.vmem [shape: f32[32,32], index: 2, kind: input, shape index: {}]
  %s3 = inlined_call_operand.vmem [shape: f32[1,32], index: 3, kind: input, shape index: {}]
  %s4 = inlined_call_operand.hbm [shape: f32[32,32], index: 4, kind: input, shape index: {}]
  %s5 = inlined_call_operand.vmem [shape: f32[32,32], index: 5, kind: input, shape index: {}]
  %s6 = inlined_call_operand.vmem [shape: f32[1,32], index: 6, kind: input, shape index: {}]
  %s7 = inlined_call_operand.vmem [shape: f32[2,2,32], index: 7, kind: input, shape index: {}]
  %s8 = inlined_call_operand.hbm [shape: f32[16,2,32], index: 8, kind: output, shape index: {0}]
  %s9 = inlined_call_operand.hbm [shape: f32[2,2,32], index: 9, kind: output, shape index: {1}]
  %10 = xla_tuple %s8, %s9
  %s11 = sld [smem:[#allocation0]]
  $region58: #{tpu_custom_call.1} parent=0
    _
  %s13 = ssub.s32 1, %s11
  %s14 = scalar_select 0, %s13, %s11
  $region1: #{tpu_custom_call.1} parent=0
    #allocation2 [shape = 'u8[8192]{0}', space=vmem, size = 0x2000, scoped, tag = 'input window, operand 1, single buffered']
    #allocation3 [shape = 's32[1]{0}', space=sflag, size = 0x4, scoped, tag = 'scoped memory for tpu_custom_call.1']
    #allocation4 [shape = 's32[1]{0}', space=sflag, size = 0x4, scoped, tag = 'scoped memory for tpu_custom_call.1']
    #allocation5 [shape = 'u8[16384]{0}', space=vmem, size = 0x4000, scoped, tag = 'input window, operand 4, single buffered']
    #allocation6 [shape = 's32[1]{0}', space=sflag, size = 0x4, scoped, tag = 'scoped memory for tpu_custom_call.1']
    #allocation7 [shape = 'u8[16384]{0}', space=vmem, size = 0x4000, scoped, tag = 'output window, operand 0, single buffered']
    #allocation8 [shape = 'u8[2048]{0}', space=vmem, size = 0x800, scoped, tag = 'output window, operand 1, single buffered']
    #allocation9 [shape = 's32[1]{0}', space=sflag, size = 0x4, scoped, tag = 'scoped memory for tpu_custom_call.1']
    %15 = vsyncpa [#allocation3], 0
    %16 = vsyncpa [#allocation6], 0
    %17 = vsyncpa [#allocation4], 0
    %18 = vsyncpa [#allocation9], 0
    // Predicated region
    $region2: #{tpu_custom_call.1} parent=1 // pred_check
      _
    $region3: #{tpu_custom_call.1} parent=1 // pred_check_branch
      %20 = sbr.rel (0) target = $region5
    $region4: #{tpu_custom_call.1} parent=1 // pred_region
      _
    $region5: #{tpu_custom_call.1} parent=1 // pred_fallthru
      _
    // Predicated region
    $region6: #{tpu_custom_call.1} parent=1 // pred_check
      _
    $region7: #{tpu_custom_call.1} parent=1 // pred_check_branch
      %22 = sbr.rel (0) target = $region9
    $region8: #{tpu_custom_call.1} parent=1 // pred_region
      %s24 = ssub.s32 256, 256
      %25 = vsyncadd [#allocation3], %s24
      %s26 = sshll.u32 [#allocation2], 4
      %s27 = int_to_ptr.vmem [resolvable:$true] %s26
      %32 = dma.hbm_to_vmem [thread:$0]  %s1, 256, %s27, [#allocation3], 128, 128, 8
    $region9: #{tpu_custom_call.1} parent=1 // pred_fallthru
      _
    // Predicated region
    $region10: #{tpu_custom_call.1} parent=1 // pred_check
      _
    $region11: #{tpu_custom_call.1} parent=1 // pred_check_branch
      %34 = sbr.rel (0) target = $region13
    $region12: #{tpu_custom_call.1} parent=1 // pred_region
      _
    $region13: #{tpu_custom_call.1} parent=1 // pred_fallthru
      _
    // Predicated region
    $region14: #{tpu_custom_call.1} parent=1 // pred_check
      _
    $region15: #{tpu_custom_call.1} parent=1 // pred_check_branch
      %36 = sbr.rel (0) target = $region17
    $region16: #{tpu_custom_call.1} parent=1 // pred_region
      _
    $region17: #{tpu_custom_call.1} parent=1 // pred_fallthru
      _
    // Predicated region
    $region18: #{tpu_custom_call.1} parent=1 // pred_check
      _
    $region19: #{tpu_custom_call.1} parent=1 // pred_check_branch
      %38 = sbr.rel (0) target = $region21
    $region20: #{tpu_custom_call.1} parent=1 // pred_region
      %s40 = ssub.s32 512, 512
      %41 = vsyncadd [#allocation6], %s40
      %s42 = sshll.u32 [#allocation5], 4
      %s43 = int_to_ptr.vmem [resolvable:$true] %s42
      %48 = dma.hbm_to_vmem [thread:$0]  %s4, 512, %s43, [#allocation6], 128, 128, 8
    $region21: #{tpu_custom_call.1} parent=1 // pred_fallthru
      _
    // Predicated region
    $region22: #{tpu_custom_call.1} parent=1 // pred_check
      _
    $region23: #{tpu_custom_call.1} parent=1 // pred_check_branch
      %50 = sbr.rel (0) target = $region25
    $region24: #{tpu_custom_call.1} parent=1 // pred_region
      _
    $region25: #{tpu_custom_call.1} parent=1 // pred_fallthru
      _
    // Predicated region
    $region26: #{tpu_custom_call.1} parent=1 // pred_check
      _
    $region27: #{tpu_custom_call.1} parent=1 // pred_check_branch
      %52 = sbr.rel (0) target = $region29
    $region28: #{tpu_custom_call.1} parent=1 // pred_region
      _
    $region29: #{tpu_custom_call.1} parent=1 // pred_fallthru
      _
    // Predicated region
    $region30: #{tpu_custom_call.1} parent=1 // pred_check
      _
    $region31: #{tpu_custom_call.1} parent=1 // pred_check_branch
      %54 = sbr.rel (0) target = $region33
    $region32: #{tpu_custom_call.1} parent=1 // pred_region
      _
    $region33: #{tpu_custom_call.1} parent=1 // pred_fallthru
      _
    // Predicated region
    $region34: #{tpu_custom_call.1} parent=1 // pred_check
      _
    $region35: #{tpu_custom_call.1} parent=1 // pred_check_branch
      %56 = sbr.rel (0) target = $region37
    $region36: #{tpu_custom_call.1} parent=1 // pred_region
      %57 = dma.done [#allocation3], 256
    $region37: #{tpu_custom_call.1} parent=1 // pred_fallthru
      _
    // Predicated region
    $region38: #{tpu_custom_call.1} parent=1 // pred_check
      _
    $region39: #{tpu_custom_call.1} parent=1 // pred_check_branch
      %59 = sbr.rel (0) target = $region41
    $region40: #{tpu_custom_call.1} parent=1 // pred_region
      %60 = dma.done [#allocation6], 512
    $region41: #{tpu_custom_call.1} parent=1 // pred_fallthru
      _
    %v61 = vld [vmem:[#allocation2] sm:$0xff]
    %v62 = vld [vmem:[#allocation2 + $0x8] sm:$0xff]
    %v63 = vld [vmem:[#allocation5] sm:$0xff]
    %v64 = vld [vmem:[#allocation5 + $0x8] sm:$0xff]
    %v65 = vld [vmem:[#allocation5 + $0x10] sm:$0xff]
    %v66 = vld [vmem:[#allocation5 + $0x18] sm:$0xff]
    %v67 = vld [vmem:[%s2] sm:$0xff]
    %v68 = vld [vmem:[%s2 + $0x8] sm:$0xff]
    %v69 = vld [vmem:[%s2 + $0x10] sm:$0xff]
    %v70 = vld [vmem:[%s2 + $0x18] sm:$0xff]
    %v71 = vld [vmem:[%s5] sm:$0xff]
    %v72 = vld [vmem:[%s5 + $0x8] sm:$0xff]
    %v73 = vld [vmem:[%s5 + $0x10] sm:$0xff]
    %v74 = vld [vmem:[%s5 + $0x18] sm:$0xff]
    %v75 = vld [vmem:[%s3] sm:$0x1]
    %v76 = vld [vmem:[%s6] sm:$0x1]
    %v77 = vld [vmem:[%s7] sm:$0x3]
    %s78 = scalar_lea.vmem %s7, 2
    %v79 = vld [vmem:[%s78] sm:$0x3]
    %v80 = vld [vmem:[%s0] sm:$0xff]
    %v81 = vld [vmem:[%s0 + $0x8] sm:$0xff]
    %v82 = vld [vmem:[%s0 + $0x10] sm:$0xff]
    %v83 = vld [vmem:[%s0 + $0x18] sm:$0xff]
    %v85 = vlaneseq
    %v86 = vshrl.u32 %v85, 7
    %v87 = vsub.s32 0, %v86
    %v88 = vrot.slane %v75, %v87
    %vm90 = vcmask 130048
    %v92 = vsel %vm90, %v80, 0
    %v95 = vsel %vm90, %v81, 0
    %v98 = vsel %vm90, %v82, 0
    %v101 = vsel %vm90, %v83, 0
    %103 = vmatprep.subr.mxu0 0.0
    %104 = vmatpush1.msra.mxu0 %v61
    %105 = vmatprep.subr.mxu0 0.0
    %106 = vmatpush1.msra.mxu0 %v62
    %107 = vmatprep.subr.mxu0 0.0
    %108 = vmatpush1.msra.mxu0 0.0
    %109 = vmatprep.subr.mxu0 0.0
    %110 = vmatpush1.msra.mxu0 0.0
    %111 = vmatprep.subr.mxu0 0.0
    %112 = vmatpush1.msra.mxu0 0.0
    %113 = vmatprep.subr.mxu0 0.0
    %114 = vmatpush1.msra.mxu0 0.0
    %115 = vmatprep.subr.mxu0 0.0
    %116 = vmatpush1.msra.mxu0 0.0
    %117 = vmatprep.subr.mxu0 0.0
    %118 = vmatpush1.msra.mxu0 0.0
    %119 = vmatprep.subr.mxu0 0.0
    %120 = vmatpush1.msra.mxu0 0.0
    %121 = vmatprep.subr.mxu0 0.0
    %122 = vmatpush1.msra.mxu0 0.0
    %123 = vmatprep.subr.mxu0 0.0
    %124 = vmatpush1.msra.mxu0 0.0
    %125 = vmatprep.subr.mxu0 0.0
    %126 = vmatpush1.msra.mxu0 0.0
    %127 = vmatprep.subr.mxu0 0.0
    %128 = vmatpush1.msra.mxu0 0.0
    %129 = vmatprep.subr.mxu0 0.0
    %130 = vmatpush1.msra.mxu0 0.0
    %131 = vmatprep.subr.mxu0 0.0
    %132 = vmatpush1.msra.mxu0 0.0
    %133 = vmatprep.subr.mxu0 0.0
    %134 = vmatpush1.msra.mxu0 0.0
    %135 = vmatprep.subr.mxu0 0.0
    %136 = vmatpush1.msra.mxu0 0.0
    %137 = vmatprep.subr.mxu0 0.0
    %138 = vmatpush1.msra.mxu0 0.0
    %139 = vmatprep.subr.mxu0 0.0
    %140 = vmatpush1.msra.mxu0 0.0
    %141 = vmatprep.subr.mxu0 0.0
    %142 = vmatpush1.msra.mxu0 0.0
    %143 = vmatprep.subr.mxu0 0.0
    %144 = vmatpush1.msra.mxu0 0.0
    %145 = vmatprep.subr.mxu0 0.0
    %146 = vmatpush1.msra.mxu0 0.0
    %147 = vmatprep.subr.mxu0 0.0
    %148 = vmatpush1.msra.mxu0 0.0
    %149 = vmatprep.subr.mxu0 0.0
    %150 = vmatpush1.msra.mxu0 0.0
    %151 = vmatprep.subr.mxu0 0.0
    %152 = vmatpush1.msra.mxu0 0.0
    %153 = vmatprep.subr.mxu0 0.0
    %154 = vmatpush1.msra.mxu0 0.0
    %155 = vmatprep.subr.mxu0 0.0
    %156 = vmatpush1.msra.mxu0 0.0
    %157 = vmatprep.subr.mxu0 0.0
    %158 = vmatpush1.msra.mxu0 0.0
    %159 = vmatprep.subr.mxu0 0.0
    %160 = vmatpush1.msra.mxu0 0.0
    %161 = vmatprep.subr.mxu0 0.0
    %162 = vmatpush1.msra.mxu0 0.0
    %163 = vmatprep.subr.mxu0 0.0
    %164 = vmatpush1.msra.mxu0 0.0
    %165 = vmatprep.subr.mxu0 0.0
    %166 = vmatpush1.msra.mxu0 0.0
    %167 = vmatprep.mubr.f32.mxu0 0.0
    %168 = vmatmul.mubr.f32.gmra.mrb[0].mxu0 %v92
    %v169 = vpop.f32.mrb[0].mxu0
    %v170 = vadd.f32 %v88, %v169
    %v171 = vpop.f32.mrb[0].mxu0
    %172 = vmatprep.mubr.f32.mxu0 0.0
    %173 = vmatmul.mubr.f32.gmra.mrb[0].mxu0 %v95
    %v174 = vpop.f32.mrb[0].mxu0
    %v175 = vadd.f32 %v88, %v174
    %v176 = vpop.f32.mrb[0].mxu0
    %177 = vmatprep.mubr.f32.mxu0 0.0
    %178 = vmatmul.mubr.f32.gmra.mrb[0].mxu0 %v98
    %v179 = vpop.f32.mrb[0].mxu0
    %v180 = vadd.f32 %v88, %v179
    %v181 = vpop.f32.mrb[0].mxu0
    %182 = vmatprep.mubr.f32.mxu0 0.0
    %183 = vmatmul.mubr.f32.gmra.mrb[0].mxu0 %v101
    %v184 = vpop.f32.mrb[0].mxu0
    %v185 = vadd.f32 %v88, %v184
    %v186 = vpop.f32.mrb[0].mxu0
    %187 = vdwg.mxu0
    %vm188 = vcmask 261120
    %v190 = vsel %vm188, %v77, 0
    %192 = vmatprep.subr.mxu0 0.0
    %193 = vmatpush1.msra.mxu0 %v67
    %194 = vmatprep.subr.mxu0 0.0
    %195 = vmatpush1.msra.mxu0 %v68
    %196 = vmatprep.subr.mxu0 0.0
    %197 = vmatpush1.msra.mxu0 %v69
    %198 = vmatprep.subr.mxu0 0.0
    %199 = vmatpush1.msra.mxu0 %v70
    %200 = vmatprep.subr.mxu0 0.0
    %201 = vmatpush1.msra.mxu0 0.0
    %202 = vmatprep.subr.mxu0 0.0
    %203 = vmatpush1.msra.mxu0 0.0
    %204 = vmatprep.subr.mxu0 0.0
    %205 = vmatpush1.msra.mxu0 0.0
    %206 = vmatprep.subr.mxu0 0.0
    %207 = vmatpush1.msra.mxu0 0.0
    %208 = vmatprep.subr.mxu0 0.0
    %209 = vmatpush1.msra.mxu0 0.0
    %210 = vmatprep.subr.mxu0 0.0
    %211 = vmatpush1.msra.mxu0 0.0
    %212 = vmatprep.subr.mxu0 0.0
    %213 = vmatpush1.msra.mxu0 0.0
    %214 = vmatprep.subr.mxu0 0.0
    %215 = vmatpush1.msra.mxu0 0.0
    %216 = vmatprep.subr.mxu0 0.0
    %217 = vmatpush1.msra.mxu0 0.0
    %218 = vmatprep.subr.mxu0 0.0
    %219 = vmatpush1.msra.mxu0 0.0
    %220 = vmatprep.subr.mxu0 0.0
    %221 = vmatpush1.msra.mxu0 0.0
    %222 = vmatprep.subr.mxu0 0.0
    %223 = vmatpush1.msra.mxu0 0.0
    %224 = vmatprep.subr.mxu0 0.0
    %225 = vmatpush1.msra.mxu0 0.0
    %226 = vmatprep.subr.mxu0 0.0
    %227 = vmatpush1.msra.mxu0 0.0
    %228 = vmatprep.subr.mxu0 0.0
    %229 = vmatpush1.msra.mxu0 0.0
    %230 = vmatprep.subr.mxu0 0.0
    %231 = vmatpush1.msra.mxu0 0.0
    %232 = vmatprep.subr.mxu0 0.0
    %233 = vmatpush1.msra.mxu0 0.0
    %234 = vmatprep.subr.mxu0 0.0
    %235 = vmatpush1.msra.mxu0 0.0
    %236 = vmatprep.subr.mxu0 0.0
    %237 = vmatpush1.msra.mxu0 0.0
    %238 = vmatprep.subr.mxu0 0.0
    %239 = vmatpush1.msra.mxu0 0.0
    %240 = vmatprep.subr.mxu0 0.0
    %241 = vmatpush1.msra.mxu0 0.0
    %242 = vmatprep.subr.mxu0 0.0
    %243 = vmatpush1.msra.mxu0 0.0
    %244 = vmatprep.subr.mxu0 0.0
    %245 = vmatpush1.msra.mxu0 0.0
    %246 = vmatprep.subr.mxu0 0.0
    %247 = vmatpush1.msra.mxu0 0.0
    %248 = vmatprep.subr.mxu0 0.0
    %249 = vmatpush1.msra.mxu0 0.0
    %250 = vmatprep.subr.mxu0 0.0
    %251 = vmatpush1.msra.mxu0 0.0
    %252 = vmatprep.subr.mxu0 0.0
    %253 = vmatpush1.msra.mxu0 0.0
    %254 = vmatprep.subr.mxu0 0.0
    %255 = vmatpush1.msra.mxu0 0.0
    %256 = vmatprep.mubr.f32.mxu0 0.0
    %257 = vmatmul.mubr.f32.gmra.mrb[0].mxu0 %v190
    %v258 = vpop.f32.mrb[0].mxu0
    %v259 = vadd.f32 0.0, %v258
    %v260 = vpop.f32.mrb[0].mxu0
    %261 = vdwg.mxu0
    %v262 = vadd.f32 %v170, %v259
    %v263 = vtanh.pop %v262
    %v265 = vsel %vm188, %v79, 0
    %267 = vmatprep.subr.mxu0 0.0
    %268 = vmatpush1.msra.mxu0 %v71
    %269 = vmatprep.subr.mxu0 0.0
    %270 = vmatpush1.msra.mxu0 %v72
    %271 = vmatprep.subr.mxu0 0.0
    %272 = vmatpush1.msra.mxu0 %v73
    %273 = vmatprep.subr.mxu0 0.0
    %274 = vmatpush1.msra.mxu0 %v74
    %275 = vmatprep.subr.mxu0 0.0
    %276 = vmatpush1.msra.mxu0 0.0
    %277 = vmatprep.subr.mxu0 0.0
    %278 = vmatpush1.msra.mxu0 0.0
    %279 = vmatprep.subr.mxu0 0.0
    %280 = vmatpush1.msra.mxu0 0.0
    %281 = vmatprep.subr.mxu0 0.0
    %282 = vmatpush1.msra.mxu0 0.0
    %283 = vmatprep.subr.mxu0 0.0
    %284 = vmatpush1.msra.mxu0 0.0
    %285 = vmatprep.subr.mxu0 0.0
    %286 = vmatpush1.msra.mxu0 0.0
    %287 = vmatprep.subr.mxu0 0.0
    %288 = vmatpush1.msra.mxu0 0.0
    %289 = vmatprep.subr.mxu0 0.0
    %290 = vmatpush1.msra.mxu0 0.0
    %291 = vmatprep.subr.mxu0 0.0
    %292 = vmatpush1.msra.mxu0 0.0
    %293 = vmatprep.subr.mxu0 0.0
    %294 = vmatpush1.msra.mxu0 0.0
    %295 = vmatprep.subr.mxu0 0.0
    %296 = vmatpush1.msra.mxu0 0.0
    %297 = vmatprep.subr.mxu0 0.0
    %298 = vmatpush1.msra.mxu0 0.0
    %299 = vmatprep.subr.mxu0 0.0
    %300 = vmatpush1.msra.mxu0 0.0
    %301 = vmatprep.subr.mxu0 0.0
    %302 = vmatpush1.msra.mxu0 0.0
    %303 = vmatprep.subr.mxu0 0.0
    %304 = vmatpush1.msra.mxu0 0.0
    %305 = vmatprep.subr.mxu0 0.0
    %306 = vmatpush1.msra.mxu0 0.0
    %307 = vmatprep.subr.mxu0 0.0
    %308 = vmatpush1.msra.mxu0 0.0
    %309 = vmatprep.subr.mxu0 0.0
    %310 = vmatpush1.msra.mxu0 0.0
    %311 = vmatprep.subr.mxu0 0.0
    %312 = vmatpush1.msra.mxu0 0.0
    %313 = vmatprep.subr.mxu0 0.0
    %314 = vmatpush1.msra.mxu0 0.0
    %315 = vmatprep.subr.mxu0 0.0
    %316 = vmatpush1.msra.mxu0 0.0
    %317 = vmatprep.subr.mxu0 0.0
    %318 = vmatpush1.msra.mxu0 0.0
    %319 = vmatprep.subr.mxu0 0.0
    %320 = vmatpush1.msra.mxu0 0.0
    %321 = vmatprep.subr.mxu0 0.0
    %322 = vmatpush1.msra.mxu0 0.0
    %323 = vmatprep.subr.mxu0 0.0
    %324 = vmatpush1.msra.mxu0 0.0
    %325 = vmatprep.subr.mxu0 0.0
    %326 = vmatpush1.msra.mxu0 0.0
    %327 = vmatprep.subr.mxu0 0.0
    %328 = vmatpush1.msra.mxu0 0.0
    %329 = vmatprep.subr.mxu0 0.0
    %330 = vmatpush1.msra.mxu0 0.0
    %331 = vmatprep.mubr.f32.mxu0 0.0
    %332 = vmatmul.mubr.f32.gmra.mrb[0].mxu0 %v265
    %v333 = vpop.f32.mrb[0].mxu0
    %v334 = vadd.f32 0.0, %v333
    %v335 = vpop.f32.mrb[0].mxu0
    %336 = vdwg.mxu0
    %v338 = vsel %vm188, %v263, 0
    %340 = vmatprep.subr.mxu0 0.0
    %341 = vmatpush1.msra.mxu0 %v63
    %342 = vmatprep.subr.mxu0 0.0
    %343 = vmatpush1.msra.mxu0 %v64
    %344 = vmatprep.subr.mxu0 0.0
    %345 = vmatpush1.msra.mxu0 %v65
    %346 = vmatprep.subr.mxu0 0.0
    %347 = vmatpush1.msra.mxu0 %v66
    %348 = vmatprep.subr.mxu0 0.0
    %349 = vmatpush1.msra.mxu0 0.0
    %350 = vmatprep.subr.mxu0 0.0
    %351 = vmatpush1.msra.mxu0 0.0
    %352 = vmatprep.subr.mxu0 0.0
    %353 = vmatpush1.msra.mxu0 0.0
    %354 = vmatprep.subr.mxu0 0.0
    %355 = vmatpush1.msra.mxu0 0.0
    %356 = vmatprep.subr.mxu0 0.0
    %357 = vmatpush1.msra.mxu0 0.0
    %358 = vmatprep.subr.mxu0 0.0
    %359 = vmatpush1.msra.mxu0 0.0
    %360 = vmatprep.subr.mxu0 0.0
    %361 = vmatpush1.msra.mxu0 0.0
    %362 = vmatprep.subr.mxu0 0.0
    %363 = vmatpush1.msra.mxu0 0.0
    %364 = vmatprep.subr.mxu0 0.0
    %365 = vmatpush1.msra.mxu0 0.0
    %366 = vmatprep.subr.mxu0 0.0
    %367 = vmatpush1.msra.mxu0 0.0
    %368 = vmatprep.subr.mxu0 0.0
    %369 = vmatpush1.msra.mxu0 0.0
    %370 = vmatprep.subr.mxu0 0.0
    %371 = vmatpush1.msra.mxu0 0.0
    %372 = vmatprep.subr.mxu0 0.0
    %373 = vmatpush1.msra.mxu0 0.0
    %374 = vmatprep.subr.mxu0 0.0
    %375 = vmatpush1.msra.mxu0 0.0
    %376 = vmatprep.subr.mxu0 0.0
    %377 = vmatpush1.msra.mxu0 0.0
    %378 = vmatprep.subr.mxu0 0.0
    %379 = vmatpush1.msra.mxu0 0.0
    %380 = vmatprep.subr.mxu0 0.0
    %381 = vmatpush1.msra.mxu0 0.0
    %382 = vmatprep.subr.mxu0 0.0
    %383 = vmatpush1.msra.mxu0 0.0
    %384 = vmatprep.subr.mxu0 0.0
    %385 = vmatpush1.msra.mxu0 0.0
    %386 = vmatprep.subr.mxu0 0.0
    %387 = vmatpush1.msra.mxu0 0.0
    %388 = vmatprep.subr.mxu0 0.0
    %389 = vmatpush1.msra.mxu0 0.0
    %390 = vmatprep.subr.mxu0 0.0
    %391 = vmatpush1.msra.mxu0 0.0
    %392 = vmatprep.subr.mxu0 0.0
    %393 = vmatpush1.msra.mxu0 0.0
    %394 = vmatprep.subr.mxu0 0.0
    %395 = vmatpush1.msra.mxu0 0.0
    %396 = vmatprep.subr.mxu0 0.0
    %397 = vmatpush1.msra.mxu0 0.0
    %398 = vmatprep.subr.mxu0 0.0
    %399 = vmatpush1.msra.mxu0 0.0
    %400 = vmatprep.subr.mxu0 0.0
    %401 = vmatpush1.msra.mxu0 0.0
    %402 = vmatprep.subr.mxu0 0.0
    %403 = vmatpush1.msra.mxu0 0.0
    %404 = vmatprep.mubr.f32.mxu0 0.0
    %405 = vmatmul.mubr.f32.gmra.mrb[0].mxu0 %v338
    %v406 = vpop.f32.mrb[0].mxu0
    %v407 = vadd.f32 %v334, %v406
    %v408 = vpop.f32.mrb[0].mxu0
    %409 = vdwg.mxu0
    %v411 = vlaneseq
    %v412 = vshrl.u32 %v411, 7
    %v413 = vsub.s32 0, %v412
    %v414 = vrot.slane %v76, %v413
    %v416 = vadd.f32 %v407, %v414
    %v417 = vtanh.pop %v416
    %vm418 = vcmask 254976
    %419 = vst.msk [vmem:[#allocation7] sm:$0x3] %vm418, %v417
    %420 = vmatprep.subr.mxu0 0.0
    %421 = vmatpush1.msra.mxu0 %v67
    %422 = vmatprep.subr.mxu0 0.0
    %423 = vmatpush1.msra.mxu0 %v68
    %424 = vmatprep.subr.mxu0 0.0
    %425 = vmatpush1.msra.mxu0 %v69
    %426 = vmatprep.subr.mxu0 0.0
    %427 = vmatpush1.msra.mxu0 %v70
    %428 = vmatprep.subr.mxu0 0.0
    %429 = vmatpush1.msra.mxu0 0.0
    %430 = vmatprep.subr.mxu0 0.0
    %431 = vmatpush1.msra.mxu0 0.0
    %432 = vmatprep.subr.mxu0 0.0
    %433 = vmatpush1.msra.mxu0 0.0
    %434 = vmatprep.subr.mxu0 0.0
    %435 = vmatpush1.msra.mxu0 0.0
    %436 = vmatprep.subr.mxu0 0.0
    %437 = vmatpush1.msra.mxu0 0.0
    %438 = vmatprep.subr.mxu0 0.0
    %439 = vmatpush1.msra.mxu0 0.0
    %440 = vmatprep.subr.mxu0 0.0
    %441 = vmatpush1.msra.mxu0 0.0
    %442 = vmatprep.subr.mxu0 0.0
    %443 = vmatpush1.msra.mxu0 0.0
    %444 = vmatprep.subr.mxu0 0.0
    %445 = vmatpush1.msra.mxu0 0.0
    %446 = vmatprep.subr.mxu0 0.0
    %447 = vmatpush1.msra.mxu0 0.0
    %448 = vmatprep.subr.mxu0 0.0
    %449 = vmatpush1.msra.mxu0 0.0
    %450 = vmatprep.subr.mxu0 0.0
    %451 = vmatpush1.msra.mxu0 0.0
    %452 = vmatprep.subr.mxu0 0.0
    %453 = vmatpush1.msra.mxu0 0.0
    %454 = vmatprep.subr.mxu0 0.0
    %455 = vmatpush1.msra.mxu0 0.0
    %456 = vmatprep.subr.mxu0 0.0
    %457 = vmatpush1.msra.mxu0 0.0
    %458 = vmatprep.subr.mxu0 0.0
    %459 = vmatpush1.msra.mxu0 0.0
    %460 = vmatprep.subr.mxu0 0.0
    %461 = vmatpush1.msra.mxu0 0.0
    %462 = vmatprep.subr.mxu0 0.0
    %463 = vmatpush1.msra.mxu0 0.0
    %464 = vmatprep.subr.mxu0 0.0
    %465 = vmatpush1.msra.mxu0 0.0
    %466 = vmatprep.subr.mxu0 0.0
    %467 = vmatpush1.msra.mxu0 0.0
    %468 = vmatprep.subr.mxu0 0.0
    %469 = vmatpush1.msra.mxu0 0.0
    %470 = vmatprep.subr.mxu0 0.0
    %471 = vmatpush1.msra.mxu0 0.0
    %472 = vmatprep.subr.mxu0 0.0
    %473 = vmatpush1.msra.mxu0 0.0
    %474 = vmatprep.subr.mxu0 0.0
    %475 = vmatpush1.msra.mxu0 0.0
    %476 = vmatprep.subr.mxu0 0.0
    %477 = vmatpush1.msra.mxu0 0.0
    %478 = vmatprep.subr.mxu0 0.0
    %479 = vmatpush1.msra.mxu0 0.0
    %480 = vmatprep.subr.mxu0 0.0
    %481 = vmatpush1.msra.mxu0 0.0
    %482 = vmatprep.subr.mxu0 0.0
    %483 = vmatpush1.msra.mxu0 0.0
    %484 = vmatprep.mubr.f32.mxu0 0.0
    %485 = vmatmul.mubr.f32.gmra.mrb[0].mxu0 %v338
    %v486 = vpop.f32.mrb[0].mxu0
    %v487 = vadd.f32 0.0, %v486
    %v488 = vpop.f32.mrb[0].mxu0
    %489 = vdwg.mxu0
    %v491 = vrot.slane %v487, 6
    %v493 = vadd.f32 %v170, %v491
    %v494 = vtanh.pop %v493
    %v496 = vsel %vm188, %v417, 0
    %498 = vmatprep.subr.mxu0 0.0
    %499 = vmatpush1.msra.mxu0 %v71
    %500 = vmatprep.subr.mxu0 0.0
    %501 = vmatpush1.msra.mxu0 %v72
    %502 = vmatprep.subr.mxu0 0.0
    %503 = vmatpush1.msra.mxu0 %v73
    %504 = vmatprep.subr.mxu0 0.0
    %505 = vmatpush1.msra.mxu0 %v74
    %506 = vmatprep.subr.mxu0 0.0
    %507 = vmatpush1.msra.mxu0 0.0
    %508 = vmatprep.subr.mxu0 0.0
    %509 = vmatpush1.msra.mxu0 0.0
    %510 = vmatprep.subr.mxu0 0.0
    %511 = vmatpush1.msra.mxu0 0.0
    %512 = vmatprep.subr.mxu0 0.0
    %513 = vmatpush1.msra.mxu0 0.0
    %514 = vmatprep.subr.mxu0 0.0
    %515 = vmatpush1.msra.mxu0 0.0
    %516 = vmatprep.subr.mxu0 0.0
    %517 = vmatpush1.msra.mxu0 0.0
    %518 = vmatprep.subr.mxu0 0.0
    %519 = vmatpush1.msra.mxu0 0.0
    %520 = vmatprep.subr.mxu0 0.0
    %521 = vmatpush1.msra.mxu0 0.0
    %522 = vmatprep.subr.mxu0 0.0
    %523 = vmatpush1.msra.mxu0 0.0
    %524 = vmatprep.subr.mxu0 0.0
    %525 = vmatpush1.msra.mxu0 0.0
    %526 = vmatprep.subr.mxu0 0.0
    %527 = vmatpush1.msra.mxu0 0.0
    %528 = vmatprep.subr.mxu0 0.0
    %529 = vmatpush1.msra.mxu0 0.0
    %530 = vmatprep.subr.mxu0 0.0
    %531 = vmatpush1.msra.mxu0 0.0
    %532 = vmatprep.subr.mxu0 0.0
    %533 = vmatpush1.msra.mxu0 0.0
    %534 = vmatprep.subr.mxu0 0.0
    %535 = vmatpush1.msra.mxu0 0.0
    %536 = vmatprep.subr.mxu0 0.0
    %537 = vmatpush1.msra.mxu0 0.0
    %538 = vmatprep.subr.mxu0 0.0
    %539 = vmatpush1.msra.mxu0 0.0
    %540 = vmatprep.subr.mxu0 0.0
    %541 = vmatpush1.msra.mxu0 0.0
    %542 = vmatprep.subr.mxu0 0.0
    %543 = vmatpush1.msra.mxu0 0.0
    %544 = vmatprep.subr.mxu0 0.0
    %545 = vmatpush1.msra.mxu0 0.0
    %546 = vmatprep.subr.mxu0 0.0
    %547 = vmatpush1.msra.mxu0 0.0
    %548 = vmatprep.subr.mxu0 0.0
    %549 = vmatpush1.msra.mxu0 0.0
    %550 = vmatprep.subr.mxu0 0.0
    %551 = vmatpush1.msra.mxu0 0.0
    %552 = vmatprep.subr.mxu0 0.0
    %553 = vmatpush1.msra.mxu0 0.0
    %554 = vmatprep.subr.mxu0 0.0
    %555 = vmatpush1.msra.mxu0 0.0
    %556 = vmatprep.subr.mxu0 0.0
    %557 = vmatpush1.msra.mxu0 0.0
    %558 = vmatprep.subr.mxu0 0.0
    %559 = vmatpush1.msra.mxu0 0.0
    %560 = vmatprep.subr.mxu0 0.0
    %561 = vmatpush1.msra.mxu0 0.0
    %562 = vmatprep.mubr.f32.mxu0 0.0
    %563 = vmatmul.mubr.f32.gmra.mrb[0].mxu0 %v496
    %v564 = vpop.f32.mrb[0].mxu0
    %v565 = vadd.f32 0.0, %v564
    %v566 = vpop.f32.mrb[0].mxu0
    %567 = vdwg.mxu0
    %v569 = vrot.slane %v494, 2
    %v570 = vsel %vm188, %v569, 0
    %572 = vmatprep.subr.mxu0 0.0
    %573 = vmatpush1.msra.mxu0 %v63
    %574 = vmatprep.subr.mxu0 0.0
    %575 = vmatpush1.msra.mxu0 %v64
    %576 = vmatprep.subr.mxu0 0.0
    %577 = vmatpush1.msra.mxu0 %v65
    %578 = vmatprep.subr.mxu0 0.0
    %579 = vmatpush1.msra.mxu0 %v66
    %580 = vmatprep.subr.mxu0 0.0
    %581 = vmatpush1.msra.mxu0 0.0
    %582 = vmatprep.subr.mxu0 0.0
    %583 = vmatpush1.msra.mxu0 0.0
    %584 = vmatprep.subr.mxu0 0.0
    %585 = vmatpush1.msra.mxu0 0.0
    %586 = vmatprep.subr.mxu0 0.0
    %587 = vmatpush1.msra.mxu0 0.0
    %588 = vmatprep.subr.mxu0 0.0
    %589 = vmatpush1.msra.mxu0 0.0
    %590 = vmatprep.subr.mxu0 0.0
    %591 = vmatpush1.msra.mxu0 0.0
    %592 = vmatprep.subr.mxu0 0.0
    %593 = vmatpush1.msra.mxu0 0.0
    %594 = vmatprep.subr.mxu0 0.0
    %595 = vmatpush1.msra.mxu0 0.0
    %596 = vmatprep.subr.mxu0 0.0
    %597 = vmatpush1.msra.mxu0 0.0
    %598 = vmatprep.subr.mxu0 0.0
    %599 = vmatpush1.msra.mxu0 0.0
    %600 = vmatprep.subr.mxu0 0.0
    %601 = vmatpush1.msra.mxu0 0.0
    %602 = vmatprep.subr.mxu0 0.0
    %603 = vmatpush1.msra.mxu0 0.0
    %604 = vmatprep.subr.mxu0 0.0
    %605 = vmatpush1.msra.mxu0 0.0
    %606 = vmatprep.subr.mxu0 0.0
    %607 = vmatpush1.msra.mxu0 0.0
    %608 = vmatprep.subr.mxu0 0.0
    %609 = vmatpush1.msra.mxu0 0.0
    %610 = vmatprep.subr.mxu0 0.0
    %611 = vmatpush1.msra.mxu0 0.0
    %612 = vmatprep.subr.mxu0 0.0
    %613 = vmatpush1.msra.mxu0 0.0
    %614 = vmatprep.subr.mxu0 0.0
    %615 = vmatpush1.msra.mxu0 0.0
    %616 = vmatprep.subr.mxu0 0.0
    %617 = vmatpush1.msra.mxu0 0.0
    %618 = vmatprep.subr.mxu0 0.0
    %619 = vmatpush1.msra.mxu0 0.0
    %620 = vmatprep.subr.mxu0 0.0
    %621 = vmatpush1.msra.mxu0 0.0
    %622 = vmatprep.subr.mxu0 0.0
    %623 = vmatpush1.msra.mxu0 0.0
    %624 = vmatprep.subr.mxu0 0.0
    %625 = vmatpush1.msra.mxu0 0.0
    %626 = vmatprep.subr.mxu0 0.0
    %627 = vmatpush1.msra.mxu0 0.0
    %628 = vmatprep.subr.mxu0 0.0
    %629 = vmatpush1.msra.mxu0 0.0
    %630 = vmatprep.subr.mxu0 0.0
    %631 = vmatpush1.msra.mxu0 0.0
    %632 = vmatprep.subr.mxu0 0.0
    %633 = vmatpush1.msra.mxu0 0.0
    %634 = vmatprep.subr.mxu0 0.0
    %635 = vmatpush1.msra.mxu0 0.0
    %636 = vmatprep.mubr.f32.mxu0 0.0
    %637 = vmatmul.mubr.f32.gmra.mrb[0].mxu0 %v570
    %v638 = vpop.f32.mrb[0].mxu0
    %v639 = vadd.f32 %v565, %v638
    %v640 = vpop.f32.mrb[0].mxu0
    %641 = vdwg.mxu0
    %v642 = vadd.f32 %v639, %v414
    %v643 = vtanh.pop %v642
    %s644 = scalar_lea.vmem [#allocation7], 2
    %645 = vst.msk [vmem:[%s644] sm:$0x3] %vm418, %v643
    %646 = vmatprep.subr.mxu0 0.0
    %647 = vmatpush1.msra.mxu0 %v67
    %648 = vmatprep.subr.mxu0 0.0
    %649 = vmatpush1.msra.mxu0 %v68
    %650 = vmatprep.subr.mxu0 0.0
    %651 = vmatpush1.msra.mxu0 %v69
    %652 = vmatprep.subr.mxu0 0.0
    %653 = vmatpush1.msra.mxu0 %v70
    %654 = vmatprep.subr.mxu0 0.0
    %655 = vmatpush1.msra.mxu0 0.0
    %656 = vmatprep.subr.mxu0 0.0
    %657 = vmatpush1.msra.mxu0 0.0
    %658 = vmatprep.subr.mxu0 0.0
    %659 = vmatpush1.msra.mxu0 0.0
    %660 = vmatprep.subr.mxu0 0.0
    %661 = vmatpush1.msra.mxu0 0.0
    %662 = vmatprep.subr.mxu0 0.0
    %663 = vmatpush1.msra.mxu0 0.0
    %664 = vmatprep.subr.mxu0 0.0
    %665 = vmatpush1.msra.mxu0 0.0
    %666 = vmatprep.subr.mxu0 0.0
    %667 = vmatpush1.msra.mxu0 0.0
    %668 = vmatprep.subr.mxu0 0.0
    %669 = vmatpush1.msra.mxu0 0.0
    %670 = vmatprep.subr.mxu0 0.0
    %671 = vmatpush1.msra.mxu0 0.0
    %672 = vmatprep.subr.mxu0 0.0
    %673 = vmatpush1.msra.mxu0 0.0
    %674 = vmatprep.subr.mxu0 0.0
    %675 = vmatpush1.msra.mxu0 0.0
    %676 = vmatprep.subr.mxu0 0.0
    %677 = vmatpush1.msra.mxu0 0.0
    %678 = vmatprep.subr.mxu0 0.0
    %679 = vmatpush1.msra.mxu0 0.0
    %680 = vmatprep.subr.mxu0 0.0
    %681 = vmatpush1.msra.mxu0 0.0
    %682 = vmatprep.subr.mxu0 0.0
    %683 = vmatpush1.msra.mxu0 0.0
    %684 = vmatprep.subr.mxu0 0.0
    %685 = vmatpush1.msra.mxu0 0.0
    %686 = vmatprep.subr.mxu0 0.0
    %687 = vmatpush1.msra.mxu0 0.0
    %688 = vmatprep.subr.mxu0 0.0
    %689 = vmatpush1.msra.mxu0 0.0
    %690 = vmatprep.subr.mxu0 0.0
    %691 = vmatpush1.msra.mxu0 0.0
    %692 = vmatprep.subr.mxu0 0.0
    %693 = vmatpush1.msra.mxu0 0.0
    %694 = vmatprep.subr.mxu0 0.0
    %695 = vmatpush1.msra.mxu0 0.0
    %696 = vmatprep.subr.mxu0 0.0
    %697 = vmatpush1.msra.mxu0 0.0
    %698 = vmatprep.subr.mxu0 0.0
    %699 = vmatpush1.msra.mxu0 0.0
    %700 = vmatprep.subr.mxu0 0.0
    %701 = vmatpush1.msra.mxu0 0.0
    %702 = vmatprep.subr.mxu0 0.0
    %703 = vmatpush1.msra.mxu0 0.0
    %704 = vmatprep.subr.mxu0 0.0
    %705 = vmatpush1.msra.mxu0 0.0
    %706 = vmatprep.subr.mxu0 0.0
    %707 = vmatpush1.msra.mxu0 0.0
    %708 = vmatprep.subr.mxu0 0.0
    %709 = vmatpush1.msra.mxu0 0.0
    %710 = vmatprep.mubr.f32.mxu0 0.0
    %711 = vmatmul.mubr.f32.gmra.mrb[0].mxu0 %v570
    %v712 = vpop.f32.mrb[0].mxu0
    %v713 = vadd.f32 0.0, %v712
    %v714 = vpop.f32.mrb[0].mxu0
    %715 = vdwg.mxu0
    %v717 = vrot.slane %v713, 4
    %v719 = vadd.f32 %v170, %v717
    %v720 = vtanh.pop %v719
    %v722 = vsel %vm188, %v643, 0
    %724 = vmatprep.subr.mxu0 0.0
    %725 = vmatpush1.msra.mxu0 %v71
    %726 = vmatprep.subr.mxu0 0.0
    %727 = vmatpush1.msra.mxu0 %v72
    %728 = vmatprep.subr.mxu0 0.0
    %729 = vmatpush1.msra.mxu0 %v73
    %730 = vmatprep.subr.mxu0 0.0
    %731 = vmatpush1.msra.mxu0 %v74
    %732 = vmatprep.subr.mxu0 0.0
    %733 = vmatpush1.msra.mxu0 0.0
    %734 = vmatprep.subr.mxu0 0.0
    %735 = vmatpush1.msra.mxu0 0.0
    %736 = vmatprep.subr.mxu0 0.0
    %737 = vmatpush1.msra.mxu0 0.0
    %738 = vmatprep.subr.mxu0 0.0
    %739 = vmatpush1.msra.mxu0 0.0
    %740 = vmatprep.subr.mxu0 0.0
    %741 = vmatpush1.msra.mxu0 0.0
    %742 = vmatprep.subr.mxu0 0.0
    %743 = vmatpush1.msra.mxu0 0.0
    %744 = vmatprep.subr.mxu0 0.0
    %745 = vmatpush1.msra.mxu0 0.0
    %746 = vmatprep.subr.mxu0 0.0
    %747 = vmatpush1.msra.mxu0 0.0
    %748 = vmatprep.subr.mxu0 0.0
    %749 = vmatpush1.msra.mxu0 0.0
    %750 = vmatprep.subr.mxu0 0.0
    %751 = vmatpush1.msra.mxu0 0.0
    %752 = vmatprep.subr.mxu0 0.0
    %753 = vmatpush1.msra.mxu0 0.0
    %754 = vmatprep.subr.mxu0 0.0
    %755 = vmatpush1.msra.mxu0 0.0
    %756 = vmatprep.subr.mxu0 0.0
    %757 = vmatpush1.msra.mxu0 0.0
    %758 = vmatprep.subr.mxu0 0.0
    %759 = vmatpush1.msra.mxu0 0.0
    %760 = vmatprep.subr.mxu0 0.0
    %761 = vmatpush1.msra.mxu0 0.0
    %762 = vmatprep.subr.mxu0 0.0
    %763 = vmatpush1.msra.mxu0 0.0
    %764 = vmatprep.subr.mxu0 0.0
    %765 = vmatpush1.msra.mxu0 0.0
    %766 = vmatprep.subr.mxu0 0.0
    %767 = vmatpush1.msra.mxu0 0.0
    %768 = vmatprep.subr.mxu0 0.0
    %769 = vmatpush1.msra.mxu0 0.0
    %770 = vmatprep.subr.mxu0 0.0
    %771 = vmatpush1.msra.mxu0 0.0
    %772 = vmatprep.subr.mxu0 0.0
    %773 = vmatpush1.msra.mxu0 0.0
    %774 = vmatprep.subr.mxu0 0.0
    %775 = vmatpush1.msra.mxu0 0.0
    %776 = vmatprep.subr.mxu0 0.0
    %777 = vmatpush1.msra.mxu0 0.0
    %778 = vmatprep.subr.mxu0 0.0
    %779 = vmatpush1.msra.mxu0 0.0
    %780 = vmatprep.subr.mxu0 0.0
    %781 = vmatpush1.msra.mxu0 0.0
    %782 = vmatprep.subr.mxu0 0.0
    %783 = vmatpush1.msra.mxu0 0.0
    %784 = vmatprep.subr.mxu0 0.0
    %785 = vmatpush1.msra.mxu0 0.0
    %786 = vmatprep.subr.mxu0 0.0
    %787 = vmatpush1.msra.mxu0 0.0
    %788 = vmatprep.mubr.f32.mxu0 0.0
    %789 = vmatmul.mubr.f32.gmra.mrb[0].mxu0 %v722
    %v790 = vpop.f32.mrb[0].mxu0
    %v791 = vadd.f32 0.0, %v790
    %v792 = vpop.f32.mrb[0].mxu0
    %793 = vdwg.mxu0
    %v795 = vrot.slane %v720, 4
    %v796 = vsel %vm188, %v795, 0
    %798 = vmatprep.subr.mxu0 0.0
    %799 = vmatpush1.msra.mxu0 %v63
    %800 = vmatprep.subr.mxu0 0.0
    %801 = vmatpush1.msra.mxu0 %v64
    %802 = vmatprep.subr.mxu0 0.0
    %803 = vmatpush1.msra.mxu0 %v65
    %804 = vmatprep.subr.mxu0 0.0
    %805 = vmatpush1.msra.mxu0 %v66
    %806 = vmatprep.subr.mxu0 0.0
    %807 = vmatpush1.msra.mxu0 0.0
    %808 = vmatprep.subr.mxu0 0.0
    %809 = vmatpush1.msra.mxu0 0.0
    %810 = vmatprep.subr.mxu0 0.0
    %811 = vmatpush1.msra.mxu0 0.0
    %812 = vmatprep.subr.mxu0 0.0
    %813 = vmatpush1.msra.mxu0 0.0
    %814 = vmatprep.subr.mxu0 0.0
    %815 = vmatpush1.msra.mxu0 0.0
    %816 = vmatprep.subr.mxu0 0.0
    %817 = vmatpush1.msra.mxu0 0.0
    %818 = vmatprep.subr.mxu0 0.0
    %819 = vmatpush1.msra.mxu0 0.0
    %820 = vmatprep.subr.mxu0 0.0
    %821 = vmatpush1.msra.mxu0 0.0
    %822 = vmatprep.subr.mxu0 0.0
    %823 = vmatpush1.msra.mxu0 0.0
    %824 = vmatprep.subr.mxu0 0.0
    %825 = vmatpush1.msra.mxu0 0.0
    %826 = vmatprep.subr.mxu0 0.0
    %827 = vmatpush1.msra.mxu0 0.0
    %828 = vmatprep.subr.mxu0 0.0
    %829 = vmatpush1.msra.mxu0 0.0
    %830 = vmatprep.subr.mxu0 0.0
    %831 = vmatpush1.msra.mxu0 0.0
    %832 = vmatprep.subr.mxu0 0.0
    %833 = vmatpush1.msra.mxu0 0.0
    %834 = vmatprep.subr.mxu0 0.0
    %835 = vmatpush1.msra.mxu0 0.0
    %836 = vmatprep.subr.mxu0 0.0
    %837 = vmatpush1.msra.mxu0 0.0
    %838 = vmatprep.subr.mxu0 0.0
    %839 = vmatpush1.msra.mxu0 0.0
    %840 = vmatprep.subr.mxu0 0.0
    %841 = vmatpush1.msra.mxu0 0.0
    %842 = vmatprep.subr.mxu0 0.0
    %843 = vmatpush1.msra.mxu0 0.0
    %844 = vmatprep.subr.mxu0 0.0
    %845 = vmatpush1.msra.mxu0 0.0
    %846 = vmatprep.subr.mxu0 0.0
    %847 = vmatpush1.msra.mxu0 0.0
    %848 = vmatprep.subr.mxu0 0.0
    %849 = vmatpush1.msra.mxu0 0.0
    %850 = vmatprep.subr.mxu0 0.0
    %851 = vmatpush1.msra.mxu0 0.0
    %852 = vmatprep.subr.mxu0 0.0
    %853 = vmatpush1.msra.mxu0 0.0
    %854 = vmatprep.subr.mxu0 0.0
    %855 = vmatpush1.msra.mxu0 0.0
    %856 = vmatprep.subr.mxu0 0.0
    %857 = vmatpush1.msra.mxu0 0.0
    %858 = vmatprep.subr.mxu0 0.0
    %859 = vmatpush1.msra.mxu0 0.0
    %860 = vmatprep.subr.mxu0 0.0
    %861 = vmatpush1.msra.mxu0 0.0
    %862 = vmatprep.mubr.f32.mxu0 0.0
    %863 = vmatmul.mubr.f32.gmra.mrb[0].mxu0 %v796
    %v864 = vpop.f32.mrb[0].mxu0
    %v865 = vadd.f32 %v791, %v864
    %v866 = vpop.f32.mrb[0].mxu0
    %867 = vdwg.mxu0
    %v868 = vadd.f32 %v865, %v414
    %v869 = vtanh.pop %v868
    %s870 = scalar_lea.vmem [#allocation7], 4
    %871 = vst.msk [vmem:[%s870] sm:$0x3] %vm418, %v869
    %872 = vmatprep.subr.mxu0 0.0
    %873 = vmatpush1.msra.mxu0 %v67
    %874 = vmatprep.subr.mxu0 0.0
    %875 = vmatpush1.msra.mxu0 %v68
    %876 = vmatprep.subr.mxu0 0.0
    %877 = vmatpush1.msra.mxu0 %v69
    %878 = vmatprep.subr.mxu0 0.0
    %879 = vmatpush1.msra.mxu0 %v70
    %880 = vmatprep.subr.mxu0 0.0
    %881 = vmatpush1.msra.mxu0 0.0
    %882 = vmatprep.subr.mxu0 0.0
    %883 = vmatpush1.msra.mxu0 0.0
    %884 = vmatprep.subr.mxu0 0.0
    %885 = vmatpush1.msra.mxu0 0.0
    %886 = vmatprep.subr.mxu0 0.0
    %887 = vmatpush1.msra.mxu0 0.0
    %888 = vmatprep.subr.mxu0 0.0
    %889 = vmatpush1.msra.mxu0 0.0
    %890 = vmatprep.subr.mxu0 0.0
    %891 = vmatpush1.msra.mxu0 0.0
    %892 = vmatprep.subr.mxu0 0.0
    %893 = vmatpush1.msra.mxu0 0.0
    %894 = vmatprep.subr.mxu0 0.0
    %895 = vmatpush1.msra.mxu0 0.0
    %896 = vmatprep.subr.mxu0 0.0
    %897 = vmatpush1.msra.mxu0 0.0
    %898 = vmatprep.subr.mxu0 0.0
    %899 = vmatpush1.msra.mxu0 0.0
    %900 = vmatprep.subr.mxu0 0.0
    %901 = vmatpush1.msra.mxu0 0.0
    %902 = vmatprep.subr.mxu0 0.0
    %903 = vmatpush1.msra.mxu0 0.0
    %904 = vmatprep.subr.mxu0 0.0
    %905 = vmatpush1.msra.mxu0 0.0
    %906 = vmatprep.subr.mxu0 0.0
    %907 = vmatpush1.msra.mxu0 0.0
    %908 = vmatprep.subr.mxu0 0.0
    %909 = vmatpush1.msra.mxu0 0.0
    %910 = vmatprep.subr.mxu0 0.0
    %911 = vmatpush1.msra.mxu0 0.0
    %912 = vmatprep.subr.mxu0 0.0
    %913 = vmatpush1.msra.mxu0 0.0
    %914 = vmatprep.subr.mxu0 0.0
    %915 = vmatpush1.msra.mxu0 0.0
    %916 = vmatprep.subr.mxu0 0.0
    %917 = vmatpush1.msra.mxu0 0.0
    %918 = vmatprep.subr.mxu0 0.0
    %919 = vmatpush1.msra.mxu0 0.0
    %920 = vmatprep.subr.mxu0 0.0
    %921 = vmatpush1.msra.mxu0 0.0
    %922 = vmatprep.subr.mxu0 0.0
    %923 = vmatpush1.msra.mxu0 0.0
    %924 = vmatprep.subr.mxu0 0.0
    %925 = vmatpush1.msra.mxu0 0.0
    %926 = vmatprep.subr.mxu0 0.0
    %927 = vmatpush1.msra.mxu0 0.0
    %928 = vmatprep.subr.mxu0 0.0
    %929 = vmatpush1.msra.mxu0 0.0
    %930 = vmatprep.subr.mxu0 0.0
    %931 = vmatpush1.msra.mxu0 0.0
    %932 = vmatprep.subr.mxu0 0.0
    %933 = vmatpush1.msra.mxu0 0.0
    %934 = vmatprep.subr.mxu0 0.0
    %935 = vmatpush1.msra.mxu0 0.0
    %936 = vmatprep.mubr.f32.mxu0 0.0
    %937 = vmatmul.mubr.f32.gmra.mrb[0].mxu0 %v796
    %v938 = vpop.f32.mrb[0].mxu0
    %v939 = vadd.f32 0.0, %v938
    %v940 = vpop.f32.mrb[0].mxu0
    %941 = vdwg.mxu0
    %v943 = vrot.slane %v939, 2
    %v945 = vadd.f32 %v170, %v943
    %v946 = vtanh.pop %v945
    %v948 = vsel %vm188, %v869, 0
    %950 = vmatprep.subr.mxu0 0.0
    %951 = vmatpush1.msra.mxu0 %v71
    %952 = vmatprep.subr.mxu0 0.0
    %953 = vmatpush1.msra.mxu0 %v72
    %954 = vmatprep.subr.mxu0 0.0
    %955 = vmatpush1.msra.mxu0 %v73
    %956 = vmatprep.subr.mxu0 0.0
    %957 = vmatpush1.msra.mxu0 %v74
    %958 = vmatprep.subr.mxu0 0.0
    %959 = vmatpush1.msra.mxu0 0.0
    %960 = vmatprep.subr.mxu0 0.0
    %961 = vmatpush1.msra.mxu0 0.0
    %962 = vmatprep.subr.mxu0 0.0
    %963 = vmatpush1.msra.mxu0 0.0
    %964 = vmatprep.subr.mxu0 0.0
    %965 = vmatpush1.msra.mxu0 0.0
    %966 = vmatprep.subr.mxu0 0.0
    %967 = vmatpush1.msra.mxu0 0.0
    %968 = vmatprep.subr.mxu0 0.0
    %969 = vmatpush1.msra.mxu0 0.0
    %970 = vmatprep.subr.mxu0 0.0
    %971 = vmatpush1.msra.mxu0 0.0
    %972 = vmatprep.subr.mxu0 0.0
    %973 = vmatpush1.msra.mxu0 0.0
    %974 = vmatprep.subr.mxu0 0.0
    %975 = vmatpush1.msra.mxu0 0.0
    %976 = vmatprep.subr.mxu0 0.0
    %977 = vmatpush1.msra.mxu0 0.0
    %978 = vmatprep.subr.mxu0 0.0
    %979 = vmatpush1.msra.mxu0 0.0
    %980 = vmatprep.subr.mxu0 0.0
    %981 = vmatpush1.msra.mxu0 0.0
    %982 = vmatprep.subr.mxu0 0.0
    %983 = vmatpush1.msra.mxu0 0.0
    %984 = vmatprep.subr.mxu0 0.0
    %985 = vmatpush1.msra.mxu0 0.0
    %986 = vmatprep.subr.mxu0 0.0
    %987 = vmatpush1.msra.mxu0 0.0
    %988 = vmatprep.subr.mxu0 0.0
    %989 = vmatpush1.msra.mxu0 0.0
    %990 = vmatprep.subr.mxu0 0.0
    %991 = vmatpush1.msra.mxu0 0.0
    %992 = vmatprep.subr.mxu0 0.0
    %993 = vmatpush1.msra.mxu0 0.0
    %994 = vmatprep.subr.mxu0 0.0
    %995 = vmatpush1.msra.mxu0 0.0
    %996 = vmatprep.subr.mxu0 0.0
    %997 = vmatpush1.msra.mxu0 0.0
    %998 = vmatprep.subr.mxu0 0.0
    %999 = vmatpush1.msra.mxu0 0.0
    %1000 = vmatprep.subr.mxu0 0.0
    %1001 = vmatpush1.msra.mxu0 0.0
    %1002 = vmatprep.subr.mxu0 0.0
    %1003 = vmatpush1.msra.mxu0 0.0
    %1004 = vmatprep.subr.mxu0 0.0
    %1005 = vmatpush1.msra.mxu0 0.0
    %1006 = vmatprep.subr.mxu0 0.0
    %1007 = vmatpush1.msra.mxu0 0.0
    %1008 = vmatprep.subr.mxu0 0.0
    %1009 = vmatpush1.msra.mxu0 0.0
    %1010 = vmatprep.subr.mxu0 0.0
    %1011 = vmatpush1.msra.mxu0 0.0
    %1012 = vmatprep.subr.mxu0 0.0
    %1013 = vmatpush1.msra.mxu0 0.0
    %1014 = vmatprep.mubr.f32.mxu0 0.0
    %1015 = vmatmul.mubr.f32.gmra.mrb[0].mxu0 %v948
    %v1016 = vpop.f32.mrb[0].mxu0
    %v1017 = vadd.f32 0.0, %v1016
    %v1018 = vpop.f32.mrb[0].mxu0
    %1019 = vdwg.mxu0
    %v1021 = vrot.slane %v946, 6
    %v1022 = vsel %vm188, %v1021, 0
    %1024 = vmatprep.subr.mxu0 0.0
    %1025 = vmatpush1.msra.mxu0 %v63
    %1026 = vmatprep.subr.mxu0 0.0
    %1027 = vmatpush1.msra.mxu0 %v64
    %1028 = vmatprep.subr.mxu0 0.0
    %1029 = vmatpush1.msra.mxu0 %v65
    %1030 = vmatprep.subr.mxu0 0.0
    %1031 = vmatpush1.msra.mxu0 %v66
    %1032 = vmatprep.subr.mxu0 0.0
    %1033 = vmatpush1.msra.mxu0 0.0
    %1034 = vmatprep.subr.mxu0 0.0
    %1035 = vmatpush1.msra.mxu0 0.0
    %1036 = vmatprep.subr.mxu0 0.0
    %1037 = vmatpush1.msra.mxu0 0.0
    %1038 = vmatprep.subr.mxu0 0.0
    %1039 = vmatpush1.msra.mxu0 0.0
    %1040 = vmatprep.subr.mxu0 0.0
    %1041 = vmatpush1.msra.mxu0 0.0
    %1042 = vmatprep.subr.mxu0 0.0
    %1043 = vmatpush1.msra.mxu0 0.0
    %1044 = vmatprep.subr.mxu0 0.0
    %1045 = vmatpush1.msra.mxu0 0.0
    %1046 = vmatprep.subr.mxu0 0.0
    %1047 = vmatpush1.msra.mxu0 0.0
    %1048 = vmatprep.subr.mxu0 0.0
    %1049 = vmatpush1.msra.mxu0 0.0
    %1050 = vmatprep.subr.mxu0 0.0
    %1051 = vmatpush1.msra.mxu0 0.0
    %1052 = vmatprep.subr.mxu0 0.0
    %1053 = vmatpush1.msra.mxu0 0.0
    %1054 = vmatprep.subr.mxu0 0.0
    %1055 = vmatpush1.msra.mxu0 0.0
    %1056 = vmatprep.subr.mxu0 0.0
    %1057 = vmatpush1.msra.mxu0 0.0
    %1058 = vmatprep.subr.mxu0 0.0
    %1059 = vmatpush1.msra.mxu0 0.0
    %1060 = vmatprep.subr.mxu0 0.0
    %1061 = vmatpush1.msra.mxu0 0.0
    %1062 = vmatprep.subr.mxu0 0.0
    %1063 = vmatpush1.msra.mxu0 0.0
    %1064 = vmatprep.subr.mxu0 0.0
    %1065 = vmatpush1.msra.mxu0 0.0
    %1066 = vmatprep.subr.mxu0 0.0
    %1067 = vmatpush1.msra.mxu0 0.0
    %1068 = vmatprep.subr.mxu0 0.0
    %1069 = vmatpush1.msra.mxu0 0.0
    %1070 = vmatprep.subr.mxu0 0.0
    %1071 = vmatpush1.msra.mxu0 0.0
    %1072 = vmatprep.subr.mxu0 0.0
    %1073 = vmatpush1.msra.mxu0 0.0
    %1074 = vmatprep.subr.mxu0 0.0
    %1075 = vmatpush1.msra.mxu0 0.0
    %1076 = vmatprep.subr.mxu0 0.0
    %1077 = vmatpush1.msra.mxu0 0.0
    %1078 = vmatprep.subr.mxu0 0.0
    %1079 = vmatpush1.msra.mxu0 0.0
    %1080 = vmatprep.subr.mxu0 0.0
    %1081 = vmatpush1.msra.mxu0 0.0
    %1082 = vmatprep.subr.mxu0 0.0
    %1083 = vmatpush1.msra.mxu0 0.0
    %1084 = vmatprep.subr.mxu0 0.0
    %1085 = vmatpush1.msra.mxu0 0.0
    %1086 = vmatprep.subr.mxu0 0.0
    %1087 = vmatpush1.msra.mxu0 0.0
    %1088 = vmatprep.mubr.f32.mxu0 0.0
    %1089 = vmatmul.mubr.f32.gmra.mrb[0].mxu0 %v1022
    %v1090 = vpop.f32.mrb[0].mxu0
    %v1091 = vadd.f32 %v1017, %v1090
    %v1092 = vpop.f32.mrb[0].mxu0
    %1093 = vdwg.mxu0
    %v1094 = vadd.f32 %v1091, %v414
    %v1095 = vtanh.pop %v1094
    %s1096 = scalar_lea.vmem [#allocation7], 6
    %1097 = vst.msk [vmem:[%s1096] sm:$0x3] %vm418, %v1095
    %1098 = vmatprep.subr.mxu0 0.0
    %1099 = vmatpush1.msra.mxu0 %v67
    %1100 = vmatprep.subr.mxu0 0.0
    %1101 = vmatpush1.msra.mxu0 %v68
    %1102 = vmatprep.subr.mxu0 0.0
    %1103 = vmatpush1.msra.mxu0 %v69
    %1104 = vmatprep.subr.mxu0 0.0
    %1105 = vmatpush1.msra.mxu0 %v70
    %1106 = vmatprep.subr.mxu0 0.0
    %1107 = vmatpush1.msra.mxu0 0.0
    %1108 = vmatprep.subr.mxu0 0.0
    %1109 = vmatpush1.msra.mxu0 0.0
    %1110 = vmatprep.subr.mxu0 0.0
    %1111 = vmatpush1.msra.mxu0 0.0
    %1112 = vmatprep.subr.mxu0 0.0
    %1113 = vmatpush1.msra.mxu0 0.0
    %1114 = vmatprep.subr.mxu0 0.0
    %1115 = vmatpush1.msra.mxu0 0.0
    %1116 = vmatprep.subr.mxu0 0.0
    %1117 = vmatpush1.msra.mxu0 0.0
    %1118 = vmatprep.subr.mxu0 0.0
    %1119 = vmatpush1.msra.mxu0 0.0
    %1120 = vmatprep.subr.mxu0 0.0
    %1121 = vmatpush1.msra.mxu0 0.0
    %1122 = vmatprep.subr.mxu0 0.0
    %1123 = vmatpush1.msra.mxu0 0.0
    %1124 = vmatprep.subr.mxu0 0.0
    %1125 = vmatpush1.msra.mxu0 0.0
    %1126 = vmatprep.subr.mxu0 0.0
    %1127 = vmatpush1.msra.mxu0 0.0
    %1128 = vmatprep.subr.mxu0 0.0
    %1129 = vmatpush1.msra.mxu0 0.0
    %1130 = vmatprep.subr.mxu0 0.0
    %1131 = vmatpush1.msra.mxu0 0.0
    %1132 = vmatprep.subr.mxu0 0.0
    %1133 = vmatpush1.msra.mxu0 0.0
    %1134 = vmatprep.subr.mxu0 0.0
    %1135 = vmatpush1.msra.mxu0 0.0
    %1136 = vmatprep.subr.mxu0 0.0
    %1137 = vmatpush1.msra.mxu0 0.0
    %1138 = vmatprep.subr.mxu0 0.0
    %1139 = vmatpush1.msra.mxu0 0.0
    %1140 = vmatprep.subr.mxu0 0.0
    %1141 = vmatpush1.msra.mxu0 0.0
    %1142 = vmatprep.subr.mxu0 0.0
    %1143 = vmatpush1.msra.mxu0 0.0
    %1144 = vmatprep.subr.mxu0 0.0
    %1145 = vmatpush1.msra.mxu0 0.0
    %1146 = vmatprep.subr.mxu0 0.0
    %1147 = vmatpush1.msra.mxu0 0.0
    %1148 = vmatprep.subr.mxu0 0.0
    %1149 = vmatpush1.msra.mxu0 0.0
    %1150 = vmatprep.subr.mxu0 0.0
    %1151 = vmatpush1.msra.mxu0 0.0
    %1152 = vmatprep.subr.mxu0 0.0
    %1153 = vmatpush1.msra.mxu0 0.0
    %1154 = vmatprep.subr.mxu0 0.0
    %1155 = vmatpush1.msra.mxu0 0.0
    %1156 = vmatprep.subr.mxu0 0.0
    %1157 = vmatpush1.msra.mxu0 0.0
    %1158 = vmatprep.subr.mxu0 0.0
    %1159 = vmatpush1.msra.mxu0 0.0
    %1160 = vmatprep.subr.mxu0 0.0
    %1161 = vmatpush1.msra.mxu0 0.0
    %1162 = vmatprep.mubr.f32.mxu0 0.0
    %1163 = vmatmul.mubr.f32.gmra.mrb[0].mxu0 %v1022
    %v1164 = vpop.f32.mrb[0].mxu0
    %v1165 = vadd.f32 0.0, %v1164
    %v1166 = vpop.f32.mrb[0].mxu0
    %1167 = vdwg.mxu0
    %v1168 = vadd.f32 %v175, %v1165
    %v1169 = vtanh.pop %v1168
    %v1171 = vsel %vm188, %v1095, 0
    %1173 = vmatprep.subr.mxu0 0.0
    %1174 = vmatpush1.msra.mxu0 %v71
    %1175 = vmatprep.subr.mxu0 0.0
    %1176 = vmatpush1.msra.mxu0 %v72
    %1177 = vmatprep.subr.mxu0 0.0
    %1178 = vmatpush1.msra.mxu0 %v73
    %1179 = vmatprep.subr.mxu0 0.0
    %1180 = vmatpush1.msra.mxu0 %v74
    %1181 = vmatprep.subr.mxu0 0.0
    %1182 = vmatpush1.msra.mxu0 0.0
    %1183 = vmatprep.subr.mxu0 0.0
    %1184 = vmatpush1.msra.mxu0 0.0
    %1185 = vmatprep.subr.mxu0 0.0
    %1186 = vmatpush1.msra.mxu0 0.0
    %1187 = vmatprep.subr.mxu0 0.0
    %1188 = vmatpush1.msra.mxu0 0.0
    %1189 = vmatprep.subr.mxu0 0.0
    %1190 = vmatpush1.msra.mxu0 0.0
    %1191 = vmatprep.subr.mxu0 0.0
    %1192 = vmatpush1.msra.mxu0 0.0
    %1193 = vmatprep.subr.mxu0 0.0
    %1194 = vmatpush1.msra.mxu0 0.0
    %1195 = vmatprep.subr.mxu0 0.0
    %1196 = vmatpush1.msra.mxu0 0.0
    %1197 = vmatprep.subr.mxu0 0.0
    %1198 = vmatpush1.msra.mxu0 0.0
    %1199 = vmatprep.subr.mxu0 0.0
    %1200 = vmatpush1.msra.mxu0 0.0
    %1201 = vmatprep.subr.mxu0 0.0
    %1202 = vmatpush1.msra.mxu0 0.0
    %1203 = vmatprep.subr.mxu0 0.0
    %1204 = vmatpush1.msra.mxu0 0.0
    %1205 = vmatprep.subr.mxu0 0.0
    %1206 = vmatpush1.msra.mxu0 0.0
    %1207 = vmatprep.subr.mxu0 0.0
    %1208 = vmatpush1.msra.mxu0 0.0
    %1209 = vmatprep.subr.mxu0 0.0
    %1210 = vmatpush1.msra.mxu0 0.0
    %1211 = vmatprep.subr.mxu0 0.0
    %1212 = vmatpush1.msra.mxu0 0.0
    %1213 = vmatprep.subr.mxu0 0.0
    %1214 = vmatpush1.msra.mxu0 0.0
    %1215 = vmatprep.subr.mxu0 0.0
    %1216 = vmatpush1.msra.mxu0 0.0
    %1217 = vmatprep.subr.mxu0 0.0
    %1218 = vmatpush1.msra.mxu0 0.0
    %1219 = vmatprep.subr.mxu0 0.0
    %1220 = vmatpush1.msra.mxu0 0.0
    %1221 = vmatprep.subr.mxu0 0.0
    %1222 = vmatpush1.msra.mxu0 0.0
    %1223 = vmatprep.subr.mxu0 0.0
    %1224 = vmatpush1.msra.mxu0 0.0
    %1225 = vmatprep.subr.mxu0 0.0
    %1226 = vmatpush1.msra.mxu0 0.0
    %1227 = vmatprep.subr.mxu0 0.0
    %1228 = vmatpush1.msra.mxu0 0.0
    %1229 = vmatprep.subr.mxu0 0.0
    %1230 = vmatpush1.msra.mxu0 0.0
    %1231 = vmatprep.subr.mxu0 0.0
    %1232 = vmatpush1.msra.mxu0 0.0
    %1233 = vmatprep.subr.mxu0 0.0
    %1234 = vmatpush1.msra.mxu0 0.0
    %1235 = vmatprep.subr.mxu0 0.0
    %1236 = vmatpush1.msra.mxu0 0.0
    %1237 = vmatprep.mubr.f32.mxu0 0.0
    %1238 = vmatmul.mubr.f32.gmra.mrb[0].mxu0 %v1171
    %v1239 = vpop.f32.mrb[0].mxu0
    %v1240 = vadd.f32 0.0, %v1239
    %v1241 = vpop.f32.mrb[0].mxu0
    %1242 = vdwg.mxu0
    %v1244 = vsel %vm188, %v1169, 0
    %1246 = vmatprep.subr.mxu0 0.0
    %1247 = vmatpush1.msra.mxu0 %v63
    %1248 = vmatprep.subr.mxu0 0.0
    %1249 = vmatpush1.msra.mxu0 %v64
    %1250 = vmatprep.subr.mxu0 0.0
    %1251 = vmatpush1.msra.mxu0 %v65
    %1252 = vmatprep.subr.mxu0 0.0
    %1253 = vmatpush1.msra.mxu0 %v66
    %1254 = vmatprep.subr.mxu0 0.0
    %1255 = vmatpush1.msra.mxu0 0.0
    %1256 = vmatprep.subr.mxu0 0.0
    %1257 = vmatpush1.msra.mxu0 0.0
    %1258 = vmatprep.subr.mxu0 0.0
    %1259 = vmatpush1.msra.mxu0 0.0
    %1260 = vmatprep.subr.mxu0 0.0
    %1261 = vmatpush1.msra.mxu0 0.0
    %1262 = vmatprep.subr.mxu0 0.0
    %1263 = vmatpush1.msra.mxu0 0.0
    %1264 = vmatprep.subr.mxu0 0.0
    %1265 = vmatpush1.msra.mxu0 0.0
    %1266 = vmatprep.subr.mxu0 0.0
    %1267 = vmatpush1.msra.mxu0 0.0
    %1268 = vmatprep.subr.mxu0 0.0
    %1269 = vmatpush1.msra.mxu0 0.0
    %1270 = vmatprep.subr.mxu0 0.0
    %1271 = vmatpush1.msra.mxu0 0.0
    %1272 = vmatprep.subr.mxu0 0.0
    %1273 = vmatpush1.msra.mxu0 0.0
    %1274 = vmatprep.subr.mxu0 0.0
    %1275 = vmatpush1.msra.mxu0 0.0
    %1276 = vmatprep.subr.mxu0 0.0
    %1277 = vmatpush1.msra.mxu0 0.0
    %1278 = vmatprep.subr.mxu0 0.0
    %1279 = vmatpush1.msra.mxu0 0.0
    %1280 = vmatprep.subr.mxu0 0.0
    %1281 = vmatpush1.msra.mxu0 0.0
    %1282 = vmatprep.subr.mxu0 0.0
    %1283 = vmatpush1.msra.mxu0 0.0
    %1284 = vmatprep.subr.mxu0 0.0
    %1285 = vmatpush1.msra.mxu0 0.0
    %1286 = vmatprep.subr.mxu0 0.0
    %1287 = vmatpush1.msra.mxu0 0.0
    %1288 = vmatprep.subr.mxu0 0.0
    %1289 = vmatpush1.msra.mxu0 0.0
    %1290 = vmatprep.subr.mxu0 0.0
    %1291 = vmatpush1.msra.mxu0 0.0
    %1292 = vmatprep.subr.mxu0 0.0
    %1293 = vmatpush1.msra.mxu0 0.0
    %1294 = vmatprep.subr.mxu0 0.0
    %1295 = vmatpush1.msra.mxu0 0.0
    %1296 = vmatprep.subr.mxu0 0.0
    %1297 = vmatpush1.msra.mxu0 0.0
    %1298 = vmatprep.subr.mxu0 0.0
    %1299 = vmatpush1.msra.mxu0 0.0
    %1300 = vmatprep.subr.mxu0 0.0
    %1301 = vmatpush1.msra.mxu0 0.0
    %1302 = vmatprep.subr.mxu0 0.0
    %1303 = vmatpush1.msra.mxu0 0.0
    %1304 = vmatprep.subr.mxu0 0.0
    %1305 = vmatpush1.msra.mxu0 0.0
    %1306 = vmatprep.subr.mxu0 0.0
    %1307 = vmatpush1.msra.mxu0 0.0
    %1308 = vmatprep.subr.mxu0 0.0
    %1309 = vmatpush1.msra.mxu0 0.0
    %1310 = vmatprep.mubr.f32.mxu0 0.0
    %1311 = vmatmul.mubr.f32.gmra.mrb[0].mxu0 %v1244
    %v1312 = vpop.f32.mrb[0].mxu0
    %v1313 = vadd.f32 %v1240, %v1312
    %v1314 = vpop.f32.mrb[0].mxu0
    %1315 = vdwg.mxu0
    %v1316 = vadd.f32 %v1313, %v414
    %v1317 = vtanh.pop %v1316
    %s1318 = scalar_lea.vmem [#allocation7], 8
    %1319 = vst.msk [vmem:[%s1318] sm:$0x3] %vm418, %v1317
    %1320 = vmatprep.subr.mxu0 0.0
    %1321 = vmatpush1.msra.mxu0 %v67
    %1322 = vmatprep.subr.mxu0 0.0
    %1323 = vmatpush1.msra.mxu0 %v68
    %1324 = vmatprep.subr.mxu0 0.0
    %1325 = vmatpush1.msra.mxu0 %v69
    %1326 = vmatprep.subr.mxu0 0.0
    %1327 = vmatpush1.msra.mxu0 %v70
    %1328 = vmatprep.subr.mxu0 0.0
    %1329 = vmatpush1.msra.mxu0 0.0
    %1330 = vmatprep.subr.mxu0 0.0
    %1331 = vmatpush1.msra.mxu0 0.0
    %1332 = vmatprep.subr.mxu0 0.0
    %1333 = vmatpush1.msra.mxu0 0.0
    %1334 = vmatprep.subr.mxu0 0.0
    %1335 = vmatpush1.msra.mxu0 0.0
    %1336 = vmatprep.subr.mxu0 0.0
    %1337 = vmatpush1.msra.mxu0 0.0
    %1338 = vmatprep.subr.mxu0 0.0
    %1339 = vmatpush1.msra.mxu0 0.0
    %1340 = vmatprep.subr.mxu0 0.0
    %1341 = vmatpush1.msra.mxu0 0.0
    %1342 = vmatprep.subr.mxu0 0.0
    %1343 = vmatpush1.msra.mxu0 0.0
    %1344 = vmatprep.subr.mxu0 0.0
    %1345 = vmatpush1.msra.mxu0 0.0
    %1346 = vmatprep.subr.mxu0 0.0
    %1347 = vmatpush1.msra.mxu0 0.0
    %1348 = vmatprep.subr.mxu0 0.0
    %1349 = vmatpush1.msra.mxu0 0.0
    %1350 = vmatprep.subr.mxu0 0.0
    %1351 = vmatpush1.msra.mxu0 0.0
    %1352 = vmatprep.subr.mxu0 0.0
    %1353 = vmatpush1.msra.mxu0 0.0
    %1354 = vmatprep.subr.mxu0 0.0
    %1355 = vmatpush1.msra.mxu0 0.0
    %1356 = vmatprep.subr.mxu0 0.0
    %1357 = vmatpush1.msra.mxu0 0.0
    %1358 = vmatprep.subr.mxu0 0.0
    %1359 = vmatpush1.msra.mxu0 0.0
    %1360 = vmatprep.subr.mxu0 0.0
    %1361 = vmatpush1.msra.mxu0 0.0
    %1362 = vmatprep.subr.mxu0 0.0
    %1363 = vmatpush1.msra.mxu0 0.0
    %1364 = vmatprep.subr.mxu0 0.0
    %1365 = vmatpush1.msra.mxu0 0.0
    %1366 = vmatprep.subr.mxu0 0.0
    %1367 = vmatpush1.msra.mxu0 0.0
    %1368 = vmatprep.subr.mxu0 0.0
    %1369 = vmatpush1.msra.mxu0 0.0
    %1370 = vmatprep.subr.mxu0 0.0
    %1371 = vmatpush1.msra.mxu0 0.0
    %1372 = vmatprep.subr.mxu0 0.0
    %1373 = vmatpush1.msra.mxu0 0.0
    %1374 = vmatprep.subr.mxu0 0.0
    %1375 = vmatpush1.msra.mxu0 0.0
    %1376 = vmatprep.subr.mxu0 0.0
    %1377 = vmatpush1.msra.mxu0 0.0
    %1378 = vmatprep.subr.mxu0 0.0
    %1379 = vmatpush1.msra.mxu0 0.0
    %1380 = vmatprep.subr.mxu0 0.0
    %1381 = vmatpush1.msra.mxu0 0.0
    %1382 = vmatprep.subr.mxu0 0.0
    %1383 = vmatpush1.msra.mxu0 0.0
    %1384 = vmatprep.mubr.f32.mxu0 0.0
    %1385 = vmatmul.mubr.f32.gmra.mrb[0].mxu0 %v1244
    %v1386 = vpop.f32.mrb[0].mxu0
    %v1387 = vadd.f32 0.0, %v1386
    %v1388 = vpop.f32.mrb[0].mxu0
    %1389 = vdwg.mxu0
    %v1391 = vrot.slane %v1387, 6
    %v1393 = vadd.f32 %v175, %v1391
    %v1394 = vtanh.pop %v1393
    %v1396 = vsel %vm188, %v1317, 0
    %1398 = vmatprep.subr.mxu0 0.0
    %1399 = vmatpush1.msra.mxu0 %v71
    %1400 = vmatprep.subr.mxu0 0.0
    %1401 = vmatpush1.msra.mxu0 %v72
    %1402 = vmatprep.subr.mxu0 0.0
    %1403 = vmatpush1.msra.mxu0 %v73
    %1404 = vmatprep.subr.mxu0 0.0
    %1405 = vmatpush1.msra.mxu0 %v74
    %1406 = vmatprep.subr.mxu0 0.0
    %1407 = vmatpush1.msra.mxu0 0.0
    %1408 = vmatprep.subr.mxu0 0.0
    %1409 = vmatpush1.msra.mxu0 0.0
    %1410 = vmatprep.subr.mxu0 0.0
    %1411 = vmatpush1.msra.mxu0 0.0
    %1412 = vmatprep.subr.mxu0 0.0
    %1413 = vmatpush1.msra.mxu0 0.0
    %1414 = vmatprep.subr.mxu0 0.0
    %1415 = vmatpush1.msra.mxu0 0.0
    %1416 = vmatprep.subr.mxu0 0.0
    %1417 = vmatpush1.msra.mxu0 0.0
    %1418 = vmatprep.subr.mxu0 0.0
    %1419 = vmatpush1.msra.mxu0 0.0
    %1420 = vmatprep.subr.mxu0 0.0
    %1421 = vmatpush1.msra.mxu0 0.0
    %1422 = vmatprep.subr.mxu0 0.0
    %1423 = vmatpush1.msra.mxu0 0.0
    %1424 = vmatprep.subr.mxu0 0.0
    %1425 = vmatpush1.msra.mxu0 0.0
    %1426 = vmatprep.subr.mxu0 0.0
    %1427 = vmatpush1.msra.mxu0 0.0
    %1428 = vmatprep.subr.mxu0 0.0
    %1429 = vmatpush1.msra.mxu0 0.0
    %1430 = vmatprep.subr.mxu0 0.0
    %1431 = vmatpush1.msra.mxu0 0.0
    %1432 = vmatprep.subr.mxu0 0.0
    %1433 = vmatpush1.msra.mxu0 0.0
    %1434 = vmatprep.subr.mxu0 0.0
    %1435 = vmatpush1.msra.mxu0 0.0
    %1436 = vmatprep.subr.mxu0 0.0
    %1437 = vmatpush1.msra.mxu0 0.0
    %1438 = vmatprep.subr.mxu0 0.0
    %1439 = vmatpush1.msra.mxu0 0.0
    %1440 = vmatprep.subr.mxu0 0.0
    %1441 = vmatpush1.msra.mxu0 0.0
    %1442 = vmatprep.subr.mxu0 0.0
    %1443 = vmatpush1.msra.mxu0 0.0
    %1444 = vmatprep.subr.mxu0 0.0
    %1445 = vmatpush1.msra.mxu0 0.0
    %1446 = vmatprep.subr.mxu0 0.0
    %1447 = vmatpush1.msra.mxu0 0.0
    %1448 = vmatprep.subr.mxu0 0.0
    %1449 = vmatpush1.msra.mxu0 0.0
    %1450 = vmatprep.subr.mxu0 0.0
    %1451 = vmatpush1.msra.mxu0 0.0
    %1452 = vmatprep.subr.mxu0 0.0
    %1453 = vmatpush1.msra.mxu0 0.0
    %1454 = vmatprep.subr.mxu0 0.0
    %1455 = vmatpush1.msra.mxu0 0.0
    %1456 = vmatprep.subr.mxu0 0.0
    %1457 = vmatpush1.msra.mxu0 0.0
    %1458 = vmatprep.subr.mxu0 0.0
    %1459 = vmatpush1.msra.mxu0 0.0
    %1460 = vmatprep.subr.mxu0 0.0
    %1461 = vmatpush1.msra.mxu0 0.0
    %1462 = vmatprep.mubr.f32.mxu0 0.0
    %1463 = vmatmul.mubr.f32.gmra.mrb[0].mxu0 %v1396
    %v1464 = vpop.f32.mrb[0].mxu0
    %v1465 = vadd.f32 0.0, %v1464
    %v1466 = vpop.f32.mrb[0].mxu0
    %1467 = vdwg.mxu0
    %v1469 = vrot.slane %v1394, 2
    %v1470 = vsel %vm188, %v1469, 0
    %1472 = vmatprep.subr.mxu0 0.0
    %1473 = vmatpush1.msra.mxu0 %v63
    %1474 = vmatprep.subr.mxu0 0.0
    %1475 = vmatpush1.msra.mxu0 %v64
    %1476 = vmatprep.subr.mxu0 0.0
    %1477 = vmatpush1.msra.mxu0 %v65
    %1478 = vmatprep.subr.mxu0 0.0
    %1479 = vmatpush1.msra.mxu0 %v66
    %1480 = vmatprep.subr.mxu0 0.0
    %1481 = vmatpush1.msra.mxu0 0.0
    %1482 = vmatprep.subr.mxu0 0.0
    %1483 = vmatpush1.msra.mxu0 0.0
    %1484 = vmatprep.subr.mxu0 0.0
    %1485 = vmatpush1.msra.mxu0 0.0
    %1486 = vmatprep.subr.mxu0 0.0
    %1487 = vmatpush1.msra.mxu0 0.0
    %1488 = vmatprep.subr.mxu0 0.0
    %1489 = vmatpush1.msra.mxu0 0.0
    %1490 = vmatprep.subr.mxu0 0.0
    %1491 = vmatpush1.msra.mxu0 0.0
    %1492 = vmatprep.subr.mxu0 0.0
    %1493 = vmatpush1.msra.mxu0 0.0
    %1494 = vmatprep.subr.mxu0 0.0
    %1495 = vmatpush1.msra.mxu0 0.0
    %1496 = vmatprep.subr.mxu0 0.0
    %1497 = vmatpush1.msra.mxu0 0.0
    %1498 = vmatprep.subr.mxu0 0.0
    %1499 = vmatpush1.msra.mxu0 0.0
    %1500 = vmatprep.subr.mxu0 0.0
    %1501 = vmatpush1.msra.mxu0 0.0
    %1502 = vmatprep.subr.mxu0 0.0
    %1503 = vmatpush1.msra.mxu0 0.0
    %1504 = vmatprep.subr.mxu0 0.0
    %1505 = vmatpush1.msra.mxu0 0.0
    %1506 = vmatprep.subr.mxu0 0.0
    %1507 = vmatpush1.msra.mxu0 0.0
    %1508 = vmatprep.subr.mxu0 0.0
    %1509 = vmatpush1.msra.mxu0 0.0
    %1510 = vmatprep.subr.mxu0 0.0
    %1511 = vmatpush1.msra.mxu0 0.0
    %1512 = vmatprep.subr.mxu0 0.0
    %1513 = vmatpush1.msra.mxu0 0.0
    %1514 = vmatprep.subr.mxu0 0.0
    %1515 = vmatpush1.msra.mxu0 0.0
    %1516 = vmatprep.subr.mxu0 0.0
    %1517 = vmatpush1.msra.mxu0 0.0
    %1518 = vmatprep.subr.mxu0 0.0
    %1519 = vmatpush1.msra.mxu0 0.0
    %1520 = vmatprep.subr.mxu0 0.0
    %1521 = vmatpush1.msra.mxu0 0.0
    %1522 = vmatprep.subr.mxu0 0.0
    %1523 = vmatpush1.msra.mxu0 0.0
    %1524 = vmatprep.subr.mxu0 0.0
    %1525 = vmatpush1.msra.mxu0 0.0
    %1526 = vmatprep.subr.mxu0 0.0
    %1527 = vmatpush1.msra.mxu0 0.0
    %1528 = vmatprep.subr.mxu0 0.0
    %1529 = vmatpush1.msra.mxu0 0.0
    %1530 = vmatprep.subr.mxu0 0.0
    %1531 = vmatpush1.msra.mxu0 0.0
    %1532 = vmatprep.subr.mxu0 0.0
    %1533 = vmatpush1.msra.mxu0 0.0
    %1534 = vmatprep.subr.mxu0 0.0
    %1535 = vmatpush1.msra.mxu0 0.0
    %1536 = vmatprep.mubr.f32.mxu0 0.0
    %1537 = vmatmul.mubr.f32.gmra.mrb[0].mxu0 %v1470
    %v1538 = vpop.f32.mrb[0].mxu0
    %v1539 = vadd.f32 %v1465, %v1538
    %v1540 = vpop.f32.mrb[0].mxu0
    %1541 = vdwg.mxu0
    %v1542 = vadd.f32 %v1539, %v414
    %v1543 = vtanh.pop %v1542
    %s1544 = scalar_lea.vmem [#allocation7], 10
    %1545 = vst.msk [vmem:[%s1544] sm:$0x3] %vm418, %v1543
    %1546 = vmatprep.subr.mxu0 0.0
    %1547 = vmatpush1.msra.mxu0 %v67
    %1548 = vmatprep.subr.mxu0 0.0
    %1549 = vmatpush1.msra.mxu0 %v68
    %1550 = vmatprep.subr.mxu0 0.0
    %1551 = vmatpush1.msra.mxu0 %v69
    %1552 = vmatprep.subr.mxu0 0.0
    %1553 = vmatpush1.msra.mxu0 %v70
    %1554 = vmatprep.subr.mxu0 0.0
    %1555 = vmatpush1.msra.mxu0 0.0
    %1556 = vmatprep.subr.mxu0 0.0
    %1557 = vmatpush1.msra.mxu0 0.0
    %1558 = vmatprep.subr.mxu0 0.0
    %1559 = vmatpush1.msra.mxu0 0.0
    %1560 = vmatprep.subr.mxu0 0.0
    %1561 = vmatpush1.msra.mxu0 0.0
    %1562 = vmatprep.subr.mxu0 0.0
    %1563 = vmatpush1.msra.mxu0 0.0
    %1564 = vmatprep.subr.mxu0 0.0
    %1565 = vmatpush1.msra.mxu0 0.0
    %1566 = vmatprep.subr.mxu0 0.0
    %1567 = vmatpush1.msra.mxu0 0.0
    %1568 = vmatprep.subr.mxu0 0.0
    %1569 = vmatpush1.msra.mxu0 0.0
    %1570 = vmatprep.subr.mxu0 0.0
    %1571 = vmatpush1.msra.mxu0 0.0
    %1572 = vmatprep.subr.mxu0 0.0
    %1573 = vmatpush1.msra.mxu0 0.0
    %1574 = vmatprep.subr.mxu0 0.0
    %1575 = vmatpush1.msra.mxu0 0.0
    %1576 = vmatprep.subr.mxu0 0.0
    %1577 = vmatpush1.msra.mxu0 0.0
    %1578 = vmatprep.subr.mxu0 0.0
    %1579 = vmatpush1.msra.mxu0 0.0
    %1580 = vmatprep.subr.mxu0 0.0
    %1581 = vmatpush1.msra.mxu0 0.0
    %1582 = vmatprep.subr.mxu0 0.0
    %1583 = vmatpush1.msra.mxu0 0.0
    %1584 = vmatprep.subr.mxu0 0.0
    %1585 = vmatpush1.msra.mxu0 0.0
    %1586 = vmatprep.subr.mxu0 0.0
    %1587 = vmatpush1.msra.mxu0 0.0
    %1588 = vmatprep.subr.mxu0 0.0
    %1589 = vmatpush1.msra.mxu0 0.0
    %1590 = vmatprep.subr.mxu0 0.0
    %1591 = vmatpush1.msra.mxu0 0.0
    %1592 = vmatprep.subr.mxu0 0.0
    %1593 = vmatpush1.msra.mxu0 0.0
    %1594 = vmatprep.subr.mxu0 0.0
    %1595 = vmatpush1.msra.mxu0 0.0
    %1596 = vmatprep.subr.mxu0 0.0
    %1597 = vmatpush1.msra.mxu0 0.0
    %1598 = vmatprep.subr.mxu0 0.0
    %1599 = vmatpush1.msra.mxu0 0.0
    %1600 = vmatprep.subr.mxu0 0.0
    %1601 = vmatpush1.msra.mxu0 0.0
    %1602 = vmatprep.subr.mxu0 0.0
    %1603 = vmatpush1.msra.mxu0 0.0
    %1604 = vmatprep.subr.mxu0 0.0
    %1605 = vmatpush1.msra.mxu0 0.0
    %1606 = vmatprep.subr.mxu0 0.0
    %1607 = vmatpush1.msra.mxu0 0.0
    %1608 = vmatprep.subr.mxu0 0.0
    %1609 = vmatpush1.msra.mxu0 0.0
    %1610 = vmatprep.mubr.f32.mxu0 0.0
    %1611 = vmatmul.mubr.f32.gmra.mrb[0].mxu0 %v1470
    %v1612 = vpop.f32.mrb[0].mxu0
    %v1613 = vadd.f32 0.0, %v1612
    %v1614 = vpop.f32.mrb[0].mxu0
    %1615 = vdwg.mxu0
    %v1617 = vrot.slane %v1613, 4
    %v1619 = vadd.f32 %v175, %v1617
    %v1620 = vtanh.pop %v1619
    %v1622 = vsel %vm188, %v1543, 0
    %1624 = vmatprep.subr.mxu0 0.0
    %1625 = vmatpush1.msra.mxu0 %v71
    %1626 = vmatprep.subr.mxu0 0.0
    %1627 = vmatpush1.msra.mxu0 %v72
    %1628 = vmatprep.subr.mxu0 0.0
    %1629 = vmatpush1.msra.mxu0 %v73
    %1630 = vmatprep.subr.mxu0 0.0
    %1631 = vmatpush1.msra.mxu0 %v74
    %1632 = vmatprep.subr.mxu0 0.0
    %1633 = vmatpush1.msra.mxu0 0.0
    %1634 = vmatprep.subr.mxu0 0.0
    %1635 = vmatpush1.msra.mxu0 0.0
    %1636 = vmatprep.subr.mxu0 0.0
    %1637 = vmatpush1.msra.mxu0 0.0
    %1638 = vmatprep.subr.mxu0 0.0
    %1639 = vmatpush1.msra.mxu0 0.0
    %1640 = vmatprep.subr.mxu0 0.0
    %1641 = vmatpush1.msra.mxu0 0.0
    %1642 = vmatprep.subr.mxu0 0.0
    %1643 = vmatpush1.msra.mxu0 0.0
    %1644 = vmatprep.subr.mxu0 0.0
    %1645 = vmatpush1.msra.mxu0 0.0
    %1646 = vmatprep.subr.mxu0 0.0
    %1647 = vmatpush1.msra.mxu0 0.0
    %1648 = vmatprep.subr.mxu0 0.0
    %1649 = vmatpush1.msra.mxu0 0.0
    %1650 = vmatprep.subr.mxu0 0.0
    %1651 = vmatpush1.msra.mxu0 0.0
    %1652 = vmatprep.subr.mxu0 0.0
    %1653 = vmatpush1.msra.mxu0 0.0
    %1654 = vmatprep.subr.mxu0 0.0
    %1655 = vmatpush1.msra.mxu0 0.0
    %1656 = vmatprep.subr.mxu0 0.0
    %1657 = vmatpush1.msra.mxu0 0.0
    %1658 = vmatprep.subr.mxu0 0.0
    %1659 = vmatpush1.msra.mxu0 0.0
    %1660 = vmatprep.subr.mxu0 0.0
    %1661 = vmatpush1.msra.mxu0 0.0
    %1662 = vmatprep.subr.mxu0 0.0
    %1663 = vmatpush1.msra.mxu0 0.0
    %1664 = vmatprep.subr.mxu0 0.0
    %1665 = vmatpush1.msra.mxu0 0.0
    %1666 = vmatprep.subr.mxu0 0.0
    %1667 = vmatpush1.msra.mxu0 0.0
    %1668 = vmatprep.subr.mxu0 0.0
    %1669 = vmatpush1.msra.mxu0 0.0
    %1670 = vmatprep.subr.mxu0 0.0
    %1671 = vmatpush1.msra.mxu0 0.0
    %1672 = vmatprep.subr.mxu0 0.0
    %1673 = vmatpush1.msra.mxu0 0.0
    %1674 = vmatprep.subr.mxu0 0.0
    %1675 = vmatpush1.msra.mxu0 0.0
    %1676 = vmatprep.subr.mxu0 0.0
    %1677 = vmatpush1.msra.mxu0 0.0
    %1678 = vmatprep.subr.mxu0 0.0
    %1679 = vmatpush1.msra.mxu0 0.0
    %1680 = vmatprep.subr.mxu0 0.0
    %1681 = vmatpush1.msra.mxu0 0.0
    %1682 = vmatprep.subr.mxu0 0.0
    %1683 = vmatpush1.msra.mxu0 0.0
    %1684 = vmatprep.subr.mxu0 0.0
    %1685 = vmatpush1.msra.mxu0 0.0
    %1686 = vmatprep.subr.mxu0 0.0
    %1687 = vmatpush1.msra.mxu0 0.0
    %1688 = vmatprep.mubr.f32.mxu0 0.0
    %1689 = vmatmul.mubr.f32.gmra.mrb[0].mxu0 %v1622
    %v1690 = vpop.f32.mrb[0].mxu0
    %v1691 = vadd.f32 0.0, %v1690
    %v1692 = vpop.f32.mrb[0].mxu0
    %1693 = vdwg.mxu0
    %v1695 = vrot.slane %v1620, 4
    %v1696 = vsel %vm188, %v1695, 0
    %1698 = vmatprep.subr.mxu0 0.0
    %1699 = vmatpush1.msra.mxu0 %v63
    %1700 = vmatprep.subr.mxu0 0.0
    %1701 = vmatpush1.msra.mxu0 %v64
    %1702 = vmatprep.subr.mxu0 0.0
    %1703 = vmatpush1.msra.mxu0 %v65
    %1704 = vmatprep.subr.mxu0 0.0
    %1705 = vmatpush1.msra.mxu0 %v66
    %1706 = vmatprep.subr.mxu0 0.0
    %1707 = vmatpush1.msra.mxu0 0.0
    %1708 = vmatprep.subr.mxu0 0.0
    %1709 = vmatpush1.msra.mxu0 0.0
    %1710 = vmatprep.subr.mxu0 0.0
    %1711 = vmatpush1.msra.mxu0 0.0
    %1712 = vmatprep.subr.mxu0 0.0
    %1713 = vmatpush1.msra.mxu0 0.0
    %1714 = vmatprep.subr.mxu0 0.0
    %1715 = vmatpush1.msra.mxu0 0.0
    %1716 = vmatprep.subr.mxu0 0.0
    %1717 = vmatpush1.msra.mxu0 0.0
    %1718 = vmatprep.subr.mxu0 0.0
    %1719 = vmatpush1.msra.mxu0 0.0
    %1720 = vmatprep.subr.mxu0 0.0
    %1721 = vmatpush1.msra.mxu0 0.0
    %1722 = vmatprep.subr.mxu0 0.0
    %1723 = vmatpush1.msra.mxu0 0.0
    %1724 = vmatprep.subr.mxu0 0.0
    %1725 = vmatpush1.msra.mxu0 0.0
    %1726 = vmatprep.subr.mxu0 0.0
    %1727 = vmatpush1.msra.mxu0 0.0
    %1728 = vmatprep.subr.mxu0 0.0
    %1729 = vmatpush1.msra.mxu0 0.0
    %1730 = vmatprep.subr.mxu0 0.0
    %1731 = vmatpush1.msra.mxu0 0.0
    %1732 = vmatprep.subr.mxu0 0.0
    %1733 = vmatpush1.msra.mxu0 0.0
    %1734 = vmatprep.subr.mxu0 0.0
    %1735 = vmatpush1.msra.mxu0 0.0
    %1736 = vmatprep.subr.mxu0 0.0
    %1737 = vmatpush1.msra.mxu0 0.0
    %1738 = vmatprep.subr.mxu0 0.0
    %1739 = vmatpush1.msra.mxu0 0.0
    %1740 = vmatprep.subr.mxu0 0.0
    %1741 = vmatpush1.msra.mxu0 0.0
    %1742 = vmatprep.subr.mxu0 0.0
    %1743 = vmatpush1.msra.mxu0 0.0
    %1744 = vmatprep.subr.mxu0 0.0
    %1745 = vmatpush1.msra.mxu0 0.0
    %1746 = vmatprep.subr.mxu0 0.0
    %1747 = vmatpush1.msra.mxu0 0.0
    %1748 = vmatprep.subr.mxu0 0.0
    %1749 = vmatpush1.msra.mxu0 0.0
    %1750 = vmatprep.subr.mxu0 0.0
    %1751 = vmatpush1.msra.mxu0 0.0
    %1752 = vmatprep.subr.mxu0 0.0
    %1753 = vmatpush1.msra.mxu0 0.0
    %1754 = vmatprep.subr.mxu0 0.0
    %1755 = vmatpush1.msra.mxu0 0.0
    %1756 = vmatprep.subr.mxu0 0.0
    %1757 = vmatpush1.msra.mxu0 0.0
    %1758 = vmatprep.subr.mxu0 0.0
    %1759 = vmatpush1.msra.mxu0 0.0
    %1760 = vmatprep.subr.mxu0 0.0
    %1761 = vmatpush1.msra.mxu0 0.0
    %1762 = vmatprep.mubr.f32.mxu0 0.0
    %1763 = vmatmul.mubr.f32.gmra.mrb[0].mxu0 %v1696
    %v1764 = vpop.f32.mrb[0].mxu0
    %v1765 = vadd.f32 %v1691, %v1764
    %v1766 = vpop.f32.mrb[0].mxu0
    %1767 = vdwg.mxu0
    %v1768 = vadd.f32 %v1765, %v414
    %v1769 = vtanh.pop %v1768
    %s1770 = scalar_lea.vmem [#allocation7], 12
    %1771 = vst.msk [vmem:[%s1770] sm:$0x3] %vm418, %v1769
    %1772 = vmatprep.subr.mxu0 0.0
    %1773 = vmatpush1.msra.mxu0 %v67
    %1774 = vmatprep.subr.mxu0 0.0
    %1775 = vmatpush1.msra.mxu0 %v68
    %1776 = vmatprep.subr.mxu0 0.0
    %1777 = vmatpush1.msra.mxu0 %v69
    %1778 = vmatprep.subr.mxu0 0.0
    %1779 = vmatpush1.msra.mxu0 %v70
    %1780 = vmatprep.subr.mxu0 0.0
    %1781 = vmatpush1.msra.mxu0 0.0
    %1782 = vmatprep.subr.mxu0 0.0
    %1783 = vmatpush1.msra.mxu0 0.0
    %1784 = vmatprep.subr.mxu0 0.0
    %1785 = vmatpush1.msra.mxu0 0.0
    %1786 = vmatprep.subr.mxu0 0.0
    %1787 = vmatpush1.msra.mxu0 0.0
    %1788 = vmatprep.subr.mxu0 0.0
    %1789 = vmatpush1.msra.mxu0 0.0
    %1790 = vmatprep.subr.mxu0 0.0
    %1791 = vmatpush1.msra.mxu0 0.0
    %1792 = vmatprep.subr.mxu0 0.0
    %1793 = vmatpush1.msra.mxu0 0.0
    %1794 = vmatprep.subr.mxu0 0.0
    %1795 = vmatpush1.msra.mxu0 0.0
    %1796 = vmatprep.subr.mxu0 0.0
    %1797 = vmatpush1.msra.mxu0 0.0
    %1798 = vmatprep.subr.mxu0 0.0
    %1799 = vmatpush1.msra.mxu0 0.0
    %1800 = vmatprep.subr.mxu0 0.0
    %1801 = vmatpush1.msra.mxu0 0.0
    %1802 = vmatprep.subr.mxu0 0.0
    %1803 = vmatpush1.msra.mxu0 0.0
    %1804 = vmatprep.subr.mxu0 0.0
    %1805 = vmatpush1.msra.mxu0 0.0
    %1806 = vmatprep.subr.mxu0 0.0
    %1807 = vmatpush1.msra.mxu0 0.0
    %1808 = vmatprep.subr.mxu0 0.0
    %1809 = vmatpush1.msra.mxu0 0.0
    %1810 = vmatprep.subr.mxu0 0.0
    %1811 = vmatpush1.msra.mxu0 0.0
    %1812 = vmatprep.subr.mxu0 0.0
    %1813 = vmatpush1.msra.mxu0 0.0
    %1814 = vmatprep.subr.mxu0 0.0
    %1815 = vmatpush1.msra.mxu0 0.0
    %1816 = vmatprep.subr.mxu0 0.0
    %1817 = vmatpush1.msra.mxu0 0.0
    %1818 = vmatprep.subr.mxu0 0.0
    %1819 = vmatpush1.msra.mxu0 0.0
    %1820 = vmatprep.subr.mxu0 0.0
    %1821 = vmatpush1.msra.mxu0 0.0
    %1822 = vmatprep.subr.mxu0 0.0
    %1823 = vmatpush1.msra.mxu0 0.0
    %1824 = vmatprep.subr.mxu0 0.0
    %1825 = vmatpush1.msra.mxu0 0.0
    %1826 = vmatprep.subr.mxu0 0.0
    %1827 = vmatpush1.msra.mxu0 0.0
    %1828 = vmatprep.subr.mxu0 0.0
    %1829 = vmatpush1.msra.mxu0 0.0
    %1830 = vmatprep.subr.mxu0 0.0
    %1831 = vmatpush1.msra.mxu0 0.0
    %1832 = vmatprep.subr.mxu0 0.0
    %1833 = vmatpush1.msra.mxu0 0.0
    %1834 = vmatprep.subr.mxu0 0.0
    %1835 = vmatpush1.msra.mxu0 0.0
    %1836 = vmatprep.mubr.f32.mxu0 0.0
    %1837 = vmatmul.mubr.f32.gmra.mrb[0].mxu0 %v1696
    %v1838 = vpop.f32.mrb[0].mxu0
    %v1839 = vadd.f32 0.0, %v1838
    %v1840 = vpop.f32.mrb[0].mxu0
    %1841 = vdwg.mxu0
    %v1843 = vrot.slane %v1839, 2
    %v1845 = vadd.f32 %v175, %v1843
    %v1846 = vtanh.pop %v1845
    %v1848 = vsel %vm188, %v1769, 0
    %1850 = vmatprep.subr.mxu0 0.0
    %1851 = vmatpush1.msra.mxu0 %v71
    %1852 = vmatprep.subr.mxu0 0.0
    %1853 = vmatpush1.msra.mxu0 %v72
    %1854 = vmatprep.subr.mxu0 0.0
    %1855 = vmatpush1.msra.mxu0 %v73
    %1856 = vmatprep.subr.mxu0 0.0
    %1857 = vmatpush1.msra.mxu0 %v74
    %1858 = vmatprep.subr.mxu0 0.0
    %1859 = vmatpush1.msra.mxu0 0.0
    %1860 = vmatprep.subr.mxu0 0.0
    %1861 = vmatpush1.msra.mxu0 0.0
    %1862 = vmatprep.subr.mxu0 0.0
    %1863 = vmatpush1.msra.mxu0 0.0
    %1864 = vmatprep.subr.mxu0 0.0
    %1865 = vmatpush1.msra.mxu0 0.0
    %1866 = vmatprep.subr.mxu0 0.0
    %1867 = vmatpush1.msra.mxu0 0.0
    %1868 = vmatprep.subr.mxu0 0.0
    %1869 = vmatpush1.msra.mxu0 0.0
    %1870 = vmatprep.subr.mxu0 0.0
    %1871 = vmatpush1.msra.mxu0 0.0
    %1872 = vmatprep.subr.mxu0 0.0
    %1873 = vmatpush1.msra.mxu0 0.0
    %1874 = vmatprep.subr.mxu0 0.0
    %1875 = vmatpush1.msra.mxu0 0.0
    %1876 = vmatprep.subr.mxu0 0.0
    %1877 = vmatpush1.msra.mxu0 0.0
    %1878 = vmatprep.subr.mxu0 0.0
    %1879 = vmatpush1.msra.mxu0 0.0
    %1880 = vmatprep.subr.mxu0 0.0
    %1881 = vmatpush1.msra.mxu0 0.0
    %1882 = vmatprep.subr.mxu0 0.0
    %1883 = vmatpush1.msra.mxu0 0.0
    %1884 = vmatprep.subr.mxu0 0.0
    %1885 = vmatpush1.msra.mxu0 0.0
    %1886 = vmatprep.subr.mxu0 0.0
    %1887 = vmatpush1.msra.mxu0 0.0
    %1888 = vmatprep.subr.mxu0 0.0
    %1889 = vmatpush1.msra.mxu0 0.0
    %1890 = vmatprep.subr.mxu0 0.0
    %1891 = vmatpush1.msra.mxu0 0.0
    %1892 = vmatprep.subr.mxu0 0.0
    %1893 = vmatpush1.msra.mxu0 0.0
    %1894 = vmatprep.subr.mxu0 0.0
    %1895 = vmatpush1.msra.mxu0 0.0
    %1896 = vmatprep.subr.mxu0 0.0
    %1897 = vmatpush1.msra.mxu0 0.0
    %1898 = vmatprep.subr.mxu0 0.0
    %1899 = vmatpush1.msra.mxu0 0.0
    %1900 = vmatprep.subr.mxu0 0.0
    %1901 = vmatpush1.msra.mxu0 0.0
    %1902 = vmatprep.subr.mxu0 0.0
    %1903 = vmatpush1.msra.mxu0 0.0
    %1904 = vmatprep.subr.mxu0 0.0
    %1905 = vmatpush1.msra.mxu0 0.0
    %1906 = vmatprep.subr.mxu0 0.0
    %1907 = vmatpush1.msra.mxu0 0.0
    %1908 = vmatprep.subr.mxu0 0.0
    %1909 = vmatpush1.msra.mxu0 0.0
    %1910 = vmatprep.subr.mxu0 0.0
    %1911 = vmatpush1.msra.mxu0 0.0
    %1912 = vmatprep.subr.mxu0 0.0
    %1913 = vmatpush1.msra.mxu0 0.0
    %1914 = vmatprep.mubr.f32.mxu0 0.0
    %1915 = vmatmul.mubr.f32.gmra.mrb[0].mxu0 %v1848
    %v1916 = vpop.f32.mrb[0].mxu0
    %v1917 = vadd.f32 0.0, %v1916
    %v1918 = vpop.f32.mrb[0].mxu0
    %1919 = vdwg.mxu0
    %v1921 = vrot.slane %v1846, 6
    %v1922 = vsel %vm188, %v1921, 0
    %1924 = vmatprep.subr.mxu0 0.0
    %1925 = vmatpush1.msra.mxu0 %v63
    %1926 = vmatprep.subr.mxu0 0.0
    %1927 = vmatpush1.msra.mxu0 %v64
    %1928 = vmatprep.subr.mxu0 0.0
    %1929 = vmatpush1.msra.mxu0 %v65
    %1930 = vmatprep.subr.mxu0 0.0
    %1931 = vmatpush1.msra.mxu0 %v66
    %1932 = vmatprep.subr.mxu0 0.0
    %1933 = vmatpush1.msra.mxu0 0.0
    %1934 = vmatprep.subr.mxu0 0.0
    %1935 = vmatpush1.msra.mxu0 0.0
    %1936 = vmatprep.subr.mxu0 0.0
    %1937 = vmatpush1.msra.mxu0 0.0
    %1938 = vmatprep.subr.mxu0 0.0
    %1939 = vmatpush1.msra.mxu0 0.0
    %1940 = vmatprep.subr.mxu0 0.0
    %1941 = vmatpush1.msra.mxu0 0.0
    %1942 = vmatprep.subr.mxu0 0.0
    %1943 = vmatpush1.msra.mxu0 0.0
    %1944 = vmatprep.subr.mxu0 0.0
    %1945 = vmatpush1.msra.mxu0 0.0
    %1946 = vmatprep.subr.mxu0 0.0
    %1947 = vmatpush1.msra.mxu0 0.0
    %1948 = vmatprep.subr.mxu0 0.0
    %1949 = vmatpush1.msra.mxu0 0.0
    %1950 = vmatprep.subr.mxu0 0.0
    %1951 = vmatpush1.msra.mxu0 0.0
    %1952 = vmatprep.subr.mxu0 0.0
    %1953 = vmatpush1.msra.mxu0 0.0
    %1954 = vmatprep.subr.mxu0 0.0
    %1955 = vmatpush1.msra.mxu0 0.0
    %1956 = vmatprep.subr.mxu0 0.0
    %1957 = vmatpush1.msra.mxu0 0.0
    %1958 = vmatprep.subr.mxu0 0.0
    %1959 = vmatpush1.msra.mxu0 0.0
    %1960 = vmatprep.subr.mxu0 0.0
    %1961 = vmatpush1.msra.mxu0 0.0
    %1962 = vmatprep.subr.mxu0 0.0
    %1963 = vmatpush1.msra.mxu0 0.0
    %1964 = vmatprep.subr.mxu0 0.0
    %1965 = vmatpush1.msra.mxu0 0.0
    %1966 = vmatprep.subr.mxu0 0.0
    %1967 = vmatpush1.msra.mxu0 0.0
    %1968 = vmatprep.subr.mxu0 0.0
    %1969 = vmatpush1.msra.mxu0 0.0
    %1970 = vmatprep.subr.mxu0 0.0
    %1971 = vmatpush1.msra.mxu0 0.0
    %1972 = vmatprep.subr.mxu0 0.0
    %1973 = vmatpush1.msra.mxu0 0.0
    %1974 = vmatprep.subr.mxu0 0.0
    %1975 = vmatpush1.msra.mxu0 0.0
    %1976 = vmatprep.subr.mxu0 0.0
    %1977 = vmatpush1.msra.mxu0 0.0
    %1978 = vmatprep.subr.mxu0 0.0
    %1979 = vmatpush1.msra.mxu0 0.0
    %1980 = vmatprep.subr.mxu0 0.0
    %1981 = vmatpush1.msra.mxu0 0.0
    %1982 = vmatprep.subr.mxu0 0.0
    %1983 = vmatpush1.msra.mxu0 0.0
    %1984 = vmatprep.subr.mxu0 0.0
    %1985 = vmatpush1.msra.mxu0 0.0
    %1986 = vmatprep.subr.mxu0 0.0
    %1987 = vmatpush1.msra.mxu0 0.0
    %1988 = vmatprep.mubr.f32.mxu0 0.0
    %1989 = vmatmul.mubr.f32.gmra.mrb[0].mxu0 %v1922
    %v1990 = vpop.f32.mrb[0].mxu0
    %v1991 = vadd.f32 %v1917, %v1990
    %v1992 = vpop.f32.mrb[0].mxu0
    %1993 = vdwg.mxu0
    %v1994 = vadd.f32 %v1991, %v414
    %v1995 = vtanh.pop %v1994
    %s1996 = scalar_lea.vmem [#allocation7], 14
    %1997 = vst.msk [vmem:[%s1996] sm:$0x3] %vm418, %v1995
    %1998 = vmatprep.subr.mxu0 0.0
    %1999 = vmatpush1.msra.mxu0 %v67
    %2000 = vmatprep.subr.mxu0 0.0
    %2001 = vmatpush1.msra.mxu0 %v68
    %2002 = vmatprep.subr.mxu0 0.0
    %2003 = vmatpush1.msra.mxu0 %v69
    %2004 = vmatprep.subr.mxu0 0.0
    %2005 = vmatpush1.msra.mxu0 %v70
    %2006 = vmatprep.subr.mxu0 0.0
    %2007 = vmatpush1.msra.mxu0 0.0
    %2008 = vmatprep.subr.mxu0 0.0
    %2009 = vmatpush1.msra.mxu0 0.0
    %2010 = vmatprep.subr.mxu0 0.0
    %2011 = vmatpush1.msra.mxu0 0.0
    %2012 = vmatprep.subr.mxu0 0.0
    %2013 = vmatpush1.msra.mxu0 0.0
    %2014 = vmatprep.subr.mxu0 0.0
    %2015 = vmatpush1.msra.mxu0 0.0
    %2016 = vmatprep.subr.mxu0 0.0
    %2017 = vmatpush1.msra.mxu0 0.0
    %2018 = vmatprep.subr.mxu0 0.0
    %2019 = vmatpush1.msra.mxu0 0.0
    %2020 = vmatprep.subr.mxu0 0.0
    %2021 = vmatpush1.msra.mxu0 0.0
    %2022 = vmatprep.subr.mxu0 0.0
    %2023 = vmatpush1.msra.mxu0 0.0
    %2024 = vmatprep.subr.mxu0 0.0
    %2025 = vmatpush1.msra.mxu0 0.0
    %2026 = vmatprep.subr.mxu0 0.0
    %2027 = vmatpush1.msra.mxu0 0.0
    %2028 = vmatprep.subr.mxu0 0.0
    %2029 = vmatpush1.msra.mxu0 0.0
    %2030 = vmatprep.subr.mxu0 0.0
    %2031 = vmatpush1.msra.mxu0 0.0
    %2032 = vmatprep.subr.mxu0 0.0
    %2033 = vmatpush1.msra.mxu0 0.0
    %2034 = vmatprep.subr.mxu0 0.0
    %2035 = vmatpush1.msra.mxu0 0.0
    %2036 = vmatprep.subr.mxu0 0.0
    %2037 = vmatpush1.msra.mxu0 0.0
    %2038 = vmatprep.subr.mxu0 0.0
    %2039 = vmatpush1.msra.mxu0 0.0
    %2040 = vmatprep.subr.mxu0 0.0
    %2041 = vmatpush1.msra.mxu0 0.0
    %2042 = vmatprep.subr.mxu0 0.0
    %2043 = vmatpush1.msra.mxu0 0.0
    %2044 = vmatprep.subr.mxu0 0.0
    %2045 = vmatpush1.msra.mxu0 0.0
    %2046 = vmatprep.subr.mxu0 0.0
    %2047 = vmatpush1.msra.mxu0 0.0
    %2048 = vmatprep.subr.mxu0 0.0
    %2049 = vmatpush1.msra.mxu0 0.0
    %2050 = vmatprep.subr.mxu0 0.0
    %2051 = vmatpush1.msra.mxu0 0.0
    %2052 = vmatprep.subr.mxu0 0.0
    %2053 = vmatpush1.msra.mxu0 0.0
    %2054 = vmatprep.subr.mxu0 0.0
    %2055 = vmatpush1.msra.mxu0 0.0
    %2056 = vmatprep.subr.mxu0 0.0
    %2057 = vmatpush1.msra.mxu0 0.0
    %2058 = vmatprep.subr.mxu0 0.0
    %2059 = vmatpush1.msra.mxu0 0.0
    %2060 = vmatprep.subr.mxu0 0.0
    %2061 = vmatpush1.msra.mxu0 0.0
    %2062 = vmatprep.mubr.f32.mxu0 0.0
    %2063 = vmatmul.mubr.f32.gmra.mrb[0].mxu0 %v1922
    %v2064 = vpop.f32.mrb[0].mxu0
    %v2065 = vadd.f32 0.0, %v2064
    %v2066 = vpop.f32.mrb[0].mxu0
    %2067 = vdwg.mxu0
    %v2068 = vadd.f32 %v180, %v2065
    %v2069 = vtanh.pop %v2068
    %v2071 = vsel %vm188, %v1995, 0
    %2073 = vmatprep.subr.mxu0 0.0
    %2074 = vmatpush1.msra.mxu0 %v71
    %2075 = vmatprep.subr.mxu0 0.0
    %2076 = vmatpush1.msra.mxu0 %v72
    %2077 = vmatprep.subr.mxu0 0.0
    %2078 = vmatpush1.msra.mxu0 %v73
    %2079 = vmatprep.subr.mxu0 0.0
    %2080 = vmatpush1.msra.mxu0 %v74
    %2081 = vmatprep.subr.mxu0 0.0
    %2082 = vmatpush1.msra.mxu0 0.0
    %2083 = vmatprep.subr.mxu0 0.0
    %2084 = vmatpush1.msra.mxu0 0.0
    %2085 = vmatprep.subr.mxu0 0.0
    %2086 = vmatpush1.msra.mxu0 0.0
    %2087 = vmatprep.subr.mxu0 0.0
    %2088 = vmatpush1.msra.mxu0 0.0
    %2089 = vmatprep.subr.mxu0 0.0
    %2090 = vmatpush1.msra.mxu0 0.0
    %2091 = vmatprep.subr.mxu0 0.0
    %2092 = vmatpush1.msra.mxu0 0.0
    %2093 = vmatprep.subr.mxu0 0.0
    %2094 = vmatpush1.msra.mxu0 0.0
    %2095 = vmatprep.subr.mxu0 0.0
    %2096 = vmatpush1.msra.mxu0 0.0
    %2097 = vmatprep.subr.mxu0 0.0
    %2098 = vmatpush1.msra.mxu0 0.0
    %2099 = vmatprep.subr.mxu0 0.0
    %2100 = vmatpush1.msra.mxu0 0.0
    %2101 = vmatprep.subr.mxu0 0.0
    %2102 = vmatpush1.msra.mxu0 0.0
    %2103 = vmatprep.subr.mxu0 0.0
    %2104 = vmatpush1.msra.mxu0 0.0
    %2105 = vmatprep.subr.mxu0 0.0
    %2106 = vmatpush1.msra.mxu0 0.0
    %2107 = vmatprep.subr.mxu0 0.0
    %2108 = vmatpush1.msra.mxu0 0.0
    %2109 = vmatprep.subr.mxu0 0.0
    %2110 = vmatpush1.msra.mxu0 0.0
    %2111 = vmatprep.subr.mxu0 0.0
    %2112 = vmatpush1.msra.mxu0 0.0
    %2113 = vmatprep.subr.mxu0 0.0
    %2114 = vmatpush1.msra.mxu0 0.0
    %2115 = vmatprep.subr.mxu0 0.0
    %2116 = vmatpush1.msra.mxu0 0.0
    %2117 = vmatprep.subr.mxu0 0.0
    %2118 = vmatpush1.msra.mxu0 0.0
    %2119 = vmatprep.subr.mxu0 0.0
    %2120 = vmatpush1.msra.mxu0 0.0
    %2121 = vmatprep.subr.mxu0 0.0
    %2122 = vmatpush1.msra.mxu0 0.0
    %2123 = vmatprep.subr.mxu0 0.0
    %2124 = vmatpush1.msra.mxu0 0.0
    %2125 = vmatprep.subr.mxu0 0.0
    %2126 = vmatpush1.msra.mxu0 0.0
    %2127 = vmatprep.subr.mxu0 0.0
    %2128 = vmatpush1.msra.mxu0 0.0
    %2129 = vmatprep.subr.mxu0 0.0
    %2130 = vmatpush1.msra.mxu0 0.0
    %2131 = vmatprep.subr.mxu0 0.0
    %2132 = vmatpush1.msra.mxu0 0.0
    %2133 = vmatprep.subr.mxu0 0.0
    %2134 = vmatpush1.msra.mxu0 0.0
    %2135 = vmatprep.subr.mxu0 0.0
    %2136 = vmatpush1.msra.mxu0 0.0
    %2137 = vmatprep.mubr.f32.mxu0 0.0
    %2138 = vmatmul.mubr.f32.gmra.mrb[0].mxu0 %v2071
    %v2139 = vpop.f32.mrb[0].mxu0
    %v2140 = vadd.f32 0.0, %v2139
    %v2141 = vpop.f32.mrb[0].mxu0
    %2142 = vdwg.mxu0
    %v2144 = vsel %vm188, %v2069, 0
    %2146 = vmatprep.subr.mxu0 0.0
    %2147 = vmatpush1.msra.mxu0 %v63
    %2148 = vmatprep.subr.mxu0 0.0
    %2149 = vmatpush1.msra.mxu0 %v64
    %2150 = vmatprep.subr.mxu0 0.0
    %2151 = vmatpush1.msra.mxu0 %v65
    %2152 = vmatprep.subr.mxu0 0.0
    %2153 = vmatpush1.msra.mxu0 %v66
    %2154 = vmatprep.subr.mxu0 0.0
    %2155 = vmatpush1.msra.mxu0 0.0
    %2156 = vmatprep.subr.mxu0 0.0
    %2157 = vmatpush1.msra.mxu0 0.0
    %2158 = vmatprep.subr.mxu0 0.0
    %2159 = vmatpush1.msra.mxu0 0.0
    %2160 = vmatprep.subr.mxu0 0.0
    %2161 = vmatpush1.msra.mxu0 0.0
    %2162 = vmatprep.subr.mxu0 0.0
    %2163 = vmatpush1.msra.mxu0 0.0
    %2164 = vmatprep.subr.mxu0 0.0
    %2165 = vmatpush1.msra.mxu0 0.0
    %2166 = vmatprep.subr.mxu0 0.0
    %2167 = vmatpush1.msra.mxu0 0.0
    %2168 = vmatprep.subr.mxu0 0.0
    %2169 = vmatpush1.msra.mxu0 0.0
    %2170 = vmatprep.subr.mxu0 0.0
    %2171 = vmatpush1.msra.mxu0 0.0
    %2172 = vmatprep.subr.mxu0 0.0
    %2173 = vmatpush1.msra.mxu0 0.0
    %2174 = vmatprep.subr.mxu0 0.0
    %2175 = vmatpush1.msra.mxu0 0.0
    %2176 = vmatprep.subr.mxu0 0.0
    %2177 = vmatpush1.msra.mxu0 0.0
    %2178 = vmatprep.subr.mxu0 0.0
    %2179 = vmatpush1.msra.mxu0 0.0
    %2180 = vmatprep.subr.mxu0 0.0
    %2181 = vmatpush1.msra.mxu0 0.0
    %2182 = vmatprep.subr.mxu0 0.0
    %2183 = vmatpush1.msra.mxu0 0.0
    %2184 = vmatprep.subr.mxu0 0.0
    %2185 = vmatpush1.msra.mxu0 0.0
    %2186 = vmatprep.subr.mxu0 0.0
    %2187 = vmatpush1.msra.mxu0 0.0
    %2188 = vmatprep.subr.mxu0 0.0
    %2189 = vmatpush1.msra.mxu0 0.0
    %2190 = vmatprep.subr.mxu0 0.0
    %2191 = vmatpush1.msra.mxu0 0.0
    %2192 = vmatprep.subr.mxu0 0.0
    %2193 = vmatpush1.msra.mxu0 0.0
    %2194 = vmatprep.subr.mxu0 0.0
    %2195 = vmatpush1.msra.mxu0 0.0
    %2196 = vmatprep.subr.mxu0 0.0
    %2197 = vmatpush1.msra.mxu0 0.0
    %2198 = vmatprep.subr.mxu0 0.0
    %2199 = vmatpush1.msra.mxu0 0.0
    %2200 = vmatprep.subr.mxu0 0.0
    %2201 = vmatpush1.msra.mxu0 0.0
    %2202 = vmatprep.subr.mxu0 0.0
    %2203 = vmatpush1.msra.mxu0 0.0
    %2204 = vmatprep.subr.mxu0 0.0
    %2205 = vmatpush1.msra.mxu0 0.0
    %2206 = vmatprep.subr.mxu0 0.0
    %2207 = vmatpush1.msra.mxu0 0.0
    %2208 = vmatprep.subr.mxu0 0.0
    %2209 = vmatpush1.msra.mxu0 0.0
    %2210 = vmatprep.mubr.f32.mxu0 0.0
    %2211 = vmatmul.mubr.f32.gmra.mrb[0].mxu0 %v2144
    %v2212 = vpop.f32.mrb[0].mxu0
    %v2213 = vadd.f32 %v2140, %v2212
    %v2214 = vpop.f32.mrb[0].mxu0
    %2215 = vdwg.mxu0
    %v2216 = vadd.f32 %v2213, %v414
    %v2217 = vtanh.pop %v2216
    %s2218 = scalar_lea.vmem [#allocation7], 16
    %2219 = vst.msk [vmem:[%s2218] sm:$0x3] %vm418, %v2217
    %2220 = vmatprep.subr.mxu0 0.0
    %2221 = vmatpush1.msra.mxu0 %v67
    %2222 = vmatprep.subr.mxu0 0.0
    %2223 = vmatpush1.msra.mxu0 %v68
    %2224 = vmatprep.subr.mxu0 0.0
    %2225 = vmatpush1.msra.mxu0 %v69
    %2226 = vmatprep.subr.mxu0 0.0
    %2227 = vmatpush1.msra.mxu0 %v70
    %2228 = vmatprep.subr.mxu0 0.0
    %2229 = vmatpush1.msra.mxu0 0.0
    %2230 = vmatprep.subr.mxu0 0.0
    %2231 = vmatpush1.msra.mxu0 0.0
    %2232 = vmatprep.subr.mxu0 0.0
    %2233 = vmatpush1.msra.mxu0 0.0
    %2234 = vmatprep.subr.mxu0 0.0
    %2235 = vmatpush1.msra.mxu0 0.0
    %2236 = vmatprep.subr.mxu0 0.0
    %2237 = vmatpush1.msra.mxu0 0.0
    %2238 = vmatprep.subr.mxu0 0.0
    %2239 = vmatpush1.msra.mxu0 0.0
    %2240 = vmatprep.subr.mxu0 0.0
    %2241 = vmatpush1.msra.mxu0 0.0
    %2242 = vmatprep.subr.mxu0 0.0
    %2243 = vmatpush1.msra.mxu0 0.0
    %2244 = vmatprep.subr.mxu0 0.0
    %2245 = vmatpush1.msra.mxu0 0.0
    %2246 = vmatprep.subr.mxu0 0.0
    %2247 = vmatpush1.msra.mxu0 0.0
    %2248 = vmatprep.subr.mxu0 0.0
    %2249 = vmatpush1.msra.mxu0 0.0
    %2250 = vmatprep.subr.mxu0 0.0
    %2251 = vmatpush1.msra.mxu0 0.0
    %2252 = vmatprep.subr.mxu0 0.0
    %2253 = vmatpush1.msra.mxu0 0.0
    %2254 = vmatprep.subr.mxu0 0.0
    %2255 = vmatpush1.msra.mxu0 0.0
    %2256 = vmatprep.subr.mxu0 0.0
    %2257 = vmatpush1.msra.mxu0 0.0
    %2258 = vmatprep.subr.mxu0 0.0
    %2259 = vmatpush1.msra.mxu0 0.0
    %2260 = vmatprep.subr.mxu0 0.0
    %2261 = vmatpush1.msra.mxu0 0.0
    %2262 = vmatprep.subr.mxu0 0.0
    %2263 = vmatpush1.msra.mxu0 0.0
    %2264 = vmatprep.subr.mxu0 0.0
    %2265 = vmatpush1.msra.mxu0 0.0
    %2266 = vmatprep.subr.mxu0 0.0
    %2267 = vmatpush1.msra.mxu0 0.0
    %2268 = vmatprep.subr.mxu0 0.0
    %2269 = vmatpush1.msra.mxu0 0.0
    %2270 = vmatprep.subr.mxu0 0.0
    %2271 = vmatpush1.msra.mxu0 0.0
    %2272 = vmatprep.subr.mxu0 0.0
    %2273 = vmatpush1.msra.mxu0 0.0
    %2274 = vmatprep.subr.mxu0 0.0
    %2275 = vmatpush1.msra.mxu0 0.0
    %2276 = vmatprep.subr.mxu0 0.0
    %2277 = vmatpush1.msra.mxu0 0.0
    %2278 = vmatprep.subr.mxu0 0.0
    %2279 = vmatpush1.msra.mxu0 0.0
    %2280 = vmatprep.subr.mxu0 0.0
    %2281 = vmatpush1.msra.mxu0 0.0
    %2282 = vmatprep.subr.mxu0 0.0
    %2283 = vmatpush1.msra.mxu0 0.0
    %2284 = vmatprep.mubr.f32.mxu0 0.0
    %2285 = vmatmul.mubr.f32.gmra.mrb[0].mxu0 %v2144
    %v2286 = vpop.f32.mrb[0].mxu0
    %v2287 = vadd.f32 0.0, %v2286
    %v2288 = vpop.f32.mrb[0].mxu0
    %2289 = vdwg.mxu0
    %v2291 = vrot.slane %v2287, 6
    %v2293 = vadd.f32 %v180, %v2291
    %v2294 = vtanh.pop %v2293
    %v2296 = vsel %vm188, %v2217, 0
    %2298 = vmatprep.subr.mxu0 0.0
    %2299 = vmatpush1.msra.mxu0 %v71
    %2300 = vmatprep.subr.mxu0 0.0
    %2301 = vmatpush1.msra.mxu0 %v72
    %2302 = vmatprep.subr.mxu0 0.0
    %2303 = vmatpush1.msra.mxu0 %v73
    %2304 = vmatprep.subr.mxu0 0.0
    %2305 = vmatpush1.msra.mxu0 %v74
    %2306 = vmatprep.subr.mxu0 0.0
    %2307 = vmatpush1.msra.mxu0 0.0
    %2308 = vmatprep.subr.mxu0 0.0
    %2309 = vmatpush1.msra.mxu0 0.0
    %2310 = vmatprep.subr.mxu0 0.0
    %2311 = vmatpush1.msra.mxu0 0.0
    %2312 = vmatprep.subr.mxu0 0.0
    %2313 = vmatpush1.msra.mxu0 0.0
    %2314 = vmatprep.subr.mxu0 0.0
    %2315 = vmatpush1.msra.mxu0 0.0
    %2316 = vmatprep.subr.mxu0 0.0
    %2317 = vmatpush1.msra.mxu0 0.0
    %2318 = vmatprep.subr.mxu0 0.0
    %2319 = vmatpush1.msra.mxu0 0.0
    %2320 = vmatprep.subr.mxu0 0.0
    %2321 = vmatpush1.msra.mxu0 0.0
    %2322 = vmatprep.subr.mxu0 0.0
    %2323 = vmatpush1.msra.mxu0 0.0
    %2324 = vmatprep.subr.mxu0 0.0
    %2325 = vmatpush1.msra.mxu0 0.0
    %2326 = vmatprep.subr.mxu0 0.0
    %2327 = vmatpush1.msra.mxu0 0.0
    %2328 = vmatprep.subr.mxu0 0.0
    %2329 = vmatpush1.msra.mxu0 0.0
    %2330 = vmatprep.subr.mxu0 0.0
    %2331 = vmatpush1.msra.mxu0 0.0
    %2332 = vmatprep.subr.mxu0 0.0
    %2333 = vmatpush1.msra.mxu0 0.0
    %2334 = vmatprep.subr.mxu0 0.0
    %2335 = vmatpush1.msra.mxu0 0.0
    %2336 = vmatprep.subr.mxu0 0.0
    %2337 = vmatpush1.msra.mxu0 0.0
    %2338 = vmatprep.subr.mxu0 0.0
    %2339 = vmatpush1.msra.mxu0 0.0
    %2340 = vmatprep.subr.mxu0 0.0
    %2341 = vmatpush1.msra.mxu0 0.0
    %2342 = vmatprep.subr.mxu0 0.0
    %2343 = vmatpush1.msra.mxu0 0.0
    %2344 = vmatprep.subr.mxu0 0.0
    %2345 = vmatpush1.msra.mxu0 0.0
    %2346 = vmatprep.subr.mxu0 0.0
    %2347 = vmatpush1.msra.mxu0 0.0
    %2348 = vmatprep.subr.mxu0 0.0
    %2349 = vmatpush1.msra.mxu0 0.0
    %2350 = vmatprep.subr.mxu0 0.0
    %2351 = vmatpush1.msra.mxu0 0.0
    %2352 = vmatprep.subr.mxu0 0.0
    %2353 = vmatpush1.msra.mxu0 0.0
    %2354 = vmatprep.subr.mxu0 0.0
    %2355 = vmatpush1.msra.mxu0 0.0
    %2356 = vmatprep.subr.mxu0 0.0
    %2357 = vmatpush1.msra.mxu0 0.0
    %2358 = vmatprep.subr.mxu0 0.0
    %2359 = vmatpush1.msra.mxu0 0.0
    %2360 = vmatprep.subr.mxu0 0.0
    %2361 = vmatpush1.msra.mxu0 0.0
    %2362 = vmatprep.mubr.f32.mxu0 0.0
    %2363 = vmatmul.mubr.f32.gmra.mrb[0].mxu0 %v2296
    %v2364 = vpop.f32.mrb[0].mxu0
    %v2365 = vadd.f32 0.0, %v2364
    %v2366 = vpop.f32.mrb[0].mxu0
    %2367 = vdwg.mxu0
    %v2369 = vrot.slane %v2294, 2
    %v2370 = vsel %vm188, %v2369, 0
    %2372 = vmatprep.subr.mxu0 0.0
    %2373 = vmatpush1.msra.mxu0 %v63
    %2374 = vmatprep.subr.mxu0 0.0
    %2375 = vmatpush1.msra.mxu0 %v64
    %2376 = vmatprep.subr.mxu0 0.0
    %2377 = vmatpush1.msra.mxu0 %v65
    %2378 = vmatprep.subr.mxu0 0.0
    %2379 = vmatpush1.msra.mxu0 %v66
    %2380 = vmatprep.subr.mxu0 0.0
    %2381 = vmatpush1.msra.mxu0 0.0
    %2382 = vmatprep.subr.mxu0 0.0
    %2383 = vmatpush1.msra.mxu0 0.0
    %2384 = vmatprep.subr.mxu0 0.0
    %2385 = vmatpush1.msra.mxu0 0.0
    %2386 = vmatprep.subr.mxu0 0.0
    %2387 = vmatpush1.msra.mxu0 0.0
    %2388 = vmatprep.subr.mxu0 0.0
    %2389 = vmatpush1.msra.mxu0 0.0
    %2390 = vmatprep.subr.mxu0 0.0
    %2391 = vmatpush1.msra.mxu0 0.0
    %2392 = vmatprep.subr.mxu0 0.0
    %2393 = vmatpush1.msra.mxu0 0.0
    %2394 = vmatprep.subr.mxu0 0.0
    %2395 = vmatpush1.msra.mxu0 0.0
    %2396 = vmatprep.subr.mxu0 0.0
    %2397 = vmatpush1.msra.mxu0 0.0
    %2398 = vmatprep.subr.mxu0 0.0
    %2399 = vmatpush1.msra.mxu0 0.0
    %2400 = vmatprep.subr.mxu0 0.0
    %2401 = vmatpush1.msra.mxu0 0.0
    %2402 = vmatprep.subr.mxu0 0.0
    %2403 = vmatpush1.msra.mxu0 0.0
    %2404 = vmatprep.subr.mxu0 0.0
    %2405 = vmatpush1.msra.mxu0 0.0
    %2406 = vmatprep.subr.mxu0 0.0
    %2407 = vmatpush1.msra.mxu0 0.0
    %2408 = vmatprep.subr.mxu0 0.0
    %2409 = vmatpush1.msra.mxu0 0.0
    %2410 = vmatprep.subr.mxu0 0.0
    %2411 = vmatpush1.msra.mxu0 0.0
    %2412 = vmatprep.subr.mxu0 0.0
    %2413 = vmatpush1.msra.mxu0 0.0
    %2414 = vmatprep.subr.mxu0 0.0
    %2415 = vmatpush1.msra.mxu0 0.0
    %2416 = vmatprep.subr.mxu0 0.0
    %2417 = vmatpush1.msra.mxu0 0.0
    %2418 = vmatprep.subr.mxu0 0.0
    %2419 = vmatpush1.msra.mxu0 0.0
    %2420 = vmatprep.subr.mxu0 0.0
    %2421 = vmatpush1.msra.mxu0 0.0
    %2422 = vmatprep.subr.mxu0 0.0
    %2423 = vmatpush1.msra.mxu0 0.0
    %2424 = vmatprep.subr.mxu0 0.0
    %2425 = vmatpush1.msra.mxu0 0.0
    %2426 = vmatprep.subr.mxu0 0.0
    %2427 = vmatpush1.msra.mxu0 0.0
    %2428 = vmatprep.subr.mxu0 0.0
    %2429 = vmatpush1.msra.mxu0 0.0
    %2430 = vmatprep.subr.mxu0 0.0
    %2431 = vmatpush1.msra.mxu0 0.0
    %2432 = vmatprep.subr.mxu0 0.0
    %2433 = vmatpush1.msra.mxu0 0.0
    %2434 = vmatprep.subr.mxu0 0.0
    %2435 = vmatpush1.msra.mxu0 0.0
    %2436 = vmatprep.mubr.f32.mxu0 0.0
    %2437 = vmatmul.mubr.f32.gmra.mrb[0].mxu0 %v2370
    %v2438 = vpop.f32.mrb[0].mxu0
    %v2439 = vadd.f32 %v2365, %v2438
    %v2440 = vpop.f32.mrb[0].mxu0
    %2441 = vdwg.mxu0
    %v2442 = vadd.f32 %v2439, %v414
    %v2443 = vtanh.pop %v2442
    %s2444 = scalar_lea.vmem [#allocation7], 18
    %2445 = vst.msk [vmem:[%s2444] sm:$0x3] %vm418, %v2443
    %2446 = vmatprep.subr.mxu0 0.0
    %2447 = vmatpush1.msra.mxu0 %v67
    %2448 = vmatprep.subr.mxu0 0.0
    %2449 = vmatpush1.msra.mxu0 %v68
    %2450 = vmatprep.subr.mxu0 0.0
    %2451 = vmatpush1.msra.mxu0 %v69
    %2452 = vmatprep.subr.mxu0 0.0
    %2453 = vmatpush1.msra.mxu0 %v70
    %2454 = vmatprep.subr.mxu0 0.0
    %2455 = vmatpush1.msra.mxu0 0.0
    %2456 = vmatprep.subr.mxu0 0.0
    %2457 = vmatpush1.msra.mxu0 0.0
    %2458 = vmatprep.subr.mxu0 0.0
    %2459 = vmatpush1.msra.mxu0 0.0
    %2460 = vmatprep.subr.mxu0 0.0
    %2461 = vmatpush1.msra.mxu0 0.0
    %2462 = vmatprep.subr.mxu0 0.0
    %2463 = vmatpush1.msra.mxu0 0.0
    %2464 = vmatprep.subr.mxu0 0.0
    %2465 = vmatpush1.msra.mxu0 0.0
    %2466 = vmatprep.subr.mxu0 0.0
    %2467 = vmatpush1.msra.mxu0 0.0
    %2468 = vmatprep.subr.mxu0 0.0
    %2469 = vmatpush1.msra.mxu0 0.0
    %2470 = vmatprep.subr.mxu0 0.0
    %2471 = vmatpush1.msra.mxu0 0.0
    %2472 = vmatprep.subr.mxu0 0.0
    %2473 = vmatpush1.msra.mxu0 0.0
    %2474 = vmatprep.subr.mxu0 0.0
    %2475 = vmatpush1.msra.mxu0 0.0
    %2476 = vmatprep.subr.mxu0 0.0
    %2477 = vmatpush1.msra.mxu0 0.0
    %2478 = vmatprep.subr.mxu0 0.0
    %2479 = vmatpush1.msra.mxu0 0.0
    %2480 = vmatprep.subr.mxu0 0.0
    %2481 = vmatpush1.msra.mxu0 0.0
    %2482 = vmatprep.subr.mxu0 0.0
    %2483 = vmatpush1.msra.mxu0 0.0
    %2484 = vmatprep.subr.mxu0 0.0
    %2485 = vmatpush1.msra.mxu0 0.0
    %2486 = vmatprep.subr.mxu0 0.0
    %2487 = vmatpush1.msra.mxu0 0.0
    %2488 = vmatprep.subr.mxu0 0.0
    %2489 = vmatpush1.msra.mxu0 0.0
    %2490 = vmatprep.subr.mxu0 0.0
    %2491 = vmatpush1.msra.mxu0 0.0
    %2492 = vmatprep.subr.mxu0 0.0
    %2493 = vmatpush1.msra.mxu0 0.0
    %2494 = vmatprep.subr.mxu0 0.0
    %2495 = vmatpush1.msra.mxu0 0.0
    %2496 = vmatprep.subr.mxu0 0.0
    %2497 = vmatpush1.msra.mxu0 0.0
    %2498 = vmatprep.subr.mxu0 0.0
    %2499 = vmatpush1.msra.mxu0 0.0
    %2500 = vmatprep.subr.mxu0 0.0
    %2501 = vmatpush1.msra.mxu0 0.0
    %2502 = vmatprep.subr.mxu0 0.0
    %2503 = vmatpush1.msra.mxu0 0.0
    %2504 = vmatprep.subr.mxu0 0.0
    %2505 = vmatpush1.msra.mxu0 0.0
    %2506 = vmatprep.subr.mxu0 0.0
    %2507 = vmatpush1.msra.mxu0 0.0
    %2508 = vmatprep.subr.mxu0 0.0
    %2509 = vmatpush1.msra.mxu0 0.0
    %2510 = vmatprep.mubr.f32.mxu0 0.0
    %2511 = vmatmul.mubr.f32.gmra.mrb[0].mxu0 %v2370
    %v2512 = vpop.f32.mrb[0].mxu0
    %v2513 = vadd.f32 0.0, %v2512
    %v2514 = vpop.f32.mrb[0].mxu0
    %2515 = vdwg.mxu0
    %v2517 = vrot.slane %v2513, 4
    %v2519 = vadd.f32 %v180, %v2517
    %v2520 = vtanh.pop %v2519
    %v2522 = vsel %vm188, %v2443, 0
    %2524 = vmatprep.subr.mxu0 0.0
    %2525 = vmatpush1.msra.mxu0 %v71
    %2526 = vmatprep.subr.mxu0 0.0
    %2527 = vmatpush1.msra.mxu0 %v72
    %2528 = vmatprep.subr.mxu0 0.0
    %2529 = vmatpush1.msra.mxu0 %v73
    %2530 = vmatprep.subr.mxu0 0.0
    %2531 = vmatpush1.msra.mxu0 %v74
    %2532 = vmatprep.subr.mxu0 0.0
    %2533 = vmatpush1.msra.mxu0 0.0
    %2534 = vmatprep.subr.mxu0 0.0
    %2535 = vmatpush1.msra.mxu0 0.0
    %2536 = vmatprep.subr.mxu0 0.0
    %2537 = vmatpush1.msra.mxu0 0.0
    %2538 = vmatprep.subr.mxu0 0.0
    %2539 = vmatpush1.msra.mxu0 0.0
    %2540 = vmatprep.subr.mxu0 0.0
    %2541 = vmatpush1.msra.mxu0 0.0
    %2542 = vmatprep.subr.mxu0 0.0
    %2543 = vmatpush1.msra.mxu0 0.0
    %2544 = vmatprep.subr.mxu0 0.0
    %2545 = vmatpush1.msra.mxu0 0.0
    %2546 = vmatprep.subr.mxu0 0.0
    %2547 = vmatpush1.msra.mxu0 0.0
    %2548 = vmatprep.subr.mxu0 0.0
    %2549 = vmatpush1.msra.mxu0 0.0
    %2550 = vmatprep.subr.mxu0 0.0
    %2551 = vmatpush1.msra.mxu0 0.0
    %2552 = vmatprep.subr.mxu0 0.0
    %2553 = vmatpush1.msra.mxu0 0.0
    %2554 = vmatprep.subr.mxu0 0.0
    %2555 = vmatpush1.msra.mxu0 0.0
    %2556 = vmatprep.subr.mxu0 0.0
    %2557 = vmatpush1.msra.mxu0 0.0
    %2558 = vmatprep.subr.mxu0 0.0
    %2559 = vmatpush1.msra.mxu0 0.0
    %2560 = vmatprep.subr.mxu0 0.0
    %2561 = vmatpush1.msra.mxu0 0.0
    %2562 = vmatprep.subr.mxu0 0.0
    %2563 = vmatpush1.msra.mxu0 0.0
    %2564 = vmatprep.subr.mxu0 0.0
    %2565 = vmatpush1.msra.mxu0 0.0
    %2566 = vmatprep.subr.mxu0 0.0
    %2567 = vmatpush1.msra.mxu0 0.0
    %2568 = vmatprep.subr.mxu0 0.0
    %2569 = vmatpush1.msra.mxu0 0.0
    %2570 = vmatprep.subr.mxu0 0.0
    %2571 = vmatpush1.msra.mxu0 0.0
    %2572 = vmatprep.subr.mxu0 0.0
    %2573 = vmatpush1.msra.mxu0 0.0
    %2574 = vmatprep.subr.mxu0 0.0
    %2575 = vmatpush1.msra.mxu0 0.0
    %2576 = vmatprep.subr.mxu0 0.0
    %2577 = vmatpush1.msra.mxu0 0.0
    %2578 = vmatprep.subr.mxu0 0.0
    %2579 = vmatpush1.msra.mxu0 0.0
    %2580 = vmatprep.subr.mxu0 0.0
    %2581 = vmatpush1.msra.mxu0 0.0
    %2582 = vmatprep.subr.mxu0 0.0
    %2583 = vmatpush1.msra.mxu0 0.0
    %2584 = vmatprep.subr.mxu0 0.0
    %2585 = vmatpush1.msra.mxu0 0.0
    %2586 = vmatprep.subr.mxu0 0.0
    %2587 = vmatpush1.msra.mxu0 0.0
    %2588 = vmatprep.mubr.f32.mxu0 0.0
    %2589 = vmatmul.mubr.f32.gmra.mrb[0].mxu0 %v2522
    %v2590 = vpop.f32.mrb[0].mxu0
    %v2591 = vadd.f32 0.0, %v2590
    %v2592 = vpop.f32.mrb[0].mxu0
    %2593 = vdwg.mxu0
    %v2595 = vrot.slane %v2520, 4
    %v2596 = vsel %vm188, %v2595, 0
    %2598 = vmatprep.subr.mxu0 0.0
    %2599 = vmatpush1.msra.mxu0 %v63
    %2600 = vmatprep.subr.mxu0 0.0
    %2601 = vmatpush1.msra.mxu0 %v64
    %2602 = vmatprep.subr.mxu0 0.0
    %2603 = vmatpush1.msra.mxu0 %v65
    %2604 = vmatprep.subr.mxu0 0.0
    %2605 = vmatpush1.msra.mxu0 %v66
    %2606 = vmatprep.subr.mxu0 0.0
    %2607 = vmatpush1.msra.mxu0 0.0
    %2608 = vmatprep.subr.mxu0 0.0
    %2609 = vmatpush1.msra.mxu0 0.0
    %2610 = vmatprep.subr.mxu0 0.0
    %2611 = vmatpush1.msra.mxu0 0.0
    %2612 = vmatprep.subr.mxu0 0.0
    %2613 = vmatpush1.msra.mxu0 0.0
    %2614 = vmatprep.subr.mxu0 0.0
    %2615 = vmatpush1.msra.mxu0 0.0
    %2616 = vmatprep.subr.mxu0 0.0
    %2617 = vmatpush1.msra.mxu0 0.0
    %2618 = vmatprep.subr.mxu0 0.0
    %2619 = vmatpush1.msra.mxu0 0.0
    %2620 = vmatprep.subr.mxu0 0.0
    %2621 = vmatpush1.msra.mxu0 0.0
    %2622 = vmatprep.subr.mxu0 0.0
    %2623 = vmatpush1.msra.mxu0 0.0
    %2624 = vmatprep.subr.mxu0 0.0
    %2625 = vmatpush1.msra.mxu0 0.0
    %2626 = vmatprep.subr.mxu0 0.0
    %2627 = vmatpush1.msra.mxu0 0.0
    %2628 = vmatprep.subr.mxu0 0.0
    %2629 = vmatpush1.msra.mxu0 0.0
    %2630 = vmatprep.subr.mxu0 0.0
    %2631 = vmatpush1.msra.mxu0 0.0
    %2632 = vmatprep.subr.mxu0 0.0
    %2633 = vmatpush1.msra.mxu0 0.0
    %2634 = vmatprep.subr.mxu0 0.0
    %2635 = vmatpush1.msra.mxu0 0.0
    %2636 = vmatprep.subr.mxu0 0.0
    %2637 = vmatpush1.msra.mxu0 0.0
    %2638 = vmatprep.subr.mxu0 0.0
    %2639 = vmatpush1.msra.mxu0 0.0
    %2640 = vmatprep.subr.mxu0 0.0
    %2641 = vmatpush1.msra.mxu0 0.0
    %2642 = vmatprep.subr.mxu0 0.0
    %2643 = vmatpush1.msra.mxu0 0.0
    %2644 = vmatprep.subr.mxu0 0.0
    %2645 = vmatpush1.msra.mxu0 0.0
    %2646 = vmatprep.subr.mxu0 0.0
    %2647 = vmatpush1.msra.mxu0 0.0
    %2648 = vmatprep.subr.mxu0 0.0
    %2649 = vmatpush1.msra.mxu0 0.0
    %2650 = vmatprep.subr.mxu0 0.0
    %2651 = vmatpush1.msra.mxu0 0.0
    %2652 = vmatprep.subr.mxu0 0.0
    %2653 = vmatpush1.msra.mxu0 0.0
    %2654 = vmatprep.subr.mxu0 0.0
    %2655 = vmatpush1.msra.mxu0 0.0
    %2656 = vmatprep.subr.mxu0 0.0
    %2657 = vmatpush1.msra.mxu0 0.0
    %2658 = vmatprep.subr.mxu0 0.0
    %2659 = vmatpush1.msra.mxu0 0.0
    %2660 = vmatprep.subr.mxu0 0.0
    %2661 = vmatpush1.msra.mxu0 0.0
    %2662 = vmatprep.mubr.f32.mxu0 0.0
    %2663 = vmatmul.mubr.f32.gmra.mrb[0].mxu0 %v2596
    %v2664 = vpop.f32.mrb[0].mxu0
    %v2665 = vadd.f32 %v2591, %v2664
    %v2666 = vpop.f32.mrb[0].mxu0
    %2667 = vdwg.mxu0
    %v2668 = vadd.f32 %v2665, %v414
    %v2669 = vtanh.pop %v2668
    %s2670 = scalar_lea.vmem [#allocation7], 20
    %2671 = vst.msk [vmem:[%s2670] sm:$0x3] %vm418, %v2669
    %2672 = vmatprep.subr.mxu0 0.0
    %2673 = vmatpush1.msra.mxu0 %v67
    %2674 = vmatprep.subr.mxu0 0.0
    %2675 = vmatpush1.msra.mxu0 %v68
    %2676 = vmatprep.subr.mxu0 0.0
    %2677 = vmatpush1.msra.mxu0 %v69
    %2678 = vmatprep.subr.mxu0 0.0
    %2679 = vmatpush1.msra.mxu0 %v70
    %2680 = vmatprep.subr.mxu0 0.0
    %2681 = vmatpush1.msra.mxu0 0.0
    %2682 = vmatprep.subr.mxu0 0.0
    %2683 = vmatpush1.msra.mxu0 0.0
    %2684 = vmatprep.subr.mxu0 0.0
    %2685 = vmatpush1.msra.mxu0 0.0
    %2686 = vmatprep.subr.mxu0 0.0
    %2687 = vmatpush1.msra.mxu0 0.0
    %2688 = vmatprep.subr.mxu0 0.0
    %2689 = vmatpush1.msra.mxu0 0.0
    %2690 = vmatprep.subr.mxu0 0.0
    %2691 = vmatpush1.msra.mxu0 0.0
    %2692 = vmatprep.subr.mxu0 0.0
    %2693 = vmatpush1.msra.mxu0 0.0
    %2694 = vmatprep.subr.mxu0 0.0
    %2695 = vmatpush1.msra.mxu0 0.0
    %2696 = vmatprep.subr.mxu0 0.0
    %2697 = vmatpush1.msra.mxu0 0.0
    %2698 = vmatprep.subr.mxu0 0.0
    %2699 = vmatpush1.msra.mxu0 0.0
    %2700 = vmatprep.subr.mxu0 0.0
    %2701 = vmatpush1.msra.mxu0 0.0
    %2702 = vmatprep.subr.mxu0 0.0
    %2703 = vmatpush1.msra.mxu0 0.0
    %2704 = vmatprep.subr.mxu0 0.0
    %2705 = vmatpush1.msra.mxu0 0.0
    %2706 = vmatprep.subr.mxu0 0.0
    %2707 = vmatpush1.msra.mxu0 0.0
    %2708 = vmatprep.subr.mxu0 0.0
    %2709 = vmatpush1.msra.mxu0 0.0
    %2710 = vmatprep.subr.mxu0 0.0
    %2711 = vmatpush1.msra.mxu0 0.0
    %2712 = vmatprep.subr.mxu0 0.0
    %2713 = vmatpush1.msra.mxu0 0.0
    %2714 = vmatprep.subr.mxu0 0.0
    %2715 = vmatpush1.msra.mxu0 0.0
    %2716 = vmatprep.subr.mxu0 0.0
    %2717 = vmatpush1.msra.mxu0 0.0
    %2718 = vmatprep.subr.mxu0 0.0
    %2719 = vmatpush1.msra.mxu0 0.0
    %2720 = vmatprep.subr.mxu0 0.0
    %2721 = vmatpush1.msra.mxu0 0.0
    %2722 = vmatprep.subr.mxu0 0.0
    %2723 = vmatpush1.msra.mxu0 0.0
    %2724 = vmatprep.subr.mxu0 0.0
    %2725 = vmatpush1.msra.mxu0 0.0
    %2726 = vmatprep.subr.mxu0 0.0
    %2727 = vmatpush1.msra.mxu0 0.0
    %2728 = vmatprep.subr.mxu0 0.0
    %2729 = vmatpush1.msra.mxu0 0.0
    %2730 = vmatprep.subr.mxu0 0.0
    %2731 = vmatpush1.msra.mxu0 0.0
    %2732 = vmatprep.subr.mxu0 0.0
    %2733 = vmatpush1.msra.mxu0 0.0
    %2734 = vmatprep.subr.mxu0 0.0
    %2735 = vmatpush1.msra.mxu0 0.0
    %2736 = vmatprep.mubr.f32.mxu0 0.0
    %2737 = vmatmul.mubr.f32.gmra.mrb[0].mxu0 %v2596
    %v2738 = vpop.f32.mrb[0].mxu0
    %v2739 = vadd.f32 0.0, %v2738
    %v2740 = vpop.f32.mrb[0].mxu0
    %2741 = vdwg.mxu0
    %v2743 = vrot.slane %v2739, 2
    %v2745 = vadd.f32 %v180, %v2743
    %v2746 = vtanh.pop %v2745
    %v2748 = vsel %vm188, %v2669, 0
    %2750 = vmatprep.subr.mxu0 0.0
    %2751 = vmatpush1.msra.mxu0 %v71
    %2752 = vmatprep.subr.mxu0 0.0
    %2753 = vmatpush1.msra.mxu0 %v72
    %2754 = vmatprep.subr.mxu0 0.0
    %2755 = vmatpush1.msra.mxu0 %v73
    %2756 = vmatprep.subr.mxu0 0.0
    %2757 = vmatpush1.msra.mxu0 %v74
    %2758 = vmatprep.subr.mxu0 0.0
    %2759 = vmatpush1.msra.mxu0 0.0
    %2760 = vmatprep.subr.mxu0 0.0
    %2761 = vmatpush1.msra.mxu0 0.0
    %2762 = vmatprep.subr.mxu0 0.0
    %2763 = vmatpush1.msra.mxu0 0.0
    %2764 = vmatprep.subr.mxu0 0.0
    %2765 = vmatpush1.msra.mxu0 0.0
    %2766 = vmatprep.subr.mxu0 0.0
    %2767 = vmatpush1.msra.mxu0 0.0
    %2768 = vmatprep.subr.mxu0 0.0
    %2769 = vmatpush1.msra.mxu0 0.0
    %2770 = vmatprep.subr.mxu0 0.0
    %2771 = vmatpush1.msra.mxu0 0.0
    %2772 = vmatprep.subr.mxu0 0.0
    %2773 = vmatpush1.msra.mxu0 0.0
    %2774 = vmatprep.subr.mxu0 0.0
    %2775 = vmatpush1.msra.mxu0 0.0
    %2776 = vmatprep.subr.mxu0 0.0
    %2777 = vmatpush1.msra.mxu0 0.0
    %2778 = vmatprep.subr.mxu0 0.0
    %2779 = vmatpush1.msra.mxu0 0.0
    %2780 = vmatprep.subr.mxu0 0.0
    %2781 = vmatpush1.msra.mxu0 0.0
    %2782 = vmatprep.subr.mxu0 0.0
    %2783 = vmatpush1.msra.mxu0 0.0
    %2784 = vmatprep.subr.mxu0 0.0
    %2785 = vmatpush1.msra.mxu0 0.0
    %2786 = vmatprep.subr.mxu0 0.0
    %2787 = vmatpush1.msra.mxu0 0.0
    %2788 = vmatprep.subr.mxu0 0.0
    %2789 = vmatpush1.msra.mxu0 0.0
    %2790 = vmatprep.subr.mxu0 0.0
    %2791 = vmatpush1.msra.mxu0 0.0
    %2792 = vmatprep.subr.mxu0 0.0
    %2793 = vmatpush1.msra.mxu0 0.0
    %2794 = vmatprep.subr.mxu0 0.0
    %2795 = vmatpush1.msra.mxu0 0.0
    %2796 = vmatprep.subr.mxu0 0.0
    %2797 = vmatpush1.msra.mxu0 0.0
    %2798 = vmatprep.subr.mxu0 0.0
    %2799 = vmatpush1.msra.mxu0 0.0
    %2800 = vmatprep.subr.mxu0 0.0
    %2801 = vmatpush1.msra.mxu0 0.0
    %2802 = vmatprep.subr.mxu0 0.0
    %2803 = vmatpush1.msra.mxu0 0.0
    %2804 = vmatprep.subr.mxu0 0.0
    %2805 = vmatpush1.msra.mxu0 0.0
    %2806 = vmatprep.subr.mxu0 0.0
    %2807 = vmatpush1.msra.mxu0 0.0
    %2808 = vmatprep.subr.mxu0 0.0
    %2809 = vmatpush1.msra.mxu0 0.0
    %2810 = vmatprep.subr.mxu0 0.0
    %2811 = vmatpush1.msra.mxu0 0.0
    %2812 = vmatprep.subr.mxu0 0.0
    %2813 = vmatpush1.msra.mxu0 0.0
    %2814 = vmatprep.mubr.f32.mxu0 0.0
    %2815 = vmatmul.mubr.f32.gmra.mrb[0].mxu0 %v2748
    %v2816 = vpop.f32.mrb[0].mxu0
    %v2817 = vadd.f32 0.0, %v2816
    %v2818 = vpop.f32.mrb[0].mxu0
    %2819 = vdwg.mxu0
    %v2821 = vrot.slane %v2746, 6
    %v2822 = vsel %vm188, %v2821, 0
    %2824 = vmatprep.subr.mxu0 0.0
    %2825 = vmatpush1.msra.mxu0 %v63
    %2826 = vmatprep.subr.mxu0 0.0
    %2827 = vmatpush1.msra.mxu0 %v64
    %2828 = vmatprep.subr.mxu0 0.0
    %2829 = vmatpush1.msra.mxu0 %v65
    %2830 = vmatprep.subr.mxu0 0.0
    %2831 = vmatpush1.msra.mxu0 %v66
    %2832 = vmatprep.subr.mxu0 0.0
    %2833 = vmatpush1.msra.mxu0 0.0
    %2834 = vmatprep.subr.mxu0 0.0
    %2835 = vmatpush1.msra.mxu0 0.0
    %2836 = vmatprep.subr.mxu0 0.0
    %2837 = vmatpush1.msra.mxu0 0.0
    %2838 = vmatprep.subr.mxu0 0.0
    %2839 = vmatpush1.msra.mxu0 0.0
    %2840 = vmatprep.subr.mxu0 0.0
    %2841 = vmatpush1.msra.mxu0 0.0
    %2842 = vmatprep.subr.mxu0 0.0
    %2843 = vmatpush1.msra.mxu0 0.0
    %2844 = vmatprep.subr.mxu0 0.0
    %2845 = vmatpush1.msra.mxu0 0.0
    %2846 = vmatprep.subr.mxu0 0.0
    %2847 = vmatpush1.msra.mxu0 0.0
    %2848 = vmatprep.subr.mxu0 0.0
    %2849 = vmatpush1.msra.mxu0 0.0
    %2850 = vmatprep.subr.mxu0 0.0
    %2851 = vmatpush1.msra.mxu0 0.0
    %2852 = vmatprep.subr.mxu0 0.0
    %2853 = vmatpush1.msra.mxu0 0.0
    %2854 = vmatprep.subr.mxu0 0.0
    %2855 = vmatpush1.msra.mxu0 0.0
    %2856 = vmatprep.subr.mxu0 0.0
    %2857 = vmatpush1.msra.mxu0 0.0
    %2858 = vmatprep.subr.mxu0 0.0
    %2859 = vmatpush1.msra.mxu0 0.0
    %2860 = vmatprep.subr.mxu0 0.0
    %2861 = vmatpush1.msra.mxu0 0.0
    %2862 = vmatprep.subr.mxu0 0.0
    %2863 = vmatpush1.msra.mxu0 0.0
    %2864 = vmatprep.subr.mxu0 0.0
    %2865 = vmatpush1.msra.mxu0 0.0
    %2866 = vmatprep.subr.mxu0 0.0
    %2867 = vmatpush1.msra.mxu0 0.0
    %2868 = vmatprep.subr.mxu0 0.0
    %2869 = vmatpush1.msra.mxu0 0.0
    %2870 = vmatprep.subr.mxu0 0.0
    %2871 = vmatpush1.msra.mxu0 0.0
    %2872 = vmatprep.subr.mxu0 0.0
    %2873 = vmatpush1.msra.mxu0 0.0
    %2874 = vmatprep.subr.mxu0 0.0
    %2875 = vmatpush1.msra.mxu0 0.0
    %2876 = vmatprep.subr.mxu0 0.0
    %2877 = vmatpush1.msra.mxu0 0.0
    %2878 = vmatprep.subr.mxu0 0.0
    %2879 = vmatpush1.msra.mxu0 0.0
    %2880 = vmatprep.subr.mxu0 0.0
    %2881 = vmatpush1.msra.mxu0 0.0
    %2882 = vmatprep.subr.mxu0 0.0
    %2883 = vmatpush1.msra.mxu0 0.0
    %2884 = vmatprep.subr.mxu0 0.0
    %2885 = vmatpush1.msra.mxu0 0.0
    %2886 = vmatprep.subr.mxu0 0.0
    %2887 = vmatpush1.msra.mxu0 0.0
    %2888 = vmatprep.mubr.f32.mxu0 0.0
    %2889 = vmatmul.mubr.f32.gmra.mrb[0].mxu0 %v2822
    %v2890 = vpop.f32.mrb[0].mxu0
    %v2891 = vadd.f32 %v2817, %v2890
    %v2892 = vpop.f32.mrb[0].mxu0
    %2893 = vdwg.mxu0
    %v2894 = vadd.f32 %v2891, %v414
    %v2895 = vtanh.pop %v2894
    %s2896 = scalar_lea.vmem [#allocation7], 22
    %2897 = vst.msk [vmem:[%s2896] sm:$0x3] %vm418, %v2895
    %2898 = vmatprep.subr.mxu0 0.0
    %2899 = vmatpush1.msra.mxu0 %v67
    %2900 = vmatprep.subr.mxu0 0.0
    %2901 = vmatpush1.msra.mxu0 %v68
    %2902 = vmatprep.subr.mxu0 0.0
    %2903 = vmatpush1.msra.mxu0 %v69
    %2904 = vmatprep.subr.mxu0 0.0
    %2905 = vmatpush1.msra.mxu0 %v70
    %2906 = vmatprep.subr.mxu0 0.0
    %2907 = vmatpush1.msra.mxu0 0.0
    %2908 = vmatprep.subr.mxu0 0.0
    %2909 = vmatpush1.msra.mxu0 0.0
    %2910 = vmatprep.subr.mxu0 0.0
    %2911 = vmatpush1.msra.mxu0 0.0
    %2912 = vmatprep.subr.mxu0 0.0
    %2913 = vmatpush1.msra.mxu0 0.0
    %2914 = vmatprep.subr.mxu0 0.0
    %2915 = vmatpush1.msra.mxu0 0.0
    %2916 = vmatprep.subr.mxu0 0.0
    %2917 = vmatpush1.msra.mxu0 0.0
    %2918 = vmatprep.subr.mxu0 0.0
    %2919 = vmatpush1.msra.mxu0 0.0
    %2920 = vmatprep.subr.mxu0 0.0
    %2921 = vmatpush1.msra.mxu0 0.0
    %2922 = vmatprep.subr.mxu0 0.0
    %2923 = vmatpush1.msra.mxu0 0.0
    %2924 = vmatprep.subr.mxu0 0.0
    %2925 = vmatpush1.msra.mxu0 0.0
    %2926 = vmatprep.subr.mxu0 0.0
    %2927 = vmatpush1.msra.mxu0 0.0
    %2928 = vmatprep.subr.mxu0 0.0
    %2929 = vmatpush1.msra.mxu0 0.0
    %2930 = vmatprep.subr.mxu0 0.0
    %2931 = vmatpush1.msra.mxu0 0.0
    %2932 = vmatprep.subr.mxu0 0.0
    %2933 = vmatpush1.msra.mxu0 0.0
    %2934 = vmatprep.subr.mxu0 0.0
    %2935 = vmatpush1.msra.mxu0 0.0
    %2936 = vmatprep.subr.mxu0 0.0
    %2937 = vmatpush1.msra.mxu0 0.0
    %2938 = vmatprep.subr.mxu0 0.0
    %2939 = vmatpush1.msra.mxu0 0.0
    %2940 = vmatprep.subr.mxu0 0.0
    %2941 = vmatpush1.msra.mxu0 0.0
    %2942 = vmatprep.subr.mxu0 0.0
    %2943 = vmatpush1.msra.mxu0 0.0
    %2944 = vmatprep.subr.mxu0 0.0
    %2945 = vmatpush1.msra.mxu0 0.0
    %2946 = vmatprep.subr.mxu0 0.0
    %2947 = vmatpush1.msra.mxu0 0.0
    %2948 = vmatprep.subr.mxu0 0.0
    %2949 = vmatpush1.msra.mxu0 0.0
    %2950 = vmatprep.subr.mxu0 0.0
    %2951 = vmatpush1.msra.mxu0 0.0
    %2952 = vmatprep.subr.mxu0 0.0
    %2953 = vmatpush1.msra.mxu0 0.0
    %2954 = vmatprep.subr.mxu0 0.0
    %2955 = vmatpush1.msra.mxu0 0.0
    %2956 = vmatprep.subr.mxu0 0.0
    %2957 = vmatpush1.msra.mxu0 0.0
    %2958 = vmatprep.subr.mxu0 0.0
    %2959 = vmatpush1.msra.mxu0 0.0
    %2960 = vmatprep.subr.mxu0 0.0
    %2961 = vmatpush1.msra.mxu0 0.0
    %2962 = vmatprep.mubr.f32.mxu0 0.0
    %2963 = vmatmul.mubr.f32.gmra.mrb[0].mxu0 %v2822
    %v2964 = vpop.f32.mrb[0].mxu0
    %v2965 = vadd.f32 0.0, %v2964
    %v2966 = vpop.f32.mrb[0].mxu0
    %2967 = vdwg.mxu0
    %v2968 = vadd.f32 %v185, %v2965
    %v2969 = vtanh.pop %v2968
    %v2971 = vsel %vm188, %v2895, 0
    %2973 = vmatprep.subr.mxu0 0.0
    %2974 = vmatpush1.msra.mxu0 %v71
    %2975 = vmatprep.subr.mxu0 0.0
    %2976 = vmatpush1.msra.mxu0 %v72
    %2977 = vmatprep.subr.mxu0 0.0
    %2978 = vmatpush1.msra.mxu0 %v73
    %2979 = vmatprep.subr.mxu0 0.0
    %2980 = vmatpush1.msra.mxu0 %v74
    %2981 = vmatprep.subr.mxu0 0.0
    %2982 = vmatpush1.msra.mxu0 0.0
    %2983 = vmatprep.subr.mxu0 0.0
    %2984 = vmatpush1.msra.mxu0 0.0
    %2985 = vmatprep.subr.mxu0 0.0
    %2986 = vmatpush1.msra.mxu0 0.0
    %2987 = vmatprep.subr.mxu0 0.0
    %2988 = vmatpush1.msra.mxu0 0.0
    %2989 = vmatprep.subr.mxu0 0.0
    %2990 = vmatpush1.msra.mxu0 0.0
    %2991 = vmatprep.subr.mxu0 0.0
    %2992 = vmatpush1.msra.mxu0 0.0
    %2993 = vmatprep.subr.mxu0 0.0
    %2994 = vmatpush1.msra.mxu0 0.0
    %2995 = vmatprep.subr.mxu0 0.0
    %2996 = vmatpush1.msra.mxu0 0.0
    %2997 = vmatprep.subr.mxu0 0.0
    %2998 = vmatpush1.msra.mxu0 0.0
    %2999 = vmatprep.subr.mxu0 0.0
    %3000 = vmatpush1.msra.mxu0 0.0
    %3001 = vmatprep.subr.mxu0 0.0
    %3002 = vmatpush1.msra.mxu0 0.0
    %3003 = vmatprep.subr.mxu0 0.0
    %3004 = vmatpush1.msra.mxu0 0.0
    %3005 = vmatprep.subr.mxu0 0.0
    %3006 = vmatpush1.msra.mxu0 0.0
    %3007 = vmatprep.subr.mxu0 0.0
    %3008 = vmatpush1.msra.mxu0 0.0
    %3009 = vmatprep.subr.mxu0 0.0
    %3010 = vmatpush1.msra.mxu0 0.0
    %3011 = vmatprep.subr.mxu0 0.0
    %3012 = vmatpush1.msra.mxu0 0.0
    %3013 = vmatprep.subr.mxu0 0.0
    %3014 = vmatpush1.msra.mxu0 0.0
    %3015 = vmatprep.subr.mxu0 0.0
    %3016 = vmatpush1.msra.mxu0 0.0
    %3017 = vmatprep.subr.mxu0 0.0
    %3018 = vmatpush1.msra.mxu0 0.0
    %3019 = vmatprep.subr.mxu0 0.0
    %3020 = vmatpush1.msra.mxu0 0.0
    %3021 = vmatprep.subr.mxu0 0.0
    %3022 = vmatpush1.msra.mxu0 0.0
    %3023 = vmatprep.subr.mxu0 0.0
    %3024 = vmatpush1.msra.mxu0 0.0
    %3025 = vmatprep.subr.mxu0 0.0
    %3026 = vmatpush1.msra.mxu0 0.0
    %3027 = vmatprep.subr.mxu0 0.0
    %3028 = vmatpush1.msra.mxu0 0.0
    %3029 = vmatprep.subr.mxu0 0.0
    %3030 = vmatpush1.msra.mxu0 0.0
    %3031 = vmatprep.subr.mxu0 0.0
    %3032 = vmatpush1.msra.mxu0 0.0
    %3033 = vmatprep.subr.mxu0 0.0
    %3034 = vmatpush1.msra.mxu0 0.0
    %3035 = vmatprep.subr.mxu0 0.0
    %3036 = vmatpush1.msra.mxu0 0.0
    %3037 = vmatprep.mubr.f32.mxu0 0.0
    %3038 = vmatmul.mubr.f32.gmra.mrb[0].mxu0 %v2971
    %v3039 = vpop.f32.mrb[0].mxu0
    %v3040 = vadd.f32 0.0, %v3039
    %v3041 = vpop.f32.mrb[0].mxu0
    %3042 = vdwg.mxu0
    %v3044 = vsel %vm188, %v2969, 0
    %3046 = vmatprep.subr.mxu0 0.0
    %3047 = vmatpush1.msra.mxu0 %v63
    %3048 = vmatprep.subr.mxu0 0.0
    %3049 = vmatpush1.msra.mxu0 %v64
    %3050 = vmatprep.subr.mxu0 0.0
    %3051 = vmatpush1.msra.mxu0 %v65
    %3052 = vmatprep.subr.mxu0 0.0
    %3053 = vmatpush1.msra.mxu0 %v66
    %3054 = vmatprep.subr.mxu0 0.0
    %3055 = vmatpush1.msra.mxu0 0.0
    %3056 = vmatprep.subr.mxu0 0.0
    %3057 = vmatpush1.msra.mxu0 0.0
    %3058 = vmatprep.subr.mxu0 0.0
    %3059 = vmatpush1.msra.mxu0 0.0
    %3060 = vmatprep.subr.mxu0 0.0
    %3061 = vmatpush1.msra.mxu0 0.0
    %3062 = vmatprep.subr.mxu0 0.0
    %3063 = vmatpush1.msra.mxu0 0.0
    %3064 = vmatprep.subr.mxu0 0.0
    %3065 = vmatpush1.msra.mxu0 0.0
    %3066 = vmatprep.subr.mxu0 0.0
    %3067 = vmatpush1.msra.mxu0 0.0
    %3068 = vmatprep.subr.mxu0 0.0
    %3069 = vmatpush1.msra.mxu0 0.0
    %3070 = vmatprep.subr.mxu0 0.0
    %3071 = vmatpush1.msra.mxu0 0.0
    %3072 = vmatprep.subr.mxu0 0.0
    %3073 = vmatpush1.msra.mxu0 0.0
    %3074 = vmatprep.subr.mxu0 0.0
    %3075 = vmatpush1.msra.mxu0 0.0
    %3076 = vmatprep.subr.mxu0 0.0
    %3077 = vmatpush1.msra.mxu0 0.0
    %3078 = vmatprep.subr.mxu0 0.0
    %3079 = vmatpush1.msra.mxu0 0.0
    %3080 = vmatprep.subr.mxu0 0.0
    %3081 = vmatpush1.msra.mxu0 0.0
    %3082 = vmatprep.subr.mxu0 0.0
    %3083 = vmatpush1.msra.mxu0 0.0
    %3084 = vmatprep.subr.mxu0 0.0
    %3085 = vmatpush1.msra.mxu0 0.0
    %3086 = vmatprep.subr.mxu0 0.0
    %3087 = vmatpush1.msra.mxu0 0.0
    %3088 = vmatprep.subr.mxu0 0.0
    %3089 = vmatpush1.msra.mxu0 0.0
    %3090 = vmatprep.subr.mxu0 0.0
    %3091 = vmatpush1.msra.mxu0 0.0
    %3092 = vmatprep.subr.mxu0 0.0
    %3093 = vmatpush1.msra.mxu0 0.0
    %3094 = vmatprep.subr.mxu0 0.0
    %3095 = vmatpush1.msra.mxu0 0.0
    %3096 = vmatprep.subr.mxu0 0.0
    %3097 = vmatpush1.msra.mxu0 0.0
    %3098 = vmatprep.subr.mxu0 0.0
    %3099 = vmatpush1.msra.mxu0 0.0
    %3100 = vmatprep.subr.mxu0 0.0
    %3101 = vmatpush1.msra.mxu0 0.0
    %3102 = vmatprep.subr.mxu0 0.0
    %3103 = vmatpush1.msra.mxu0 0.0
    %3104 = vmatprep.subr.mxu0 0.0
    %3105 = vmatpush1.msra.mxu0 0.0
    %3106 = vmatprep.subr.mxu0 0.0
    %3107 = vmatpush1.msra.mxu0 0.0
    %3108 = vmatprep.subr.mxu0 0.0
    %3109 = vmatpush1.msra.mxu0 0.0
    %3110 = vmatprep.mubr.f32.mxu0 0.0
    %3111 = vmatmul.mubr.f32.gmra.mrb[0].mxu0 %v3044
    %v3112 = vpop.f32.mrb[0].mxu0
    %v3113 = vadd.f32 %v3040, %v3112
    %v3114 = vpop.f32.mrb[0].mxu0
    %3115 = vdwg.mxu0
    %v3116 = vadd.f32 %v3113, %v414
    %v3117 = vtanh.pop %v3116
    %s3118 = scalar_lea.vmem [#allocation7], 24
    %3119 = vst.msk [vmem:[%s3118] sm:$0x3] %vm418, %v3117
    %3120 = vmatprep.subr.mxu0 0.0
    %3121 = vmatpush1.msra.mxu0 %v67
    %3122 = vmatprep.subr.mxu0 0.0
    %3123 = vmatpush1.msra.mxu0 %v68
    %3124 = vmatprep.subr.mxu0 0.0
    %3125 = vmatpush1.msra.mxu0 %v69
    %3126 = vmatprep.subr.mxu0 0.0
    %3127 = vmatpush1.msra.mxu0 %v70
    %3128 = vmatprep.subr.mxu0 0.0
    %3129 = vmatpush1.msra.mxu0 0.0
    %3130 = vmatprep.subr.mxu0 0.0
    %3131 = vmatpush1.msra.mxu0 0.0
    %3132 = vmatprep.subr.mxu0 0.0
    %3133 = vmatpush1.msra.mxu0 0.0
    %3134 = vmatprep.subr.mxu0 0.0
    %3135 = vmatpush1.msra.mxu0 0.0
    %3136 = vmatprep.subr.mxu0 0.0
    %3137 = vmatpush1.msra.mxu0 0.0
    %3138 = vmatprep.subr.mxu0 0.0
    %3139 = vmatpush1.msra.mxu0 0.0
    %3140 = vmatprep.subr.mxu0 0.0
    %3141 = vmatpush1.msra.mxu0 0.0
    %3142 = vmatprep.subr.mxu0 0.0
    %3143 = vmatpush1.msra.mxu0 0.0
    %3144 = vmatprep.subr.mxu0 0.0
    %3145 = vmatpush1.msra.mxu0 0.0
    %3146 = vmatprep.subr.mxu0 0.0
    %3147 = vmatpush1.msra.mxu0 0.0
    %3148 = vmatprep.subr.mxu0 0.0
    %3149 = vmatpush1.msra.mxu0 0.0
    %3150 = vmatprep.subr.mxu0 0.0
    %3151 = vmatpush1.msra.mxu0 0.0
    %3152 = vmatprep.subr.mxu0 0.0
    %3153 = vmatpush1.msra.mxu0 0.0
    %3154 = vmatprep.subr.mxu0 0.0
    %3155 = vmatpush1.msra.mxu0 0.0
    %3156 = vmatprep.subr.mxu0 0.0
    %3157 = vmatpush1.msra.mxu0 0.0
    %3158 = vmatprep.subr.mxu0 0.0
    %3159 = vmatpush1.msra.mxu0 0.0
    %3160 = vmatprep.subr.mxu0 0.0
    %3161 = vmatpush1.msra.mxu0 0.0
    %3162 = vmatprep.subr.mxu0 0.0
    %3163 = vmatpush1.msra.mxu0 0.0
    %3164 = vmatprep.subr.mxu0 0.0
    %3165 = vmatpush1.msra.mxu0 0.0
    %3166 = vmatprep.subr.mxu0 0.0
    %3167 = vmatpush1.msra.mxu0 0.0
    %3168 = vmatprep.subr.mxu0 0.0
    %3169 = vmatpush1.msra.mxu0 0.0
    %3170 = vmatprep.subr.mxu0 0.0
    %3171 = vmatpush1.msra.mxu0 0.0
    %3172 = vmatprep.subr.mxu0 0.0
    %3173 = vmatpush1.msra.mxu0 0.0
    %3174 = vmatprep.subr.mxu0 0.0
    %3175 = vmatpush1.msra.mxu0 0.0
    %3176 = vmatprep.subr.mxu0 0.0
    %3177 = vmatpush1.msra.mxu0 0.0
    %3178 = vmatprep.subr.mxu0 0.0
    %3179 = vmatpush1.msra.mxu0 0.0
    %3180 = vmatprep.subr.mxu0 0.0
    %3181 = vmatpush1.msra.mxu0 0.0
    %3182 = vmatprep.subr.mxu0 0.0
    %3183 = vmatpush1.msra.mxu0 0.0
    %3184 = vmatprep.mubr.f32.mxu0 0.0
    %3185 = vmatmul.mubr.f32.gmra.mrb[0].mxu0 %v3044
    %v3186 = vpop.f32.mrb[0].mxu0
    %v3187 = vadd.f32 0.0, %v3186
    %v3188 = vpop.f32.mrb[0].mxu0
    %3189 = vdwg.mxu0
    %v3191 = vrot.slane %v3187, 6
    %v3193 = vadd.f32 %v185, %v3191
    %v3194 = vtanh.pop %v3193
    %v3196 = vsel %vm188, %v3117, 0
    %3198 = vmatprep.subr.mxu0 0.0
    %3199 = vmatpush1.msra.mxu0 %v71
    %3200 = vmatprep.subr.mxu0 0.0
    %3201 = vmatpush1.msra.mxu0 %v72
    %3202 = vmatprep.subr.mxu0 0.0
    %3203 = vmatpush1.msra.mxu0 %v73
    %3204 = vmatprep.subr.mxu0 0.0
    %3205 = vmatpush1.msra.mxu0 %v74
    %3206 = vmatprep.subr.mxu0 0.0
    %3207 = vmatpush1.msra.mxu0 0.0
    %3208 = vmatprep.subr.mxu0 0.0
    %3209 = vmatpush1.msra.mxu0 0.0
    %3210 = vmatprep.subr.mxu0 0.0
    %3211 = vmatpush1.msra.mxu0 0.0
    %3212 = vmatprep.subr.mxu0 0.0
    %3213 = vmatpush1.msra.mxu0 0.0
    %3214 = vmatprep.subr.mxu0 0.0
    %3215 = vmatpush1.msra.mxu0 0.0
    %3216 = vmatprep.subr.mxu0 0.0
    %3217 = vmatpush1.msra.mxu0 0.0
    %3218 = vmatprep.subr.mxu0 0.0
    %3219 = vmatpush1.msra.mxu0 0.0
    %3220 = vmatprep.subr.mxu0 0.0
    %3221 = vmatpush1.msra.mxu0 0.0
    %3222 = vmatprep.subr.mxu0 0.0
    %3223 = vmatpush1.msra.mxu0 0.0
    %3224 = vmatprep.subr.mxu0 0.0
    %3225 = vmatpush1.msra.mxu0 0.0
    %3226 = vmatprep.subr.mxu0 0.0
    %3227 = vmatpush1.msra.mxu0 0.0
    %3228 = vmatprep.subr.mxu0 0.0
    %3229 = vmatpush1.msra.mxu0 0.0
    %3230 = vmatprep.subr.mxu0 0.0
    %3231 = vmatpush1.msra.mxu0 0.0
    %3232 = vmatprep.subr.mxu0 0.0
    %3233 = vmatpush1.msra.mxu0 0.0
    %3234 = vmatprep.subr.mxu0 0.0
    %3235 = vmatpush1.msra.mxu0 0.0
    %3236 = vmatprep.subr.mxu0 0.0
    %3237 = vmatpush1.msra.mxu0 0.0
    %3238 = vmatprep.subr.mxu0 0.0
    %3239 = vmatpush1.msra.mxu0 0.0
    %3240 = vmatprep.subr.mxu0 0.0
    %3241 = vmatpush1.msra.mxu0 0.0
    %3242 = vmatprep.subr.mxu0 0.0
    %3243 = vmatpush1.msra.mxu0 0.0
    %3244 = vmatprep.subr.mxu0 0.0
    %3245 = vmatpush1.msra.mxu0 0.0
    %3246 = vmatprep.subr.mxu0 0.0
    %3247 = vmatpush1.msra.mxu0 0.0
    %3248 = vmatprep.subr.mxu0 0.0
    %3249 = vmatpush1.msra.mxu0 0.0
    %3250 = vmatprep.subr.mxu0 0.0
    %3251 = vmatpush1.msra.mxu0 0.0
    %3252 = vmatprep.subr.mxu0 0.0
    %3253 = vmatpush1.msra.mxu0 0.0
    %3254 = vmatprep.subr.mxu0 0.0
    %3255 = vmatpush1.msra.mxu0 0.0
    %3256 = vmatprep.subr.mxu0 0.0
    %3257 = vmatpush1.msra.mxu0 0.0
    %3258 = vmatprep.subr.mxu0 0.0
    %3259 = vmatpush1.msra.mxu0 0.0
    %3260 = vmatprep.subr.mxu0 0.0
    %3261 = vmatpush1.msra.mxu0 0.0
    %3262 = vmatprep.mubr.f32.mxu0 0.0
    %3263 = vmatmul.mubr.f32.gmra.mrb[0].mxu0 %v3196
    %v3264 = vpop.f32.mrb[0].mxu0
    %v3265 = vadd.f32 0.0, %v3264
    %v3266 = vpop.f32.mrb[0].mxu0
    %3267 = vdwg.mxu0
    %v3269 = vrot.slane %v3194, 2
    %v3270 = vsel %vm188, %v3269, 0
    %3272 = vmatprep.subr.mxu0 0.0
    %3273 = vmatpush1.msra.mxu0 %v63
    %3274 = vmatprep.subr.mxu0 0.0
    %3275 = vmatpush1.msra.mxu0 %v64
    %3276 = vmatprep.subr.mxu0 0.0
    %3277 = vmatpush1.msra.mxu0 %v65
    %3278 = vmatprep.subr.mxu0 0.0
    %3279 = vmatpush1.msra.mxu0 %v66
    %3280 = vmatprep.subr.mxu0 0.0
    %3281 = vmatpush1.msra.mxu0 0.0
    %3282 = vmatprep.subr.mxu0 0.0
    %3283 = vmatpush1.msra.mxu0 0.0
    %3284 = vmatprep.subr.mxu0 0.0
    %3285 = vmatpush1.msra.mxu0 0.0
    %3286 = vmatprep.subr.mxu0 0.0
    %3287 = vmatpush1.msra.mxu0 0.0
    %3288 = vmatprep.subr.mxu0 0.0
    %3289 = vmatpush1.msra.mxu0 0.0
    %3290 = vmatprep.subr.mxu0 0.0
    %3291 = vmatpush1.msra.mxu0 0.0
    %3292 = vmatprep.subr.mxu0 0.0
    %3293 = vmatpush1.msra.mxu0 0.0
    %3294 = vmatprep.subr.mxu0 0.0
    %3295 = vmatpush1.msra.mxu0 0.0
    %3296 = vmatprep.subr.mxu0 0.0
    %3297 = vmatpush1.msra.mxu0 0.0
    %3298 = vmatprep.subr.mxu0 0.0
    %3299 = vmatpush1.msra.mxu0 0.0
    %3300 = vmatprep.subr.mxu0 0.0
    %3301 = vmatpush1.msra.mxu0 0.0
    %3302 = vmatprep.subr.mxu0 0.0
    %3303 = vmatpush1.msra.mxu0 0.0
    %3304 = vmatprep.subr.mxu0 0.0
    %3305 = vmatpush1.msra.mxu0 0.0
    %3306 = vmatprep.subr.mxu0 0.0
    %3307 = vmatpush1.msra.mxu0 0.0
    %3308 = vmatprep.subr.mxu0 0.0
    %3309 = vmatpush1.msra.mxu0 0.0
    %3310 = vmatprep.subr.mxu0 0.0
    %3311 = vmatpush1.msra.mxu0 0.0
    %3312 = vmatprep.subr.mxu0 0.0
    %3313 = vmatpush1.msra.mxu0 0.0
    %3314 = vmatprep.subr.mxu0 0.0
    %3315 = vmatpush1.msra.mxu0 0.0
    %3316 = vmatprep.subr.mxu0 0.0
    %3317 = vmatpush1.msra.mxu0 0.0
    %3318 = vmatprep.subr.mxu0 0.0
    %3319 = vmatpush1.msra.mxu0 0.0
    %3320 = vmatprep.subr.mxu0 0.0
    %3321 = vmatpush1.msra.mxu0 0.0
    %3322 = vmatprep.subr.mxu0 0.0
    %3323 = vmatpush1.msra.mxu0 0.0
    %3324 = vmatprep.subr.mxu0 0.0
    %3325 = vmatpush1.msra.mxu0 0.0
    %3326 = vmatprep.subr.mxu0 0.0
    %3327 = vmatpush1.msra.mxu0 0.0
    %3328 = vmatprep.subr.mxu0 0.0
    %3329 = vmatpush1.msra.mxu0 0.0
    %3330 = vmatprep.subr.mxu0 0.0
    %3331 = vmatpush1.msra.mxu0 0.0
    %3332 = vmatprep.subr.mxu0 0.0
    %3333 = vmatpush1.msra.mxu0 0.0
    %3334 = vmatprep.subr.mxu0 0.0
    %3335 = vmatpush1.msra.mxu0 0.0
    %3336 = vmatprep.mubr.f32.mxu0 0.0
    %3337 = vmatmul.mubr.f32.gmra.mrb[0].mxu0 %v3270
    %v3338 = vpop.f32.mrb[0].mxu0
    %v3339 = vadd.f32 %v3265, %v3338
    %v3340 = vpop.f32.mrb[0].mxu0
    %3341 = vdwg.mxu0
    %v3342 = vadd.f32 %v3339, %v414
    %v3343 = vtanh.pop %v3342
    %s3344 = scalar_lea.vmem [#allocation7], 26
    %3345 = vst.msk [vmem:[%s3344] sm:$0x3] %vm418, %v3343
    %3346 = vmatprep.subr.mxu0 0.0
    %3347 = vmatpush1.msra.mxu0 %v67
    %3348 = vmatprep.subr.mxu0 0.0
    %3349 = vmatpush1.msra.mxu0 %v68
    %3350 = vmatprep.subr.mxu0 0.0
    %3351 = vmatpush1.msra.mxu0 %v69
    %3352 = vmatprep.subr.mxu0 0.0
    %3353 = vmatpush1.msra.mxu0 %v70
    %3354 = vmatprep.subr.mxu0 0.0
    %3355 = vmatpush1.msra.mxu0 0.0
    %3356 = vmatprep.subr.mxu0 0.0
    %3357 = vmatpush1.msra.mxu0 0.0
    %3358 = vmatprep.subr.mxu0 0.0
    %3359 = vmatpush1.msra.mxu0 0.0
    %3360 = vmatprep.subr.mxu0 0.0
    %3361 = vmatpush1.msra.mxu0 0.0
    %3362 = vmatprep.subr.mxu0 0.0
    %3363 = vmatpush1.msra.mxu0 0.0
    %3364 = vmatprep.subr.mxu0 0.0
    %3365 = vmatpush1.msra.mxu0 0.0
    %3366 = vmatprep.subr.mxu0 0.0
    %3367 = vmatpush1.msra.mxu0 0.0
    %3368 = vmatprep.subr.mxu0 0.0
    %3369 = vmatpush1.msra.mxu0 0.0
    %3370 = vmatprep.subr.mxu0 0.0
    %3371 = vmatpush1.msra.mxu0 0.0
    %3372 = vmatprep.subr.mxu0 0.0
    %3373 = vmatpush1.msra.mxu0 0.0
    %3374 = vmatprep.subr.mxu0 0.0
    %3375 = vmatpush1.msra.mxu0 0.0
    %3376 = vmatprep.subr.mxu0 0.0
    %3377 = vmatpush1.msra.mxu0 0.0
    %3378 = vmatprep.subr.mxu0 0.0
    %3379 = vmatpush1.msra.mxu0 0.0
    %3380 = vmatprep.subr.mxu0 0.0
    %3381 = vmatpush1.msra.mxu0 0.0
    %3382 = vmatprep.subr.mxu0 0.0
    %3383 = vmatpush1.msra.mxu0 0.0
    %3384 = vmatprep.subr.mxu0 0.0
    %3385 = vmatpush1.msra.mxu0 0.0
    %3386 = vmatprep.subr.mxu0 0.0
    %3387 = vmatpush1.msra.mxu0 0.0
    %3388 = vmatprep.subr.mxu0 0.0
    %3389 = vmatpush1.msra.mxu0 0.0
    %3390 = vmatprep.subr.mxu0 0.0
    %3391 = vmatpush1.msra.mxu0 0.0
    %3392 = vmatprep.subr.mxu0 0.0
    %3393 = vmatpush1.msra.mxu0 0.0
    %3394 = vmatprep.subr.mxu0 0.0
    %3395 = vmatpush1.msra.mxu0 0.0
    %3396 = vmatprep.subr.mxu0 0.0
    %3397 = vmatpush1.msra.mxu0 0.0
    %3398 = vmatprep.subr.mxu0 0.0
    %3399 = vmatpush1.msra.mxu0 0.0
    %3400 = vmatprep.subr.mxu0 0.0
    %3401 = vmatpush1.msra.mxu0 0.0
    %3402 = vmatprep.subr.mxu0 0.0
    %3403 = vmatpush1.msra.mxu0 0.0
    %3404 = vmatprep.subr.mxu0 0.0
    %3405 = vmatpush1.msra.mxu0 0.0
    %3406 = vmatprep.subr.mxu0 0.0
    %3407 = vmatpush1.msra.mxu0 0.0
    %3408 = vmatprep.subr.mxu0 0.0
    %3409 = vmatpush1.msra.mxu0 0.0
    %3410 = vmatprep.mubr.f32.mxu0 0.0
    %3411 = vmatmul.mubr.f32.gmra.mrb[0].mxu0 %v3270
    %v3412 = vpop.f32.mrb[0].mxu0
    %v3413 = vadd.f32 0.0, %v3412
    %v3414 = vpop.f32.mrb[0].mxu0
    %3415 = vdwg.mxu0
    %v3417 = vrot.slane %v3413, 4
    %v3419 = vadd.f32 %v185, %v3417
    %v3420 = vtanh.pop %v3419
    %v3422 = vsel %vm188, %v3343, 0
    %3424 = vmatprep.subr.mxu0 0.0
    %3425 = vmatpush1.msra.mxu0 %v71
    %3426 = vmatprep.subr.mxu0 0.0
    %3427 = vmatpush1.msra.mxu0 %v72
    %3428 = vmatprep.subr.mxu0 0.0
    %3429 = vmatpush1.msra.mxu0 %v73
    %3430 = vmatprep.subr.mxu0 0.0
    %3431 = vmatpush1.msra.mxu0 %v74
    %3432 = vmatprep.subr.mxu0 0.0
    %3433 = vmatpush1.msra.mxu0 0.0
    %3434 = vmatprep.subr.mxu0 0.0
    %3435 = vmatpush1.msra.mxu0 0.0
    %3436 = vmatprep.subr.mxu0 0.0
    %3437 = vmatpush1.msra.mxu0 0.0
    %3438 = vmatprep.subr.mxu0 0.0
    %3439 = vmatpush1.msra.mxu0 0.0
    %3440 = vmatprep.subr.mxu0 0.0
    %3441 = vmatpush1.msra.mxu0 0.0
    %3442 = vmatprep.subr.mxu0 0.0
    %3443 = vmatpush1.msra.mxu0 0.0
    %3444 = vmatprep.subr.mxu0 0.0
    %3445 = vmatpush1.msra.mxu0 0.0
    %3446 = vmatprep.subr.mxu0 0.0
    %3447 = vmatpush1.msra.mxu0 0.0
    %3448 = vmatprep.subr.mxu0 0.0
    %3449 = vmatpush1.msra.mxu0 0.0
    %3450 = vmatprep.subr.mxu0 0.0
    %3451 = vmatpush1.msra.mxu0 0.0
    %3452 = vmatprep.subr.mxu0 0.0
    %3453 = vmatpush1.msra.mxu0 0.0
    %3454 = vmatprep.subr.mxu0 0.0
    %3455 = vmatpush1.msra.mxu0 0.0
    %3456 = vmatprep.subr.mxu0 0.0
    %3457 = vmatpush1.msra.mxu0 0.0
    %3458 = vmatprep.subr.mxu0 0.0
    %3459 = vmatpush1.msra.mxu0 0.0
    %3460 = vmatprep.subr.mxu0 0.0
    %3461 = vmatpush1.msra.mxu0 0.0
    %3462 = vmatprep.subr.mxu0 0.0
    %3463 = vmatpush1.msra.mxu0 0.0
    %3464 = vmatprep.subr.mxu0 0.0
    %3465 = vmatpush1.msra.mxu0 0.0
    %3466 = vmatprep.subr.mxu0 0.0
    %3467 = vmatpush1.msra.mxu0 0.0
    %3468 = vmatprep.subr.mxu0 0.0
    %3469 = vmatpush1.msra.mxu0 0.0
    %3470 = vmatprep.subr.mxu0 0.0
    %3471 = vmatpush1.msra.mxu0 0.0
    %3472 = vmatprep.subr.mxu0 0.0
    %3473 = vmatpush1.msra.mxu0 0.0
    %3474 = vmatprep.subr.mxu0 0.0
    %3475 = vmatpush1.msra.mxu0 0.0
    %3476 = vmatprep.subr.mxu0 0.0
    %3477 = vmatpush1.msra.mxu0 0.0
    %3478 = vmatprep.subr.mxu0 0.0
    %3479 = vmatpush1.msra.mxu0 0.0
    %3480 = vmatprep.subr.mxu0 0.0
    %3481 = vmatpush1.msra.mxu0 0.0
    %3482 = vmatprep.subr.mxu0 0.0
    %3483 = vmatpush1.msra.mxu0 0.0
    %3484 = vmatprep.subr.mxu0 0.0
    %3485 = vmatpush1.msra.mxu0 0.0
    %3486 = vmatprep.subr.mxu0 0.0
    %3487 = vmatpush1.msra.mxu0 0.0
    %3488 = vmatprep.mubr.f32.mxu0 0.0
    %3489 = vmatmul.mubr.f32.gmra.mrb[0].mxu0 %v3422
    %v3490 = vpop.f32.mrb[0].mxu0
    %v3491 = vadd.f32 0.0, %v3490
    %v3492 = vpop.f32.mrb[0].mxu0
    %3493 = vdwg.mxu0
    %v3495 = vrot.slane %v3420, 4
    %v3496 = vsel %vm188, %v3495, 0
    %3498 = vmatprep.subr.mxu0 0.0
    %3499 = vmatpush1.msra.mxu0 %v63
    %3500 = vmatprep.subr.mxu0 0.0
    %3501 = vmatpush1.msra.mxu0 %v64
    %3502 = vmatprep.subr.mxu0 0.0
    %3503 = vmatpush1.msra.mxu0 %v65
    %3504 = vmatprep.subr.mxu0 0.0
    %3505 = vmatpush1.msra.mxu0 %v66
    %3506 = vmatprep.subr.mxu0 0.0
    %3507 = vmatpush1.msra.mxu0 0.0
    %3508 = vmatprep.subr.mxu0 0.0
    %3509 = vmatpush1.msra.mxu0 0.0
    %3510 = vmatprep.subr.mxu0 0.0
    %3511 = vmatpush1.msra.mxu0 0.0
    %3512 = vmatprep.subr.mxu0 0.0
    %3513 = vmatpush1.msra.mxu0 0.0
    %3514 = vmatprep.subr.mxu0 0.0
    %3515 = vmatpush1.msra.mxu0 0.0
    %3516 = vmatprep.subr.mxu0 0.0
    %3517 = vmatpush1.msra.mxu0 0.0
    %3518 = vmatprep.subr.mxu0 0.0
    %3519 = vmatpush1.msra.mxu0 0.0
    %3520 = vmatprep.subr.mxu0 0.0
    %3521 = vmatpush1.msra.mxu0 0.0
    %3522 = vmatprep.subr.mxu0 0.0
    %3523 = vmatpush1.msra.mxu0 0.0
    %3524 = vmatprep.subr.mxu0 0.0
    %3525 = vmatpush1.msra.mxu0 0.0
    %3526 = vmatprep.subr.mxu0 0.0
    %3527 = vmatpush1.msra.mxu0 0.0
    %3528 = vmatprep.subr.mxu0 0.0
    %3529 = vmatpush1.msra.mxu0 0.0
    %3530 = vmatprep.subr.mxu0 0.0
    %3531 = vmatpush1.msra.mxu0 0.0
    %3532 = vmatprep.subr.mxu0 0.0
    %3533 = vmatpush1.msra.mxu0 0.0
    %3534 = vmatprep.subr.mxu0 0.0
    %3535 = vmatpush1.msra.mxu0 0.0
    %3536 = vmatprep.subr.mxu0 0.0
    %3537 = vmatpush1.msra.mxu0 0.0
    %3538 = vmatprep.subr.mxu0 0.0
    %3539 = vmatpush1.msra.mxu0 0.0
    %3540 = vmatprep.subr.mxu0 0.0
    %3541 = vmatpush1.msra.mxu0 0.0
    %3542 = vmatprep.subr.mxu0 0.0
    %3543 = vmatpush1.msra.mxu0 0.0
    %3544 = vmatprep.subr.mxu0 0.0
    %3545 = vmatpush1.msra.mxu0 0.0
    %3546 = vmatprep.subr.mxu0 0.0
    %3547 = vmatpush1.msra.mxu0 0.0
    %3548 = vmatprep.subr.mxu0 0.0
    %3549 = vmatpush1.msra.mxu0 0.0
    %3550 = vmatprep.subr.mxu0 0.0
    %3551 = vmatpush1.msra.mxu0 0.0
    %3552 = vmatprep.subr.mxu0 0.0
    %3553 = vmatpush1.msra.mxu0 0.0
    %3554 = vmatprep.subr.mxu0 0.0
    %3555 = vmatpush1.msra.mxu0 0.0
    %3556 = vmatprep.subr.mxu0 0.0
    %3557 = vmatpush1.msra.mxu0 0.0
    %3558 = vmatprep.subr.mxu0 0.0
    %3559 = vmatpush1.msra.mxu0 0.0
    %3560 = vmatprep.subr.mxu0 0.0
    %3561 = vmatpush1.msra.mxu0 0.0
    %3562 = vmatprep.mubr.f32.mxu0 0.0
    %3563 = vmatmul.mubr.f32.gmra.mrb[0].mxu0 %v3496
    %v3564 = vpop.f32.mrb[0].mxu0
    %v3565 = vadd.f32 %v3491, %v3564
    %v3566 = vpop.f32.mrb[0].mxu0
    %3567 = vdwg.mxu0
    %v3568 = vadd.f32 %v3565, %v414
    %v3569 = vtanh.pop %v3568
    %s3570 = scalar_lea.vmem [#allocation7], 28
    %3571 = vst.msk [vmem:[%s3570] sm:$0x3] %vm418, %v3569
    %3572 = vmatprep.subr.mxu0 0.0
    %3573 = vmatpush1.msra.mxu0 %v67
    %3574 = vmatprep.subr.mxu0 0.0
    %3575 = vmatpush1.msra.mxu0 %v68
    %3576 = vmatprep.subr.mxu0 0.0
    %3577 = vmatpush1.msra.mxu0 %v69
    %3578 = vmatprep.subr.mxu0 0.0
    %3579 = vmatpush1.msra.mxu0 %v70
    %3580 = vmatprep.subr.mxu0 0.0
    %3581 = vmatpush1.msra.mxu0 0.0
    %3582 = vmatprep.subr.mxu0 0.0
    %3583 = vmatpush1.msra.mxu0 0.0
    %3584 = vmatprep.subr.mxu0 0.0
    %3585 = vmatpush1.msra.mxu0 0.0
    %3586 = vmatprep.subr.mxu0 0.0
    %3587 = vmatpush1.msra.mxu0 0.0
    %3588 = vmatprep.subr.mxu0 0.0
    %3589 = vmatpush1.msra.mxu0 0.0
    %3590 = vmatprep.subr.mxu0 0.0
    %3591 = vmatpush1.msra.mxu0 0.0
    %3592 = vmatprep.subr.mxu0 0.0
    %3593 = vmatpush1.msra.mxu0 0.0
    %3594 = vmatprep.subr.mxu0 0.0
    %3595 = vmatpush1.msra.mxu0 0.0
    %3596 = vmatprep.subr.mxu0 0.0
    %3597 = vmatpush1.msra.mxu0 0.0
    %3598 = vmatprep.subr.mxu0 0.0
    %3599 = vmatpush1.msra.mxu0 0.0
    %3600 = vmatprep.subr.mxu0 0.0
    %3601 = vmatpush1.msra.mxu0 0.0
    %3602 = vmatprep.subr.mxu0 0.0
    %3603 = vmatpush1.msra.mxu0 0.0
    %3604 = vmatprep.subr.mxu0 0.0
    %3605 = vmatpush1.msra.mxu0 0.0
    %3606 = vmatprep.subr.mxu0 0.0
    %3607 = vmatpush1.msra.mxu0 0.0
    %3608 = vmatprep.subr.mxu0 0.0
    %3609 = vmatpush1.msra.mxu0 0.0
    %3610 = vmatprep.subr.mxu0 0.0
    %3611 = vmatpush1.msra.mxu0 0.0
    %3612 = vmatprep.subr.mxu0 0.0
    %3613 = vmatpush1.msra.mxu0 0.0
    %3614 = vmatprep.subr.mxu0 0.0
    %3615 = vmatpush1.msra.mxu0 0.0
    %3616 = vmatprep.subr.mxu0 0.0
    %3617 = vmatpush1.msra.mxu0 0.0
    %3618 = vmatprep.subr.mxu0 0.0
    %3619 = vmatpush1.msra.mxu0 0.0
    %3620 = vmatprep.subr.mxu0 0.0
    %3621 = vmatpush1.msra.mxu0 0.0
    %3622 = vmatprep.subr.mxu0 0.0
    %3623 = vmatpush1.msra.mxu0 0.0
    %3624 = vmatprep.subr.mxu0 0.0
    %3625 = vmatpush1.msra.mxu0 0.0
    %3626 = vmatprep.subr.mxu0 0.0
    %3627 = vmatpush1.msra.mxu0 0.0
    %3628 = vmatprep.subr.mxu0 0.0
    %3629 = vmatpush1.msra.mxu0 0.0
    %3630 = vmatprep.subr.mxu0 0.0
    %3631 = vmatpush1.msra.mxu0 0.0
    %3632 = vmatprep.subr.mxu0 0.0
    %3633 = vmatpush1.msra.mxu0 0.0
    %3634 = vmatprep.subr.mxu0 0.0
    %3635 = vmatpush1.msra.mxu0 0.0
    %3636 = vmatprep.mubr.f32.mxu0 0.0
    %3637 = vmatmul.mubr.f32.gmra.mrb[0].mxu0 %v3496
    %v3638 = vpop.f32.mrb[0].mxu0
    %v3639 = vadd.f32 0.0, %v3638
    %v3640 = vpop.f32.mrb[0].mxu0
    %3641 = vdwg.mxu0
    %v3643 = vrot.slane %v3639, 2
    %v3645 = vadd.f32 %v185, %v3643
    %v3646 = vtanh.pop %v3645
    %v3648 = vsel %vm188, %v3569, 0
    %3650 = vmatprep.subr.mxu0 0.0
    %3651 = vmatpush1.msra.mxu0 %v71
    %3652 = vmatprep.subr.mxu0 0.0
    %3653 = vmatpush1.msra.mxu0 %v72
    %3654 = vmatprep.subr.mxu0 0.0
    %3655 = vmatpush1.msra.mxu0 %v73
    %3656 = vmatprep.subr.mxu0 0.0
    %3657 = vmatpush1.msra.mxu0 %v74
    %3658 = vmatprep.subr.mxu0 0.0
    %3659 = vmatpush1.msra.mxu0 0.0
    %3660 = vmatprep.subr.mxu0 0.0
    %3661 = vmatpush1.msra.mxu0 0.0
    %3662 = vmatprep.subr.mxu0 0.0
    %3663 = vmatpush1.msra.mxu0 0.0
    %3664 = vmatprep.subr.mxu0 0.0
    %3665 = vmatpush1.msra.mxu0 0.0
    %3666 = vmatprep.subr.mxu0 0.0
    %3667 = vmatpush1.msra.mxu0 0.0
    %3668 = vmatprep.subr.mxu0 0.0
    %3669 = vmatpush1.msra.mxu0 0.0
    %3670 = vmatprep.subr.mxu0 0.0
    %3671 = vmatpush1.msra.mxu0 0.0
    %3672 = vmatprep.subr.mxu0 0.0
    %3673 = vmatpush1.msra.mxu0 0.0
    %3674 = vmatprep.subr.mxu0 0.0
    %3675 = vmatpush1.msra.mxu0 0.0
    %3676 = vmatprep.subr.mxu0 0.0
    %3677 = vmatpush1.msra.mxu0 0.0
    %3678 = vmatprep.subr.mxu0 0.0
    %3679 = vmatpush1.msra.mxu0 0.0
    %3680 = vmatprep.subr.mxu0 0.0
    %3681 = vmatpush1.msra.mxu0 0.0
    %3682 = vmatprep.subr.mxu0 0.0
    %3683 = vmatpush1.msra.mxu0 0.0
    %3684 = vmatprep.subr.mxu0 0.0
    %3685 = vmatpush1.msra.mxu0 0.0
    %3686 = vmatprep.subr.mxu0 0.0
    %3687 = vmatpush1.msra.mxu0 0.0
    %3688 = vmatprep.subr.mxu0 0.0
    %3689 = vmatpush1.msra.mxu0 0.0
    %3690 = vmatprep.subr.mxu0 0.0
    %3691 = vmatpush1.msra.mxu0 0.0
    %3692 = vmatprep.subr.mxu0 0.0
    %3693 = vmatpush1.msra.mxu0 0.0
    %3694 = vmatprep.subr.mxu0 0.0
    %3695 = vmatpush1.msra.mxu0 0.0
    %3696 = vmatprep.subr.mxu0 0.0
    %3697 = vmatpush1.msra.mxu0 0.0
    %3698 = vmatprep.subr.mxu0 0.0
    %3699 = vmatpush1.msra.mxu0 0.0
    %3700 = vmatprep.subr.mxu0 0.0
    %3701 = vmatpush1.msra.mxu0 0.0
    %3702 = vmatprep.subr.mxu0 0.0
    %3703 = vmatpush1.msra.mxu0 0.0
    %3704 = vmatprep.subr.mxu0 0.0
    %3705 = vmatpush1.msra.mxu0 0.0
    %3706 = vmatprep.subr.mxu0 0.0
    %3707 = vmatpush1.msra.mxu0 0.0
    %3708 = vmatprep.subr.mxu0 0.0
    %3709 = vmatpush1.msra.mxu0 0.0
    %3710 = vmatprep.subr.mxu0 0.0
    %3711 = vmatpush1.msra.mxu0 0.0
    %3712 = vmatprep.subr.mxu0 0.0
    %3713 = vmatpush1.msra.mxu0 0.0
    %3714 = vmatprep.mubr.f32.mxu0 0.0
    %3715 = vmatmul.mubr.f32.gmra.mrb[0].mxu0 %v3648
    %v3716 = vpop.f32.mrb[0].mxu0
    %v3717 = vadd.f32 0.0, %v3716
    %v3718 = vpop.f32.mrb[0].mxu0
    %3719 = vdwg.mxu0
    %v3721 = vrot.slane %v3646, 6
    %v3722 = vsel %vm188, %v3721, 0
    %3724 = vmatprep.subr.mxu0 0.0
    %3725 = vmatpush1.msra.mxu0 %v63
    %3726 = vmatprep.subr.mxu0 0.0
    %3727 = vmatpush1.msra.mxu0 %v64
    %3728 = vmatprep.subr.mxu0 0.0
    %3729 = vmatpush1.msra.mxu0 %v65
    %3730 = vmatprep.subr.mxu0 0.0
    %3731 = vmatpush1.msra.mxu0 %v66
    %3732 = vmatprep.subr.mxu0 0.0
    %3733 = vmatpush1.msra.mxu0 0.0
    %3734 = vmatprep.subr.mxu0 0.0
    %3735 = vmatpush1.msra.mxu0 0.0
    %3736 = vmatprep.subr.mxu0 0.0
    %3737 = vmatpush1.msra.mxu0 0.0
    %3738 = vmatprep.subr.mxu0 0.0
    %3739 = vmatpush1.msra.mxu0 0.0
    %3740 = vmatprep.subr.mxu0 0.0
    %3741 = vmatpush1.msra.mxu0 0.0
    %3742 = vmatprep.subr.mxu0 0.0
    %3743 = vmatpush1.msra.mxu0 0.0
    %3744 = vmatprep.subr.mxu0 0.0
    %3745 = vmatpush1.msra.mxu0 0.0
    %3746 = vmatprep.subr.mxu0 0.0
    %3747 = vmatpush1.msra.mxu0 0.0
    %3748 = vmatprep.subr.mxu0 0.0
    %3749 = vmatpush1.msra.mxu0 0.0
    %3750 = vmatprep.subr.mxu0 0.0
    %3751 = vmatpush1.msra.mxu0 0.0
    %3752 = vmatprep.subr.mxu0 0.0
    %3753 = vmatpush1.msra.mxu0 0.0
    %3754 = vmatprep.subr.mxu0 0.0
    %3755 = vmatpush1.msra.mxu0 0.0
    %3756 = vmatprep.subr.mxu0 0.0
    %3757 = vmatpush1.msra.mxu0 0.0
    %3758 = vmatprep.subr.mxu0 0.0
    %3759 = vmatpush1.msra.mxu0 0.0
    %3760 = vmatprep.subr.mxu0 0.0
    %3761 = vmatpush1.msra.mxu0 0.0
    %3762 = vmatprep.subr.mxu0 0.0
    %3763 = vmatpush1.msra.mxu0 0.0
    %3764 = vmatprep.subr.mxu0 0.0
    %3765 = vmatpush1.msra.mxu0 0.0
    %3766 = vmatprep.subr.mxu0 0.0
    %3767 = vmatpush1.msra.mxu0 0.0
    %3768 = vmatprep.subr.mxu0 0.0
    %3769 = vmatpush1.msra.mxu0 0.0
    %3770 = vmatprep.subr.mxu0 0.0
    %3771 = vmatpush1.msra.mxu0 0.0
    %3772 = vmatprep.subr.mxu0 0.0
    %3773 = vmatpush1.msra.mxu0 0.0
    %3774 = vmatprep.subr.mxu0 0.0
    %3775 = vmatpush1.msra.mxu0 0.0
    %3776 = vmatprep.subr.mxu0 0.0
    %3777 = vmatpush1.msra.mxu0 0.0
    %3778 = vmatprep.subr.mxu0 0.0
    %3779 = vmatpush1.msra.mxu0 0.0
    %3780 = vmatprep.subr.mxu0 0.0
    %3781 = vmatpush1.msra.mxu0 0.0
    %3782 = vmatprep.subr.mxu0 0.0
    %3783 = vmatpush1.msra.mxu0 0.0
    %3784 = vmatprep.subr.mxu0 0.0
    %3785 = vmatpush1.msra.mxu0 0.0
    %3786 = vmatprep.subr.mxu0 0.0
    %3787 = vmatpush1.msra.mxu0 0.0
    %3788 = vmatprep.mubr.f32.mxu0 0.0
    %3789 = vmatmul.mubr.f32.gmra.mrb[0].mxu0 %v3722
    %v3790 = vpop.f32.mrb[0].mxu0
    %v3791 = vadd.f32 %v3717, %v3790
    %v3792 = vpop.f32.mrb[0].mxu0
    %3793 = vdwg.mxu0
    %v3794 = vadd.f32 %v3791, %v414
    %v3795 = vtanh.pop %v3794
    %s3796 = scalar_lea.vmem [#allocation7], 30
    %3797 = vst.msk [vmem:[%s3796] sm:$0x3] %vm418, %v3795
    %vm3798 = vcmask 261126
    %3799 = vst.msk [vmem:[#allocation8 - $0x6] sm:$0xc0] %vm3798, %v3646
    %s3800 = scalar_lea.vmem [#allocation8], 2
    %3801 = vst.msk [vmem:[%s3800] sm:$0x3] %vm418, %v3795
    // Predicated region
    $region42: #{tpu_custom_call.1} parent=1 // pred_check
      _
    $region43: #{tpu_custom_call.1} parent=1 // pred_check_branch
      %3803 = sbr.rel (0) target = $region45
    $region44: #{tpu_custom_call.1} parent=1 // pred_region
      %s3805 = ssub.s32 512, 512
      %3806 = vsyncadd [#allocation4], %s3805
      %s3807 = sshll.u32 [#allocation7], 4
      %s3808 = int_to_ptr.vmem [resolvable:$true] %s3807
      %3813 = dma.vmem_to_hbm [thread:$0]  %s3808, 512, %s8, [#allocation4], 32, 32, 2
    $region45: #{tpu_custom_call.1} parent=1 // pred_fallthru
      _
    // Predicated region
    $region46: #{tpu_custom_call.1} parent=1 // pred_check
      _
    $region47: #{tpu_custom_call.1} parent=1 // pred_check_branch
      %3815 = sbr.rel (0) target = $region49
    $region48: #{tpu_custom_call.1} parent=1 // pred_region
      %s3817 = ssub.s32 64, 64
      %3818 = vsyncadd [#allocation9], %s3817
      %s3819 = sshll.u32 [#allocation8], 4
      %s3820 = int_to_ptr.vmem [resolvable:$true] %s3819
      %3825 = dma.vmem_to_hbm [thread:$0]  %s3820, 64, %s9, [#allocation9], 32, 32, 2
    $region49: #{tpu_custom_call.1} parent=1 // pred_fallthru
      _
    // Predicated region
    $region50: #{tpu_custom_call.1} parent=1 // pred_check
      _
    $region51: #{tpu_custom_call.1} parent=1 // pred_check_branch
      %3827 = sbr.rel (0) target = $region53
    $region52: #{tpu_custom_call.1} parent=1 // pred_region
      %3828 = dma.done [#allocation4], 512
    $region53: #{tpu_custom_call.1} parent=1 // pred_fallthru
      _
    // Predicated region
    $region54: #{tpu_custom_call.1} parent=1 // pred_check
      _
    $region55: #{tpu_custom_call.1} parent=1 // pred_check_branch
      %3830 = sbr.rel (0) target = $region57
    $region56: #{tpu_custom_call.1} parent=1 // pred_region
      %3831 = dma.done [#allocation9], 64
    $region57: #{tpu_custom_call.1} parent=1 // pred_fallthru
      _
    %3832 = vsyncpa [#allocation3], 1
    %3833 = vsyncpa [#allocation6], 1
    %3834 = vsyncpa [#allocation4], 1
    %3835 = vsyncpa [#allocation9], 1

</llo_original>
